<compile_context>
chip_gen: v6e
topology: v6e:2x2x1
jax: 0.10.0
libtpu: 0.0.40
codegen_flags: <defaults>
</compile_context>

<pallas_src>
import math

import jax
import jax.numpy as jnp
from jax.experimental import pallas as pl
from jax.experimental.pallas import tpu as pltpu

EPS = 1e-6


# ------------------------------ Pallas kernel ------------------------------ #

def _ln_lastdim(v, eps=EPS):
    """channels_first LayerNorm statistics over the channel (lane) dim."""
    u = jnp.mean(v, axis=-1, keepdims=True)
    d = v - u
    s = jnp.mean(d * d, axis=-1, keepdims=True)
    return d * jax.lax.rsqrt(s + eps)


def _stage(in_ref, w_ref, bias_ref, out_ref, *, pre_ln, post_ln=None, eps=EPS):
    """[LayerNorm ->] Conv2d(k=2, s=2) [-> LayerNorm], all VMEM-resident.

    in_ref  : (Hin, Win, Cin)  one batch element's NHWC activation
    w_ref   : (4, Cin, Cout)   per-(kh,kw) weight matrices, bf16; for pre-LN
                               stages the LN gamma is pre-folded into them
    bias_ref: (1, 1, Cout)     conv bias (+ folded LN beta for pre-LN stages)
    post_ln : optional (gamma_ref, beta_ref), each (1, 1, Cout)
    out_ref : (Hin//2, Win//2, Cout)
    """
    hin, win, cin = in_ref.shape
    ho, wo = hin // 2, win // 2
    cout = out_ref.shape[-1]

    acc = jnp.zeros((ho, wo, cout), jnp.float32)
    for kw in (0, 1):
        # Strided VMEM read: input columns kw, kw+2, ... (one per output col).
        xw = in_ref[:, pl.ds(kw, wo, stride=2), :].astype(jnp.float32)
        if pre_ln:
            xw = _ln_lastdim(xw, eps)            # affine folded into w / bias
        # Split the kernel-row (kh) pairs out of the leading dim (free).
        xw = xw.reshape(ho, 2, wo, cin)
        for kh in (0, 1):
            acc = acc + jax.lax.dot_general(
                xw[:, kh].astype(jnp.bfloat16), w_ref[2 * kh + kw],
                dimension_numbers=(((2,), (0,)), ((), ())),
                preferred_element_type=jnp.float32)
    y = acc + bias_ref[...]
    if post_ln is not None:
        g_ref, b_ref = post_ln
        y = _ln_lastdim(y, eps) * g_ref[...] + b_ref[...]
    out_ref[...] = y.astype(out_ref.dtype)


def _resnet_kernel(x_ref,
                   w1_ref, b1_ref, g1_ref, be1_ref,
                   w2_ref, b2_ref, w3_ref, b3_ref,
                   w4_ref, b4_ref, w5_ref, b5_ref,
                   o1_ref, o3_ref, o4_ref, o5_ref, o58_ref):
    """Whole network for one batch element; later stages read earlier outputs
    straight back out of their VMEM output refs (no HBM round trips)."""
    # conv1: Conv(12 -> base) -> LayerNorm(base)
    _stage(x_ref, w1_ref, b1_ref, o1_ref, pre_ln=False,
           post_ln=(g1_ref, be1_ref))
    # layer2_16: LN -> Conv(base -> 2*base)            (layer1_16 is identity)
    _stage(o1_ref, w2_ref, b2_ref, o3_ref, pre_ln=True)
    # layer3_16: LN -> Conv(2*base -> 4*base)
    _stage(o3_ref, w3_ref, b3_ref, o4_ref, pre_ln=True)
    # layer4_16: LN -> Conv(4*base -> 8*base)
    _stage(o4_ref, w4_ref, b4_ref, o5_ref, pre_ln=True)
    # layer2_8:  LN -> Conv(2*base -> 4*base) on out3_16 (layer1_8 identity)
    _stage(o3_ref, w5_ref, b5_ref, o58_ref, pre_ln=True)


# ------------------------- one-time weight packing -------------------------- #

def build_fused_params(params):
    """Precompute (once, outside the jitted forward) the packed per-(kh,kw)
    bf16 weight matrices, the LN-affine folding and the bias reshapes."""
    def pack(name, pre_ln):
        w = params[f"{name}_w"].astype(jnp.float32)        # (Cout, Cin, 2, 2)
        b = params[f"{name}_b"].astype(jnp.float32)        # (Cout,)
        cout, cin = w.shape[0], w.shape[1]
        # q = kh*2 + kw ; W_q[ci, co] = w[co, ci, kh, kw]
        wq = jnp.transpose(w, (2, 3, 1, 0)).reshape(4, cin, cout)
        if pre_ln:
            gamma = params[f"{name}_lnw"].astype(jnp.float32)
            beta = params[f"{name}_lnb"].astype(jnp.float32)
            wq = wq * gamma[None, :, None]                 # fold LN scale
            b = b + jnp.sum(w, axis=(2, 3)) @ beta         # fold LN shift
        return wq.astype(jnp.bfloat16), b.reshape(1, 1, cout)

    fp = {}
    fp["w1"], fp["b1"] = pack("conv1", False)
    fp["g1"] = params["conv1_lnw"].reshape(1, 1, -1).astype(jnp.float32)
    fp["be1"] = params["conv1_lnb"].reshape(1, 1, -1).astype(jnp.float32)
    for i, name in enumerate(("l2_16", "l3_16", "l4_16", "l2_8"), start=2):
        fp[f"w{i}"], fp[f"b{i}"] = pack(name, True)
    return fp


# --------------------------------- forward ---------------------------------- #

def resnet_forward(x_nchw, fp):
    B, cin, H, W = x_nchw.shape
    # Single layout transpose on the input; the kernel runs channels-last.
    x = jnp.transpose(x_nchw, (0, 2, 3, 1)).reshape(B * H, W, cin)

    co = [fp[f"w{i}"].shape[-1] for i in range(1, 6)]      # per-stage Cout
    sp = [(H >> k, W >> k) for k in range(1, 5)]           # spatial per level
    # outputs: o1, out3_16, out4_16, out5_16, out5_8
    out_dims = [(sp[0], co[0]), (sp[1], co[1]), (sp[2], co[2]),
                (sp[3], co[3]), (sp[2], co[4])]

    def act_spec(hh, ww, cc):                 # one batch element per grid step
        return pl.BlockSpec((hh, ww, cc), lambda i: (i, 0, 0))

    def full_spec(a):                         # weights / biases: whole array
        return pl.BlockSpec(a.shape, lambda i: (0,) * a.ndim)

    operands = (x, fp["w1"], fp["b1"], fp["g1"], fp["be1"],
                fp["w2"], fp["b2"], fp["w3"], fp["b3"],
                fp["w4"], fp["b4"], fp["w5"], fp["b5"])
    in_specs = [act_spec(H, W, cin)] + [full_spec(a) for a in operands[1:]]
    out_specs = [act_spec(hh, ww, cc) for (hh, ww), cc in out_dims]
    out_shape = [jax.ShapeDtypeStruct((B * hh, ww, cc), jnp.float32)
                 for (hh, ww), cc in out_dims]

    outs = pl.pallas_call(
        _resnet_kernel,
        out_shape=out_shape,
        grid=(B,),
        in_specs=in_specs,
        out_specs=out_specs,
        compiler_params=pltpu.CompilerParams(
            dimension_semantics=("parallel",)),
    )(*operands)

    def nchw(t, hh, ww, cc):
        return jnp.transpose(t.reshape(B, hh, ww, cc), (0, 3, 1, 2))

    o1, o3, o4, o5, o58 = (nchw(t, hh, ww, cc)
                           for t, ((hh, ww), cc) in zip(outs, out_dims))
    # aliased outputs reuse the same transposed tensor
    return {"out1_2": o1, "out1_4": o3, "out1_8": o4, "out1_16": o5,
            "out2_4": o3, "out2_8": o58, "out3_4": o3}


# -------------------------------- parameters -------------------------------- #

def init_params(key, base=32, in_ch=12):
    """Kaiming-normal(fan_in, relu) conv weights as in weight_init.  The
    module inits conv bias / LN bias to 0 and LN weight to 1; here they are
    slightly perturbed so the fused bias-add and LN-affine-folding paths are
    actually exercised by the numerical check (forward semantics unchanged)."""
    b1, b2, b4, b8 = base, base * 2, base * 4, base * 8
    keys = list(jax.random.split(key, 20))
    params = {}

    def conv(cin, cout):
        k1, k2 = keys.pop(), keys.pop()
        std = math.sqrt(2.0 / (cin * 2 * 2))          # fan_in, relu gain
        w = jax.random.normal(k1, (cout, cin, 2, 2), jnp.float32) * std
        b = 0.05 * jax.random.normal(k2, (cout,), jnp.float32)
        return w, b

    def ln(c):
        k1, k2 = keys.pop(), keys.pop()
        return (1.0 + 0.1 * jax.random.normal(k1, (c,), jnp.float32),
                0.05 * jax.random.normal(k2, (c,), jnp.float32))

    params["conv1_w"], params["conv1_b"] = conv(in_ch, b1)
    params["conv1_lnw"], params["conv1_lnb"] = ln(b1)
    for name, cin, cout in (("l2_16", b1, b2), ("l3_16", b2, b4),
                            ("l4_16", b4, b8), ("l2_8", b2, b4)):
        params[f"{name}_lnw"], params[f"{name}_lnb"] = ln(cin)
        params[f"{name}_w"], params[f"{name}_b"] = conv(cin, cout)
    return params


# ------------------------- pure-JAX reference (check) ----------------------- #

def _ref_ln_cf(x, w, b, eps=EPS):  # NCHW channels_first LayerNorm
    u = x.mean(1, keepdims=True)
    s = ((x - u) ** 2).mean(1, keepdims=True)
    xn = (x - u) / jnp.sqrt(s + eps)
    return w[None, :, None, None] * xn + b[None, :, None, None]


def _ref_conv(x, w, b):  # NCHW, k=2 s=2 VALID
    y = jax.lax.conv_general_dilated(
        x, w, (2, 2), "VALID", dimension_numbers=("NCHW", "OIHW", "NCHW"))
    return y + b[None, :, None, None]


def resnet_reference(x, p):
    out1 = _ref_ln_cf(_ref_conv(x, p["conv1_w"], p["conv1_b"]),
                      p["conv1_lnw"], p["conv1_lnb"])
    ds = lambda n, t: _ref_conv(_ref_ln_cf(t, p[f"{n}_lnw"], p[f"{n}_lnb"]),
                                p[f"{n}_w"], p[f"{n}_b"])
    out2_16 = out1
    out3_16 = ds("l2_16", out2_16)
    out4_16 = ds("l3_16", out3_16)
    out5_16 = ds("l4_16", out4_16)
    out4_8 = out3_16
    out5_8 = ds("l2_8", out4_8)
    out5_4 = out4_8
    return {"out1_2": out2_16, "out1_4": out3_16, "out1_8": out4_16,
            "out1_16": out5_16, "out2_4": out4_8, "out2_8": out5_8,
            "out3_4": out5_4}


# ----------------------------------- main ------------------------------------ #

if __name__ == "__main__":
    key = jax.random.PRNGKey(0)
    kx, kp = jax.random.split(key)

    B, Cin, H, W = 2, 12, 32, 32
    base = 32
    x = jax.random.normal(kx, (B, Cin, H, W), jnp.float32)
    params = init_params(kp, base=base, in_ch=Cin)
    fused = build_fused_params(params)     # one-time packing, outside the jit

    fwd = jax.jit(resnet_forward)
    outs = jax.block_until_ready(fwd(x, fused))

    refs = resnet_reference(x, params)
    for name in sorted(refs):
        assert outs[name].shape == refs[name].shape, (
            name, outs[name].shape, refs[name].shape)
        # bf16 MXU operands through 4 chained stages -> modest tolerance;
        # real bugs (ordering / LN axis / quarter mapping) would be O(1) off.
        assert jnp.allclose(outs[name], refs[name], rtol=5e-2, atol=5e-2), (
            name, float(jnp.max(jnp.abs(outs[name] - refs[name]))))

    print("KERNEL_OK")
</pallas_src>

<mosaic_0001>
module attributes {stable_mosaic.version = 11 : i64} {
  func.func @_resnet_kernel(%arg0: i32, %arg1: memref<32x32x12xf32, #tpu.memory_space<vmem>>, %arg2: memref<4x12x32xbf16, #tpu.memory_space<vmem>>, %arg3: memref<1x1x32xf32, #tpu.memory_space<vmem>>, %arg4: memref<1x1x32xf32, #tpu.memory_space<vmem>>, %arg5: memref<1x1x32xf32, #tpu.memory_space<vmem>>, %arg6: memref<4x32x64xbf16, #tpu.memory_space<vmem>>, %arg7: memref<1x1x64xf32, #tpu.memory_space<vmem>>, %arg8: memref<4x64x128xbf16, #tpu.memory_space<vmem>>, %arg9: memref<1x1x128xf32, #tpu.memory_space<vmem>>, %arg10: memref<4x128x256xbf16, #tpu.memory_space<vmem>>, %arg11: memref<1x1x256xf32, #tpu.memory_space<vmem>>, %arg12: memref<4x64x128xbf16, #tpu.memory_space<vmem>>, %arg13: memref<1x1x128xf32, #tpu.memory_space<vmem>>, %arg14: memref<16x16x32xf32, #tpu.memory_space<vmem>>, %arg15: memref<8x8x64xf32, #tpu.memory_space<vmem>>, %arg16: memref<4x4x128xf32, #tpu.memory_space<vmem>>, %arg17: memref<2x2x256xf32, #tpu.memory_space<vmem>>, %arg18: memref<4x4x128xf32, #tpu.memory_space<vmem>>) attributes {dimension_semantics = [#tpu.dimension_semantics<parallel>], iteration_bounds = array<i64: 2>, scalar_prefetch = 0 : i64, scratch_operands = 0 : i64, tpu.core_type = #tpu.core_type<tc>, window_params = [{transform_indices = @transform_0, window_bounds = array<i64: 32, 32, 12>}, {pipeline_mode = #tpu.pipeline_mode<synchronous>, transform_indices = @transform_1, window_bounds = array<i64: 4, 12, 32>}, {pipeline_mode = #tpu.pipeline_mode<synchronous>, transform_indices = @transform_2, window_bounds = array<i64: 1, 1, 32>}, {pipeline_mode = #tpu.pipeline_mode<synchronous>, transform_indices = @transform_3, window_bounds = array<i64: 1, 1, 32>}, {pipeline_mode = #tpu.pipeline_mode<synchronous>, transform_indices = @transform_4, window_bounds = array<i64: 1, 1, 32>}, {pipeline_mode = #tpu.pipeline_mode<synchronous>, transform_indices = @transform_5, window_bounds = array<i64: 4, 32, 64>}, {pipeline_mode = #tpu.pipeline_mode<synchronous>, transform_indices = @transform_6, window_bounds = array<i64: 1, 1, 64>}, {pipeline_mode = #tpu.pipeline_mode<synchronous>, transform_indices = @transform_7, window_bounds = array<i64: 4, 64, 128>}, {pipeline_mode = #tpu.pipeline_mode<synchronous>, transform_indices = @transform_8, window_bounds = array<i64: 1, 1, 128>}, {pipeline_mode = #tpu.pipeline_mode<synchronous>, transform_indices = @transform_9, window_bounds = array<i64: 4, 128, 256>}, {pipeline_mode = #tpu.pipeline_mode<synchronous>, transform_indices = @transform_10, window_bounds = array<i64: 1, 1, 256>}, {pipeline_mode = #tpu.pipeline_mode<synchronous>, transform_indices = @transform_11, window_bounds = array<i64: 4, 64, 128>}, {pipeline_mode = #tpu.pipeline_mode<synchronous>, transform_indices = @transform_12, window_bounds = array<i64: 1, 1, 128>}, {transform_indices = @transform_13, window_bounds = array<i64: 16, 16, 32>}, {transform_indices = @transform_14, window_bounds = array<i64: 8, 8, 64>}, {transform_indices = @transform_15, window_bounds = array<i64: 4, 4, 128>}, {transform_indices = @transform_16, window_bounds = array<i64: 2, 2, 256>}, {transform_indices = @transform_17, window_bounds = array<i64: 4, 4, 128>}]} {
    %cst = arith.constant 0.000000e+00 : f32
    %0 = vector.broadcast %cst : f32 to vector<16x16x32xf32>
    %c0 = arith.constant 0 : index
    %c0_0 = arith.constant 0 : index
    %c0_1 = arith.constant 0 : index
    %1 = tpu.strided_load %arg1[%c0, %c0_0, %c0_1] {strides = array<i32: 1, 2, 1>} : memref<32x32x12xf32, #tpu.memory_space<vmem>>, vector<32x16x12xf32>
    %2 = vector.shape_cast %1 : vector<32x16x12xf32> to vector<16x2x16x12xf32>
    %3 = vector.extract_strided_slice %2 {offsets = [0, 0, 0, 0], sizes = [16, 1, 16, 12], strides = [1, 1, 1, 1]} : vector<16x2x16x12xf32> to vector<16x1x16x12xf32>
    %4 = vector.shape_cast %3 : vector<16x1x16x12xf32> to vector<16x16x12xf32>
    %5 = arith.truncf %4 : vector<16x16x12xf32> to vector<16x16x12xbf16>
    %c0_2 = arith.constant 0 : index
    %c0_3 = arith.constant 0 : index
    %c0_4 = arith.constant 0 : index
    %6 = vector.load %arg2[%c0_2, %c0_3, %c0_4] : memref<4x12x32xbf16, #tpu.memory_space<vmem>>, vector<1x12x32xbf16>
    %7 = vector.shape_cast %6 : vector<1x12x32xbf16> to vector<12x32xbf16>
    %cst_5 = arith.constant dense<0.000000e+00> : vector<16x16x32xf32>
    %8 = tpu.matmul %5, %7, %cst_5 {dimension_numbers = #tpu.dot_dimension_numbers<[2], [0], [0, 1], [1], [0, 0, 0, 1, 1, 1], [], []>} : vector<16x16x12xbf16>, vector<12x32xbf16>, vector<16x16x32xf32> -> vector<16x16x32xf32>
    %9 = arith.addf %0, %8 : vector<16x16x32xf32>
    %10 = vector.extract_strided_slice %2 {offsets = [0, 1, 0, 0], sizes = [16, 1, 16, 12], strides = [1, 1, 1, 1]} : vector<16x2x16x12xf32> to vector<16x1x16x12xf32>
    %11 = vector.shape_cast %10 : vector<16x1x16x12xf32> to vector<16x16x12xf32>
    %12 = arith.truncf %11 : vector<16x16x12xf32> to vector<16x16x12xbf16>
    %c2 = arith.constant 2 : index
    %c0_6 = arith.constant 0 : index
    %c0_7 = arith.constant 0 : index
    %13 = vector.load %arg2[%c2, %c0_6, %c0_7] : memref<4x12x32xbf16, #tpu.memory_space<vmem>>, vector<1x12x32xbf16>
    %14 = vector.shape_cast %13 : vector<1x12x32xbf16> to vector<12x32xbf16>
    %cst_8 = arith.constant dense<0.000000e+00> : vector<16x16x32xf32>
    %15 = tpu.matmul %12, %14, %cst_8 {dimension_numbers = #tpu.dot_dimension_numbers<[2], [0], [0, 1], [1], [0, 0, 0, 1, 1, 1], [], []>} : vector<16x16x12xbf16>, vector<12x32xbf16>, vector<16x16x32xf32> -> vector<16x16x32xf32>
    %16 = arith.addf %9, %15 : vector<16x16x32xf32>
    %c0_9 = arith.constant 0 : index
    %c1 = arith.constant 1 : index
    %c0_10 = arith.constant 0 : index
    %17 = tpu.strided_load %arg1[%c0_9, %c1, %c0_10] {strides = array<i32: 1, 2, 1>} : memref<32x32x12xf32, #tpu.memory_space<vmem>>, vector<32x16x12xf32>
    %18 = vector.shape_cast %17 : vector<32x16x12xf32> to vector<16x2x16x12xf32>
    %19 = vector.extract_strided_slice %18 {offsets = [0, 0, 0, 0], sizes = [16, 1, 16, 12], strides = [1, 1, 1, 1]} : vector<16x2x16x12xf32> to vector<16x1x16x12xf32>
    %20 = vector.shape_cast %19 : vector<16x1x16x12xf32> to vector<16x16x12xf32>
    %21 = arith.truncf %20 : vector<16x16x12xf32> to vector<16x16x12xbf16>
    %c1_11 = arith.constant 1 : index
    %c0_12 = arith.constant 0 : index
    %c0_13 = arith.constant 0 : index
    %22 = vector.load %arg2[%c1_11, %c0_12, %c0_13] : memref<4x12x32xbf16, #tpu.memory_space<vmem>>, vector<1x12x32xbf16>
    %23 = vector.shape_cast %22 : vector<1x12x32xbf16> to vector<12x32xbf16>
    %cst_14 = arith.constant dense<0.000000e+00> : vector<16x16x32xf32>
    %24 = tpu.matmul %21, %23, %cst_14 {dimension_numbers = #tpu.dot_dimension_numbers<[2], [0], [0, 1], [1], [0, 0, 0, 1, 1, 1], [], []>} : vector<16x16x12xbf16>, vector<12x32xbf16>, vector<16x16x32xf32> -> vector<16x16x32xf32>
    %25 = arith.addf %16, %24 : vector<16x16x32xf32>
    %26 = vector.extract_strided_slice %18 {offsets = [0, 1, 0, 0], sizes = [16, 1, 16, 12], strides = [1, 1, 1, 1]} : vector<16x2x16x12xf32> to vector<16x1x16x12xf32>
    %27 = vector.shape_cast %26 : vector<16x1x16x12xf32> to vector<16x16x12xf32>
    %28 = arith.truncf %27 : vector<16x16x12xf32> to vector<16x16x12xbf16>
    %c3 = arith.constant 3 : index
    %c0_15 = arith.constant 0 : index
    %c0_16 = arith.constant 0 : index
    %29 = vector.load %arg2[%c3, %c0_15, %c0_16] : memref<4x12x32xbf16, #tpu.memory_space<vmem>>, vector<1x12x32xbf16>
    %30 = vector.shape_cast %29 : vector<1x12x32xbf16> to vector<12x32xbf16>
    %cst_17 = arith.constant dense<0.000000e+00> : vector<16x16x32xf32>
    %31 = tpu.matmul %28, %30, %cst_17 {dimension_numbers = #tpu.dot_dimension_numbers<[2], [0], [0, 1], [1], [0, 0, 0, 1, 1, 1], [], []>} : vector<16x16x12xbf16>, vector<12x32xbf16>, vector<16x16x32xf32> -> vector<16x16x32xf32>
    %32 = arith.addf %25, %31 : vector<16x16x32xf32>
    %c0_18 = arith.constant 0 : index
    %c0_19 = arith.constant 0 : index
    %c0_20 = arith.constant 0 : index
    %33 = vector.load %arg3[%c0_18, %c0_19, %c0_20] : memref<1x1x32xf32, #tpu.memory_space<vmem>>, vector<1x1x32xf32>
    %34 = vector.broadcast %33 : vector<1x1x32xf32> to vector<16x16x32xf32>
    %35 = arith.addf %32, %34 : vector<16x16x32xf32>
    %cst_21 = arith.constant dense<0.000000e+00> : vector<16x16xf32>
    %36 = vector.multi_reduction <add>, %35, %cst_21 [2] : vector<16x16x32xf32> to vector<16x16xf32>
    %37 = vector.shape_cast %36 : vector<16x16xf32> to vector<16x16x1xf32>
    %cst_22 = arith.constant 3.200000e+01 : f32
    %38 = vector.broadcast %cst_22 : f32 to vector<16x16x1xf32>
    %39 = arith.divf %37, %38 : vector<16x16x1xf32>
    %40 = vector.broadcast %39 : vector<16x16x1xf32> to vector<16x16x32xf32>
    %41 = arith.subf %35, %40 : vector<16x16x32xf32>
    %42 = arith.mulf %41, %41 : vector<16x16x32xf32>
    %cst_23 = arith.constant dense<0.000000e+00> : vector<16x16xf32>
    %43 = vector.multi_reduction <add>, %42, %cst_23 [2] : vector<16x16x32xf32> to vector<16x16xf32>
    %44 = vector.shape_cast %43 : vector<16x16xf32> to vector<16x16x1xf32>
    %cst_24 = arith.constant 3.200000e+01 : f32
    %45 = vector.broadcast %cst_24 : f32 to vector<16x16x1xf32>
    %46 = arith.divf %44, %45 : vector<16x16x1xf32>
    %cst_25 = arith.constant 9.99999997E-7 : f32
    %47 = vector.broadcast %cst_25 : f32 to vector<16x16x1xf32>
    %48 = arith.addf %46, %47 : vector<16x16x1xf32>
    %49 = math.rsqrt %48 : vector<16x16x1xf32>
    %50 = vector.broadcast %49 : vector<16x16x1xf32> to vector<16x16x32xf32>
    %51 = arith.mulf %41, %50 : vector<16x16x32xf32>
    %c0_26 = arith.constant 0 : index
    %c0_27 = arith.constant 0 : index
    %c0_28 = arith.constant 0 : index
    %52 = vector.load %arg4[%c0_26, %c0_27, %c0_28] : memref<1x1x32xf32, #tpu.memory_space<vmem>>, vector<1x1x32xf32>
    %53 = vector.broadcast %52 : vector<1x1x32xf32> to vector<16x16x32xf32>
    %54 = arith.mulf %51, %53 : vector<16x16x32xf32>
    %c0_29 = arith.constant 0 : index
    %c0_30 = arith.constant 0 : index
    %c0_31 = arith.constant 0 : index
    %55 = vector.load %arg5[%c0_29, %c0_30, %c0_31] : memref<1x1x32xf32, #tpu.memory_space<vmem>>, vector<1x1x32xf32>
    %56 = vector.broadcast %55 : vector<1x1x32xf32> to vector<16x16x32xf32>
    %57 = arith.addf %54, %56 : vector<16x16x32xf32>
    %c0_32 = arith.constant 0 : index
    %c0_33 = arith.constant 0 : index
    %c0_34 = arith.constant 0 : index
    %58 = vector.load %arg14[%c0_32, %c0_33, %c0_34] : memref<16x16x32xf32, #tpu.memory_space<vmem>>, vector<16x16x32xf32>
    tpu.vector_store %arg14[%c0_32, %c0_33, %c0_34], %57 {strides = array<i32>} : memref<16x16x32xf32, #tpu.memory_space<vmem>>, vector<16x16x32xf32>,
    %cst_35 = arith.constant 0.000000e+00 : f32
    %59 = vector.broadcast %cst_35 : f32 to vector<8x8x64xf32>
    %c0_36 = arith.constant 0 : index
    %c0_37 = arith.constant 0 : index
    %c0_38 = arith.constant 0 : index
    %60 = tpu.strided_load %arg14[%c0_36, %c0_37, %c0_38] {strides = array<i32: 1, 2, 1>} : memref<16x16x32xf32, #tpu.memory_space<vmem>>, vector<16x8x32xf32>
    %cst_39 = arith.constant dense<0.000000e+00> : vector<16x8xf32>
    %61 = vector.multi_reduction <add>, %60, %cst_39 [2] : vector<16x8x32xf32> to vector<16x8xf32>
    %62 = vector.shape_cast %61 : vector<16x8xf32> to vector<16x8x1xf32>
    %cst_40 = arith.constant 3.200000e+01 : f32
    %63 = vector.broadcast %cst_40 : f32 to vector<16x8x1xf32>
    %64 = arith.divf %62, %63 : vector<16x8x1xf32>
    %65 = vector.broadcast %64 : vector<16x8x1xf32> to vector<16x8x32xf32>
    %66 = arith.subf %60, %65 : vector<16x8x32xf32>
    %67 = arith.mulf %66, %66 : vector<16x8x32xf32>
    %cst_41 = arith.constant dense<0.000000e+00> : vector<16x8xf32>
    %68 = vector.multi_reduction <add>, %67, %cst_41 [2] : vector<16x8x32xf32> to vector<16x8xf32>
    %69 = vector.shape_cast %68 : vector<16x8xf32> to vector<16x8x1xf32>
    %cst_42 = arith.constant 3.200000e+01 : f32
    %70 = vector.broadcast %cst_42 : f32 to vector<16x8x1xf32>
    %71 = arith.divf %69, %70 : vector<16x8x1xf32>
    %cst_43 = arith.constant 9.99999997E-7 : f32
    %72 = vector.broadcast %cst_43 : f32 to vector<16x8x1xf32>
    %73 = arith.addf %71, %72 : vector<16x8x1xf32>
    %74 = math.rsqrt %73 : vector<16x8x1xf32>
    %75 = vector.broadcast %74 : vector<16x8x1xf32> to vector<16x8x32xf32>
    %76 = arith.mulf %66, %75 : vector<16x8x32xf32>
    %77 = vector.shape_cast %76 : vector<16x8x32xf32> to vector<8x2x8x32xf32>
    %78 = vector.extract_strided_slice %77 {offsets = [0, 0, 0, 0], sizes = [8, 1, 8, 32], strides = [1, 1, 1, 1]} : vector<8x2x8x32xf32> to vector<8x1x8x32xf32>
    %79 = vector.shape_cast %78 : vector<8x1x8x32xf32> to vector<8x8x32xf32>
    %80 = arith.truncf %79 : vector<8x8x32xf32> to vector<8x8x32xbf16>
    %c0_44 = arith.constant 0 : index
    %c0_45 = arith.constant 0 : index
    %c0_46 = arith.constant 0 : index
    %81 = vector.load %arg6[%c0_44, %c0_45, %c0_46] : memref<4x32x64xbf16, #tpu.memory_space<vmem>>, vector<1x32x64xbf16>
    %82 = vector.shape_cast %81 : vector<1x32x64xbf16> to vector<32x64xbf16>
    %cst_47 = arith.constant dense<0.000000e+00> : vector<8x8x64xf32>
    %83 = tpu.matmul %80, %82, %cst_47 {dimension_numbers = #tpu.dot_dimension_numbers<[2], [0], [0, 1], [1], [0, 0, 0, 1, 1, 1], [], []>} : vector<8x8x32xbf16>, vector<32x64xbf16>, vector<8x8x64xf32> -> vector<8x8x64xf32>
    %84 = arith.addf %59, %83 : vector<8x8x64xf32>
    %85 = vector.extract_strided_slice %77 {offsets = [0, 1, 0, 0], sizes = [8, 1, 8, 32], strides = [1, 1, 1, 1]} : vector<8x2x8x32xf32> to vector<8x1x8x32xf32>
    %86 = vector.shape_cast %85 : vector<8x1x8x32xf32> to vector<8x8x32xf32>
    %87 = arith.truncf %86 : vector<8x8x32xf32> to vector<8x8x32xbf16>
    %c2_48 = arith.constant 2 : index
    %c0_49 = arith.constant 0 : index
    %c0_50 = arith.constant 0 : index
    %88 = vector.load %arg6[%c2_48, %c0_49, %c0_50] : memref<4x32x64xbf16, #tpu.memory_space<vmem>>, vector<1x32x64xbf16>
    %89 = vector.shape_cast %88 : vector<1x32x64xbf16> to vector<32x64xbf16>
    %cst_51 = arith.constant dense<0.000000e+00> : vector<8x8x64xf32>
    %90 = tpu.matmul %87, %89, %cst_51 {dimension_numbers = #tpu.dot_dimension_numbers<[2], [0], [0, 1], [1], [0, 0, 0, 1, 1, 1], [], []>} : vector<8x8x32xbf16>, vector<32x64xbf16>, vector<8x8x64xf32> -> vector<8x8x64xf32>
    %91 = arith.addf %84, %90 : vector<8x8x64xf32>
    %c0_52 = arith.constant 0 : index
    %c1_53 = arith.constant 1 : index
    %c0_54 = arith.constant 0 : index
    %92 = tpu.strided_load %arg14[%c0_52, %c1_53, %c0_54] {strides = array<i32: 1, 2, 1>} : memref<16x16x32xf32, #tpu.memory_space<vmem>>, vector<16x8x32xf32>
    %cst_55 = arith.constant dense<0.000000e+00> : vector<16x8xf32>
    %93 = vector.multi_reduction <add>, %92, %cst_55 [2] : vector<16x8x32xf32> to vector<16x8xf32>
    %94 = vector.shape_cast %93 : vector<16x8xf32> to vector<16x8x1xf32>
    %cst_56 = arith.constant 3.200000e+01 : f32
    %95 = vector.broadcast %cst_56 : f32 to vector<16x8x1xf32>
    %96 = arith.divf %94, %95 : vector<16x8x1xf32>
    %97 = vector.broadcast %96 : vector<16x8x1xf32> to vector<16x8x32xf32>
    %98 = arith.subf %92, %97 : vector<16x8x32xf32>
    %99 = arith.mulf %98, %98 : vector<16x8x32xf32>
    %cst_57 = arith.constant dense<0.000000e+00> : vector<16x8xf32>
    %100 = vector.multi_reduction <add>, %99, %cst_57 [2] : vector<16x8x32xf32> to vector<16x8xf32>
    %101 = vector.shape_cast %100 : vector<16x8xf32> to vector<16x8x1xf32>
    %cst_58 = arith.constant 3.200000e+01 : f32
    %102 = vector.broadcast %cst_58 : f32 to vector<16x8x1xf32>
    %103 = arith.divf %101, %102 : vector<16x8x1xf32>
    %cst_59 = arith.constant 9.99999997E-7 : f32
    %104 = vector.broadcast %cst_59 : f32 to vector<16x8x1xf32>
    %105 = arith.addf %103, %104 : vector<16x8x1xf32>
    %106 = math.rsqrt %105 : vector<16x8x1xf32>
    %107 = vector.broadcast %106 : vector<16x8x1xf32> to vector<16x8x32xf32>
    %108 = arith.mulf %98, %107 : vector<16x8x32xf32>
    %109 = vector.shape_cast %108 : vector<16x8x32xf32> to vector<8x2x8x32xf32>
    %110 = vector.extract_strided_slice %109 {offsets = [0, 0, 0, 0], sizes = [8, 1, 8, 32], strides = [1, 1, 1, 1]} : vector<8x2x8x32xf32> to vector<8x1x8x32xf32>
    %111 = vector.shape_cast %110 : vector<8x1x8x32xf32> to vector<8x8x32xf32>
    %112 = arith.truncf %111 : vector<8x8x32xf32> to vector<8x8x32xbf16>
    %c1_60 = arith.constant 1 : index
    %c0_61 = arith.constant 0 : index
    %c0_62 = arith.constant 0 : index
    %113 = vector.load %arg6[%c1_60, %c0_61, %c0_62] : memref<4x32x64xbf16, #tpu.memory_space<vmem>>, vector<1x32x64xbf16>
    %114 = vector.shape_cast %113 : vector<1x32x64xbf16> to vector<32x64xbf16>
    %cst_63 = arith.constant dense<0.000000e+00> : vector<8x8x64xf32>
    %115 = tpu.matmul %112, %114, %cst_63 {dimension_numbers = #tpu.dot_dimension_numbers<[2], [0], [0, 1], [1], [0, 0, 0, 1, 1, 1], [], []>} : vector<8x8x32xbf16>, vector<32x64xbf16>, vector<8x8x64xf32> -> vector<8x8x64xf32>
    %116 = arith.addf %91, %115 : vector<8x8x64xf32>
    %117 = vector.extract_strided_slice %109 {offsets = [0, 1, 0, 0], sizes = [8, 1, 8, 32], strides = [1, 1, 1, 1]} : vector<8x2x8x32xf32> to vector<8x1x8x32xf32>
    %118 = vector.shape_cast %117 : vector<8x1x8x32xf32> to vector<8x8x32xf32>
    %119 = arith.truncf %118 : vector<8x8x32xf32> to vector<8x8x32xbf16>
    %c3_64 = arith.constant 3 : index
    %c0_65 = arith.constant 0 : index
    %c0_66 = arith.constant 0 : index
    %120 = vector.load %arg6[%c3_64, %c0_65, %c0_66] : memref<4x32x64xbf16, #tpu.memory_space<vmem>>, vector<1x32x64xbf16>
    %121 = vector.shape_cast %120 : vector<1x32x64xbf16> to vector<32x64xbf16>
    %cst_67 = arith.constant dense<0.000000e+00> : vector<8x8x64xf32>
    %122 = tpu.matmul %119, %121, %cst_67 {dimension_numbers = #tpu.dot_dimension_numbers<[2], [0], [0, 1], [1], [0, 0, 0, 1, 1, 1], [], []>} : vector<8x8x32xbf16>, vector<32x64xbf16>, vector<8x8x64xf32> -> vector<8x8x64xf32>
    %123 = arith.addf %116, %122 : vector<8x8x64xf32>
    %c0_68 = arith.constant 0 : index
    %c0_69 = arith.constant 0 : index
    %c0_70 = arith.constant 0 : index
    %124 = vector.load %arg7[%c0_68, %c0_69, %c0_70] : memref<1x1x64xf32, #tpu.memory_space<vmem>>, vector<1x1x64xf32>
    %125 = vector.broadcast %124 : vector<1x1x64xf32> to vector<8x8x64xf32>
    %126 = arith.addf %123, %125 : vector<8x8x64xf32>
    %c0_71 = arith.constant 0 : index
    %c0_72 = arith.constant 0 : index
    %c0_73 = arith.constant 0 : index
    %127 = vector.load %arg15[%c0_71, %c0_72, %c0_73] : memref<8x8x64xf32, #tpu.memory_space<vmem>>, vector<8x8x64xf32>
    tpu.vector_store %arg15[%c0_71, %c0_72, %c0_73], %126 {strides = array<i32>} : memref<8x8x64xf32, #tpu.memory_space<vmem>>, vector<8x8x64xf32>,
    %cst_74 = arith.constant 0.000000e+00 : f32
    %128 = vector.broadcast %cst_74 : f32 to vector<4x4x128xf32>
    %c0_75 = arith.constant 0 : index
    %c0_76 = arith.constant 0 : index
    %c0_77 = arith.constant 0 : index
    %129 = tpu.strided_load %arg15[%c0_75, %c0_76, %c0_77] {strides = array<i32: 1, 2, 1>} : memref<8x8x64xf32, #tpu.memory_space<vmem>>, vector<8x4x64xf32>
    %cst_78 = arith.constant dense<0.000000e+00> : vector<8x4xf32>
    %130 = vector.multi_reduction <add>, %129, %cst_78 [2] : vector<8x4x64xf32> to vector<8x4xf32>
    %131 = vector.shape_cast %130 : vector<8x4xf32> to vector<8x4x1xf32>
    %cst_79 = arith.constant 6.400000e+01 : f32
    %132 = vector.broadcast %cst_79 : f32 to vector<8x4x1xf32>
    %133 = arith.divf %131, %132 : vector<8x4x1xf32>
    %134 = vector.broadcast %133 : vector<8x4x1xf32> to vector<8x4x64xf32>
    %135 = arith.subf %129, %134 : vector<8x4x64xf32>
    %136 = arith.mulf %135, %135 : vector<8x4x64xf32>
    %cst_80 = arith.constant dense<0.000000e+00> : vector<8x4xf32>
    %137 = vector.multi_reduction <add>, %136, %cst_80 [2] : vector<8x4x64xf32> to vector<8x4xf32>
    %138 = vector.shape_cast %137 : vector<8x4xf32> to vector<8x4x1xf32>
    %cst_81 = arith.constant 6.400000e+01 : f32
    %139 = vector.broadcast %cst_81 : f32 to vector<8x4x1xf32>
    %140 = arith.divf %138, %139 : vector<8x4x1xf32>
    %cst_82 = arith.constant 9.99999997E-7 : f32
    %141 = vector.broadcast %cst_82 : f32 to vector<8x4x1xf32>
    %142 = arith.addf %140, %141 : vector<8x4x1xf32>
    %143 = math.rsqrt %142 : vector<8x4x1xf32>
    %144 = vector.broadcast %143 : vector<8x4x1xf32> to vector<8x4x64xf32>
    %145 = arith.mulf %135, %144 : vector<8x4x64xf32>
    %146 = vector.shape_cast %145 : vector<8x4x64xf32> to vector<4x2x4x64xf32>
    %147 = vector.extract_strided_slice %146 {offsets = [0, 0, 0, 0], sizes = [4, 1, 4, 64], strides = [1, 1, 1, 1]} : vector<4x2x4x64xf32> to vector<4x1x4x64xf32>
    %148 = vector.shape_cast %147 : vector<4x1x4x64xf32> to vector<4x4x64xf32>
    %149 = arith.truncf %148 : vector<4x4x64xf32> to vector<4x4x64xbf16>
    %c0_83 = arith.constant 0 : index
    %c0_84 = arith.constant 0 : index
    %c0_85 = arith.constant 0 : index
    %150 = vector.load %arg8[%c0_83, %c0_84, %c0_85] : memref<4x64x128xbf16, #tpu.memory_space<vmem>>, vector<1x64x128xbf16>
    %151 = vector.shape_cast %150 : vector<1x64x128xbf16> to vector<64x128xbf16>
    %cst_86 = arith.constant dense<0.000000e+00> : vector<4x4x128xf32>
    %152 = tpu.matmul %149, %151, %cst_86 {dimension_numbers = #tpu.dot_dimension_numbers<[2], [0], [0, 1], [1], [0, 0, 0, 1, 1, 1], [], []>} : vector<4x4x64xbf16>, vector<64x128xbf16>, vector<4x4x128xf32> -> vector<4x4x128xf32>
    %153 = arith.addf %128, %152 : vector<4x4x128xf32>
    %154 = vector.extract_strided_slice %146 {offsets = [0, 1, 0, 0], sizes = [4, 1, 4, 64], strides = [1, 1, 1, 1]} : vector<4x2x4x64xf32> to vector<4x1x4x64xf32>
    %155 = vector.shape_cast %154 : vector<4x1x4x64xf32> to vector<4x4x64xf32>
    %156 = arith.truncf %155 : vector<4x4x64xf32> to vector<4x4x64xbf16>
    %c2_87 = arith.constant 2 : index
    %c0_88 = arith.constant 0 : index
    %c0_89 = arith.constant 0 : index
    %157 = vector.load %arg8[%c2_87, %c0_88, %c0_89] : memref<4x64x128xbf16, #tpu.memory_space<vmem>>, vector<1x64x128xbf16>
    %158 = vector.shape_cast %157 : vector<1x64x128xbf16> to vector<64x128xbf16>
    %cst_90 = arith.constant dense<0.000000e+00> : vector<4x4x128xf32>
    %159 = tpu.matmul %156, %158, %cst_90 {dimension_numbers = #tpu.dot_dimension_numbers<[2], [0], [0, 1], [1], [0, 0, 0, 1, 1, 1], [], []>} : vector<4x4x64xbf16>, vector<64x128xbf16>, vector<4x4x128xf32> -> vector<4x4x128xf32>
    %160 = arith.addf %153, %159 : vector<4x4x128xf32>
    %c0_91 = arith.constant 0 : index
    %c1_92 = arith.constant 1 : index
    %c0_93 = arith.constant 0 : index
    %161 = tpu.strided_load %arg15[%c0_91, %c1_92, %c0_93] {strides = array<i32: 1, 2, 1>} : memref<8x8x64xf32, #tpu.memory_space<vmem>>, vector<8x4x64xf32>
    %cst_94 = arith.constant dense<0.000000e+00> : vector<8x4xf32>
    %162 = vector.multi_reduction <add>, %161, %cst_94 [2] : vector<8x4x64xf32> to vector<8x4xf32>
    %163 = vector.shape_cast %162 : vector<8x4xf32> to vector<8x4x1xf32>
    %cst_95 = arith.constant 6.400000e+01 : f32
    %164 = vector.broadcast %cst_95 : f32 to vector<8x4x1xf32>
    %165 = arith.divf %163, %164 : vector<8x4x1xf32>
    %166 = vector.broadcast %165 : vector<8x4x1xf32> to vector<8x4x64xf32>
    %167 = arith.subf %161, %166 : vector<8x4x64xf32>
    %168 = arith.mulf %167, %167 : vector<8x4x64xf32>
    %cst_96 = arith.constant dense<0.000000e+00> : vector<8x4xf32>
    %169 = vector.multi_reduction <add>, %168, %cst_96 [2] : vector<8x4x64xf32> to vector<8x4xf32>
    %170 = vector.shape_cast %169 : vector<8x4xf32> to vector<8x4x1xf32>
    %cst_97 = arith.constant 6.400000e+01 : f32
    %171 = vector.broadcast %cst_97 : f32 to vector<8x4x1xf32>
    %172 = arith.divf %170, %171 : vector<8x4x1xf32>
    %cst_98 = arith.constant 9.99999997E-7 : f32
    %173 = vector.broadcast %cst_98 : f32 to vector<8x4x1xf32>
    %174 = arith.addf %172, %173 : vector<8x4x1xf32>
    %175 = math.rsqrt %174 : vector<8x4x1xf32>
    %176 = vector.broadcast %175 : vector<8x4x1xf32> to vector<8x4x64xf32>
    %177 = arith.mulf %167, %176 : vector<8x4x64xf32>
    %178 = vector.shape_cast %177 : vector<8x4x64xf32> to vector<4x2x4x64xf32>
    %179 = vector.extract_strided_slice %178 {offsets = [0, 0, 0, 0], sizes = [4, 1, 4, 64], strides = [1, 1, 1, 1]} : vector<4x2x4x64xf32> to vector<4x1x4x64xf32>
    %180 = vector.shape_cast %179 : vector<4x1x4x64xf32> to vector<4x4x64xf32>
    %181 = arith.truncf %180 : vector<4x4x64xf32> to vector<4x4x64xbf16>
    %c1_99 = arith.constant 1 : index
    %c0_100 = arith.constant 0 : index
    %c0_101 = arith.constant 0 : index
    %182 = vector.load %arg8[%c1_99, %c0_100, %c0_101] : memref<4x64x128xbf16, #tpu.memory_space<vmem>>, vector<1x64x128xbf16>
    %183 = vector.shape_cast %182 : vector<1x64x128xbf16> to vector<64x128xbf16>
    %cst_102 = arith.constant dense<0.000000e+00> : vector<4x4x128xf32>
    %184 = tpu.matmul %181, %183, %cst_102 {dimension_numbers = #tpu.dot_dimension_numbers<[2], [0], [0, 1], [1], [0, 0, 0, 1, 1, 1], [], []>} : vector<4x4x64xbf16>, vector<64x128xbf16>, vector<4x4x128xf32> -> vector<4x4x128xf32>
    %185 = arith.addf %160, %184 : vector<4x4x128xf32>
    %186 = vector.extract_strided_slice %178 {offsets = [0, 1, 0, 0], sizes = [4, 1, 4, 64], strides = [1, 1, 1, 1]} : vector<4x2x4x64xf32> to vector<4x1x4x64xf32>
    %187 = vector.shape_cast %186 : vector<4x1x4x64xf32> to vector<4x4x64xf32>
    %188 = arith.truncf %187 : vector<4x4x64xf32> to vector<4x4x64xbf16>
    %c3_103 = arith.constant 3 : index
    %c0_104 = arith.constant 0 : index
    %c0_105 = arith.constant 0 : index
    %189 = vector.load %arg8[%c3_103, %c0_104, %c0_105] : memref<4x64x128xbf16, #tpu.memory_space<vmem>>, vector<1x64x128xbf16>
    %190 = vector.shape_cast %189 : vector<1x64x128xbf16> to vector<64x128xbf16>
    %cst_106 = arith.constant dense<0.000000e+00> : vector<4x4x128xf32>
    %191 = tpu.matmul %188, %190, %cst_106 {dimension_numbers = #tpu.dot_dimension_numbers<[2], [0], [0, 1], [1], [0, 0, 0, 1, 1, 1], [], []>} : vector<4x4x64xbf16>, vector<64x128xbf16>, vector<4x4x128xf32> -> vector<4x4x128xf32>
    %192 = arith.addf %185, %191 : vector<4x4x128xf32>
    %c0_107 = arith.constant 0 : index
    %c0_108 = arith.constant 0 : index
    %c0_109 = arith.constant 0 : index
    %193 = vector.load %arg9[%c0_107, %c0_108, %c0_109] : memref<1x1x128xf32, #tpu.memory_space<vmem>>, vector<1x1x128xf32>
    %194 = vector.broadcast %193 : vector<1x1x128xf32> to vector<4x4x128xf32>
    %195 = arith.addf %192, %194 : vector<4x4x128xf32>
    %c0_110 = arith.constant 0 : index
    %c0_111 = arith.constant 0 : index
    %c0_112 = arith.constant 0 : index
    %196 = vector.load %arg16[%c0_110, %c0_111, %c0_112] : memref<4x4x128xf32, #tpu.memory_space<vmem>>, vector<4x4x128xf32>
    tpu.vector_store %arg16[%c0_110, %c0_111, %c0_112], %195 {strides = array<i32>} : memref<4x4x128xf32, #tpu.memory_space<vmem>>, vector<4x4x128xf32>,
    %cst_113 = arith.constant 0.000000e+00 : f32
    %197 = vector.broadcast %cst_113 : f32 to vector<2x2x256xf32>
    %c0_114 = arith.constant 0 : index
    %c0_115 = arith.constant 0 : index
    %c0_116 = arith.constant 0 : index
    %198 = tpu.strided_load %arg16[%c0_114, %c0_115, %c0_116] {strides = array<i32: 1, 2, 1>} : memref<4x4x128xf32, #tpu.memory_space<vmem>>, vector<4x2x128xf32>
    %cst_117 = arith.constant dense<0.000000e+00> : vector<4x2xf32>
    %199 = vector.multi_reduction <add>, %198, %cst_117 [2] : vector<4x2x128xf32> to vector<4x2xf32>
    %200 = vector.shape_cast %199 : vector<4x2xf32> to vector<4x2x1xf32>
    %cst_118 = arith.constant 1.280000e+02 : f32
    %201 = vector.broadcast %cst_118 : f32 to vector<4x2x1xf32>
    %202 = arith.divf %200, %201 : vector<4x2x1xf32>
    %203 = vector.broadcast %202 : vector<4x2x1xf32> to vector<4x2x128xf32>
    %204 = arith.subf %198, %203 : vector<4x2x128xf32>
    %205 = arith.mulf %204, %204 : vector<4x2x128xf32>
    %cst_119 = arith.constant dense<0.000000e+00> : vector<4x2xf32>
    %206 = vector.multi_reduction <add>, %205, %cst_119 [2] : vector<4x2x128xf32> to vector<4x2xf32>
    %207 = vector.shape_cast %206 : vector<4x2xf32> to vector<4x2x1xf32>
    %cst_120 = arith.constant 1.280000e+02 : f32
    %208 = vector.broadcast %cst_120 : f32 to vector<4x2x1xf32>
    %209 = arith.divf %207, %208 : vector<4x2x1xf32>
    %cst_121 = arith.constant 9.99999997E-7 : f32
    %210 = vector.broadcast %cst_121 : f32 to vector<4x2x1xf32>
    %211 = arith.addf %209, %210 : vector<4x2x1xf32>
    %212 = math.rsqrt %211 : vector<4x2x1xf32>
    %213 = vector.broadcast %212 : vector<4x2x1xf32> to vector<4x2x128xf32>
    %214 = arith.mulf %204, %213 : vector<4x2x128xf32>
    %215 = vector.shape_cast %214 : vector<4x2x128xf32> to vector<2x2x2x128xf32>
    %216 = vector.extract_strided_slice %215 {offsets = [0, 0, 0, 0], sizes = [2, 1, 2, 128], strides = [1, 1, 1, 1]} : vector<2x2x2x128xf32> to vector<2x1x2x128xf32>
    %217 = vector.shape_cast %216 : vector<2x1x2x128xf32> to vector<2x2x128xf32>
    %218 = arith.truncf %217 : vector<2x2x128xf32> to vector<2x2x128xbf16>
    %c0_122 = arith.constant 0 : index
    %c0_123 = arith.constant 0 : index
    %c0_124 = arith.constant 0 : index
    %219 = vector.load %arg10[%c0_122, %c0_123, %c0_124] : memref<4x128x256xbf16, #tpu.memory_space<vmem>>, vector<1x128x256xbf16>
    %220 = vector.shape_cast %219 : vector<1x128x256xbf16> to vector<128x256xbf16>
    %cst_125 = arith.constant dense<0.000000e+00> : vector<2x2x256xf32>
    %221 = tpu.matmul %218, %220, %cst_125 {dimension_numbers = #tpu.dot_dimension_numbers<[2], [0], [0, 1], [1], [0, 0, 0, 1, 1, 1], [], []>} : vector<2x2x128xbf16>, vector<128x256xbf16>, vector<2x2x256xf32> -> vector<2x2x256xf32>
    %222 = arith.addf %197, %221 : vector<2x2x256xf32>
    %223 = vector.extract_strided_slice %215 {offsets = [0, 1, 0, 0], sizes = [2, 1, 2, 128], strides = [1, 1, 1, 1]} : vector<2x2x2x128xf32> to vector<2x1x2x128xf32>
    %224 = vector.shape_cast %223 : vector<2x1x2x128xf32> to vector<2x2x128xf32>
    %225 = arith.truncf %224 : vector<2x2x128xf32> to vector<2x2x128xbf16>
    %c2_126 = arith.constant 2 : index
    %c0_127 = arith.constant 0 : index
    %c0_128 = arith.constant 0 : index
    %226 = vector.load %arg10[%c2_126, %c0_127, %c0_128] : memref<4x128x256xbf16, #tpu.memory_space<vmem>>, vector<1x128x256xbf16>
    %227 = vector.shape_cast %226 : vector<1x128x256xbf16> to vector<128x256xbf16>
    %cst_129 = arith.constant dense<0.000000e+00> : vector<2x2x256xf32>
    %228 = tpu.matmul %225, %227, %cst_129 {dimension_numbers = #tpu.dot_dimension_numbers<[2], [0], [0, 1], [1], [0, 0, 0, 1, 1, 1], [], []>} : vector<2x2x128xbf16>, vector<128x256xbf16>, vector<2x2x256xf32> -> vector<2x2x256xf32>
    %229 = arith.addf %222, %228 : vector<2x2x256xf32>
    %c0_130 = arith.constant 0 : index
    %c1_131 = arith.constant 1 : index
    %c0_132 = arith.constant 0 : index
    %230 = tpu.strided_load %arg16[%c0_130, %c1_131, %c0_132] {strides = array<i32: 1, 2, 1>} : memref<4x4x128xf32, #tpu.memory_space<vmem>>, vector<4x2x128xf32>
    %cst_133 = arith.constant dense<0.000000e+00> : vector<4x2xf32>
    %231 = vector.multi_reduction <add>, %230, %cst_133 [2] : vector<4x2x128xf32> to vector<4x2xf32>
    %232 = vector.shape_cast %231 : vector<4x2xf32> to vector<4x2x1xf32>
    %cst_134 = arith.constant 1.280000e+02 : f32
    %233 = vector.broadcast %cst_134 : f32 to vector<4x2x1xf32>
    %234 = arith.divf %232, %233 : vector<4x2x1xf32>
    %235 = vector.broadcast %234 : vector<4x2x1xf32> to vector<4x2x128xf32>
    %236 = arith.subf %230, %235 : vector<4x2x128xf32>
    %237 = arith.mulf %236, %236 : vector<4x2x128xf32>
    %cst_135 = arith.constant dense<0.000000e+00> : vector<4x2xf32>
    %238 = vector.multi_reduction <add>, %237, %cst_135 [2] : vector<4x2x128xf32> to vector<4x2xf32>
    %239 = vector.shape_cast %238 : vector<4x2xf32> to vector<4x2x1xf32>
    %cst_136 = arith.constant 1.280000e+02 : f32
    %240 = vector.broadcast %cst_136 : f32 to vector<4x2x1xf32>
    %241 = arith.divf %239, %240 : vector<4x2x1xf32>
    %cst_137 = arith.constant 9.99999997E-7 : f32
    %242 = vector.broadcast %cst_137 : f32 to vector<4x2x1xf32>
    %243 = arith.addf %241, %242 : vector<4x2x1xf32>
    %244 = math.rsqrt %243 : vector<4x2x1xf32>
    %245 = vector.broadcast %244 : vector<4x2x1xf32> to vector<4x2x128xf32>
    %246 = arith.mulf %236, %245 : vector<4x2x128xf32>
    %247 = vector.shape_cast %246 : vector<4x2x128xf32> to vector<2x2x2x128xf32>
    %248 = vector.extract_strided_slice %247 {offsets = [0, 0, 0, 0], sizes = [2, 1, 2, 128], strides = [1, 1, 1, 1]} : vector<2x2x2x128xf32> to vector<2x1x2x128xf32>
    %249 = vector.shape_cast %248 : vector<2x1x2x128xf32> to vector<2x2x128xf32>
    %250 = arith.truncf %249 : vector<2x2x128xf32> to vector<2x2x128xbf16>
    %c1_138 = arith.constant 1 : index
    %c0_139 = arith.constant 0 : index
    %c0_140 = arith.constant 0 : index
    %251 = vector.load %arg10[%c1_138, %c0_139, %c0_140] : memref<4x128x256xbf16, #tpu.memory_space<vmem>>, vector<1x128x256xbf16>
    %252 = vector.shape_cast %251 : vector<1x128x256xbf16> to vector<128x256xbf16>
    %cst_141 = arith.constant dense<0.000000e+00> : vector<2x2x256xf32>
    %253 = tpu.matmul %250, %252, %cst_141 {dimension_numbers = #tpu.dot_dimension_numbers<[2], [0], [0, 1], [1], [0, 0, 0, 1, 1, 1], [], []>} : vector<2x2x128xbf16>, vector<128x256xbf16>, vector<2x2x256xf32> -> vector<2x2x256xf32>
    %254 = arith.addf %229, %253 : vector<2x2x256xf32>
    %255 = vector.extract_strided_slice %247 {offsets = [0, 1, 0, 0], sizes = [2, 1, 2, 128], strides = [1, 1, 1, 1]} : vector<2x2x2x128xf32> to vector<2x1x2x128xf32>
    %256 = vector.shape_cast %255 : vector<2x1x2x128xf32> to vector<2x2x128xf32>
    %257 = arith.truncf %256 : vector<2x2x128xf32> to vector<2x2x128xbf16>
    %c3_142 = arith.constant 3 : index
    %c0_143 = arith.constant 0 : index
    %c0_144 = arith.constant 0 : index
    %258 = vector.load %arg10[%c3_142, %c0_143, %c0_144] : memref<4x128x256xbf16, #tpu.memory_space<vmem>>, vector<1x128x256xbf16>
    %259 = vector.shape_cast %258 : vector<1x128x256xbf16> to vector<128x256xbf16>
    %cst_145 = arith.constant dense<0.000000e+00> : vector<2x2x256xf32>
    %260 = tpu.matmul %257, %259, %cst_145 {dimension_numbers = #tpu.dot_dimension_numbers<[2], [0], [0, 1], [1], [0, 0, 0, 1, 1, 1], [], []>} : vector<2x2x128xbf16>, vector<128x256xbf16>, vector<2x2x256xf32> -> vector<2x2x256xf32>
    %261 = arith.addf %254, %260 : vector<2x2x256xf32>
    %c0_146 = arith.constant 0 : index
    %c0_147 = arith.constant 0 : index
    %c0_148 = arith.constant 0 : index
    %262 = vector.load %arg11[%c0_146, %c0_147, %c0_148] : memref<1x1x256xf32, #tpu.memory_space<vmem>>, vector<1x1x256xf32>
    %263 = vector.broadcast %262 : vector<1x1x256xf32> to vector<2x2x256xf32>
    %264 = arith.addf %261, %263 : vector<2x2x256xf32>
    %c0_149 = arith.constant 0 : index
    %c0_150 = arith.constant 0 : index
    %c0_151 = arith.constant 0 : index
    %265 = vector.load %arg17[%c0_149, %c0_150, %c0_151] : memref<2x2x256xf32, #tpu.memory_space<vmem>>, vector<2x2x256xf32>
    tpu.vector_store %arg17[%c0_149, %c0_150, %c0_151], %264 {strides = array<i32>} : memref<2x2x256xf32, #tpu.memory_space<vmem>>, vector<2x2x256xf32>,
    %cst_152 = arith.constant 0.000000e+00 : f32
    %266 = vector.broadcast %cst_152 : f32 to vector<4x4x128xf32>
    %c0_153 = arith.constant 0 : index
    %c0_154 = arith.constant 0 : index
    %c0_155 = arith.constant 0 : index
    %267 = tpu.strided_load %arg15[%c0_153, %c0_154, %c0_155] {strides = array<i32: 1, 2, 1>} : memref<8x8x64xf32, #tpu.memory_space<vmem>>, vector<8x4x64xf32>
    %cst_156 = arith.constant dense<0.000000e+00> : vector<8x4xf32>
    %268 = vector.multi_reduction <add>, %267, %cst_156 [2] : vector<8x4x64xf32> to vector<8x4xf32>
    %269 = vector.shape_cast %268 : vector<8x4xf32> to vector<8x4x1xf32>
    %cst_157 = arith.constant 6.400000e+01 : f32
    %270 = vector.broadcast %cst_157 : f32 to vector<8x4x1xf32>
    %271 = arith.divf %269, %270 : vector<8x4x1xf32>
    %272 = vector.broadcast %271 : vector<8x4x1xf32> to vector<8x4x64xf32>
    %273 = arith.subf %267, %272 : vector<8x4x64xf32>
    %274 = arith.mulf %273, %273 : vector<8x4x64xf32>
    %cst_158 = arith.constant dense<0.000000e+00> : vector<8x4xf32>
    %275 = vector.multi_reduction <add>, %274, %cst_158 [2] : vector<8x4x64xf32> to vector<8x4xf32>
    %276 = vector.shape_cast %275 : vector<8x4xf32> to vector<8x4x1xf32>
    %cst_159 = arith.constant 6.400000e+01 : f32
    %277 = vector.broadcast %cst_159 : f32 to vector<8x4x1xf32>
    %278 = arith.divf %276, %277 : vector<8x4x1xf32>
    %cst_160 = arith.constant 9.99999997E-7 : f32
    %279 = vector.broadcast %cst_160 : f32 to vector<8x4x1xf32>
    %280 = arith.addf %278, %279 : vector<8x4x1xf32>
    %281 = math.rsqrt %280 : vector<8x4x1xf32>
    %282 = vector.broadcast %281 : vector<8x4x1xf32> to vector<8x4x64xf32>
    %283 = arith.mulf %273, %282 : vector<8x4x64xf32>
    %284 = vector.shape_cast %283 : vector<8x4x64xf32> to vector<4x2x4x64xf32>
    %285 = vector.extract_strided_slice %284 {offsets = [0, 0, 0, 0], sizes = [4, 1, 4, 64], strides = [1, 1, 1, 1]} : vector<4x2x4x64xf32> to vector<4x1x4x64xf32>
    %286 = vector.shape_cast %285 : vector<4x1x4x64xf32> to vector<4x4x64xf32>
    %287 = arith.truncf %286 : vector<4x4x64xf32> to vector<4x4x64xbf16>
    %c0_161 = arith.constant 0 : index
    %c0_162 = arith.constant 0 : index
    %c0_163 = arith.constant 0 : index
    %288 = vector.load %arg12[%c0_161, %c0_162, %c0_163] : memref<4x64x128xbf16, #tpu.memory_space<vmem>>, vector<1x64x128xbf16>
    %289 = vector.shape_cast %288 : vector<1x64x128xbf16> to vector<64x128xbf16>
    %cst_164 = arith.constant dense<0.000000e+00> : vector<4x4x128xf32>
    %290 = tpu.matmul %287, %289, %cst_164 {dimension_numbers = #tpu.dot_dimension_numbers<[2], [0], [0, 1], [1], [0, 0, 0, 1, 1, 1], [], []>} : vector<4x4x64xbf16>, vector<64x128xbf16>, vector<4x4x128xf32> -> vector<4x4x128xf32>
    %291 = arith.addf %266, %290 : vector<4x4x128xf32>
    %292 = vector.extract_strided_slice %284 {offsets = [0, 1, 0, 0], sizes = [4, 1, 4, 64], strides = [1, 1, 1, 1]} : vector<4x2x4x64xf32> to vector<4x1x4x64xf32>
    %293 = vector.shape_cast %292 : vector<4x1x4x64xf32> to vector<4x4x64xf32>
    %294 = arith.truncf %293 : vector<4x4x64xf32> to vector<4x4x64xbf16>
    %c2_165 = arith.constant 2 : index
    %c0_166 = arith.constant 0 : index
    %c0_167 = arith.constant 0 : index
    %295 = vector.load %arg12[%c2_165, %c0_166, %c0_167] : memref<4x64x128xbf16, #tpu.memory_space<vmem>>, vector<1x64x128xbf16>
    %296 = vector.shape_cast %295 : vector<1x64x128xbf16> to vector<64x128xbf16>
    %cst_168 = arith.constant dense<0.000000e+00> : vector<4x4x128xf32>
    %297 = tpu.matmul %294, %296, %cst_168 {dimension_numbers = #tpu.dot_dimension_numbers<[2], [0], [0, 1], [1], [0, 0, 0, 1, 1, 1], [], []>} : vector<4x4x64xbf16>, vector<64x128xbf16>, vector<4x4x128xf32> -> vector<4x4x128xf32>
    %298 = arith.addf %291, %297 : vector<4x4x128xf32>
    %c0_169 = arith.constant 0 : index
    %c1_170 = arith.constant 1 : index
    %c0_171 = arith.constant 0 : index
    %299 = tpu.strided_load %arg15[%c0_169, %c1_170, %c0_171] {strides = array<i32: 1, 2, 1>} : memref<8x8x64xf32, #tpu.memory_space<vmem>>, vector<8x4x64xf32>
    %cst_172 = arith.constant dense<0.000000e+00> : vector<8x4xf32>
    %300 = vector.multi_reduction <add>, %299, %cst_172 [2] : vector<8x4x64xf32> to vector<8x4xf32>
    %301 = vector.shape_cast %300 : vector<8x4xf32> to vector<8x4x1xf32>
    %cst_173 = arith.constant 6.400000e+01 : f32
    %302 = vector.broadcast %cst_173 : f32 to vector<8x4x1xf32>
    %303 = arith.divf %301, %302 : vector<8x4x1xf32>
    %304 = vector.broadcast %303 : vector<8x4x1xf32> to vector<8x4x64xf32>
    %305 = arith.subf %299, %304 : vector<8x4x64xf32>
    %306 = arith.mulf %305, %305 : vector<8x4x64xf32>
    %cst_174 = arith.constant dense<0.000000e+00> : vector<8x4xf32>
    %307 = vector.multi_reduction <add>, %306, %cst_174 [2] : vector<8x4x64xf32> to vector<8x4xf32>
    %308 = vector.shape_cast %307 : vector<8x4xf32> to vector<8x4x1xf32>
    %cst_175 = arith.constant 6.400000e+01 : f32
    %309 = vector.broadcast %cst_175 : f32 to vector<8x4x1xf32>
    %310 = arith.divf %308, %309 : vector<8x4x1xf32>
    %cst_176 = arith.constant 9.99999997E-7 : f32
    %311 = vector.broadcast %cst_176 : f32 to vector<8x4x1xf32>
    %312 = arith.addf %310, %311 : vector<8x4x1xf32>
    %313 = math.rsqrt %312 : vector<8x4x1xf32>
    %314 = vector.broadcast %313 : vector<8x4x1xf32> to vector<8x4x64xf32>
    %315 = arith.mulf %305, %314 : vector<8x4x64xf32>
    %316 = vector.shape_cast %315 : vector<8x4x64xf32> to vector<4x2x4x64xf32>
    %317 = vector.extract_strided_slice %316 {offsets = [0, 0, 0, 0], sizes = [4, 1, 4, 64], strides = [1, 1, 1, 1]} : vector<4x2x4x64xf32> to vector<4x1x4x64xf32>
    %318 = vector.shape_cast %317 : vector<4x1x4x64xf32> to vector<4x4x64xf32>
    %319 = arith.truncf %318 : vector<4x4x64xf32> to vector<4x4x64xbf16>
    %c1_177 = arith.constant 1 : index
    %c0_178 = arith.constant 0 : index
    %c0_179 = arith.constant 0 : index
    %320 = vector.load %arg12[%c1_177, %c0_178, %c0_179] : memref<4x64x128xbf16, #tpu.memory_space<vmem>>, vector<1x64x128xbf16>
    %321 = vector.shape_cast %320 : vector<1x64x128xbf16> to vector<64x128xbf16>
    %cst_180 = arith.constant dense<0.000000e+00> : vector<4x4x128xf32>
    %322 = tpu.matmul %319, %321, %cst_180 {dimension_numbers = #tpu.dot_dimension_numbers<[2], [0], [0, 1], [1], [0, 0, 0, 1, 1, 1], [], []>} : vector<4x4x64xbf16>, vector<64x128xbf16>, vector<4x4x128xf32> -> vector<4x4x128xf32>
    %323 = arith.addf %298, %322 : vector<4x4x128xf32>
    %324 = vector.extract_strided_slice %316 {offsets = [0, 1, 0, 0], sizes = [4, 1, 4, 64], strides = [1, 1, 1, 1]} : vector<4x2x4x64xf32> to vector<4x1x4x64xf32>
    %325 = vector.shape_cast %324 : vector<4x1x4x64xf32> to vector<4x4x64xf32>
    %326 = arith.truncf %325 : vector<4x4x64xf32> to vector<4x4x64xbf16>
    %c3_181 = arith.constant 3 : index
    %c0_182 = arith.constant 0 : index
    %c0_183 = arith.constant 0 : index
    %327 = vector.load %arg12[%c3_181, %c0_182, %c0_183] : memref<4x64x128xbf16, #tpu.memory_space<vmem>>, vector<1x64x128xbf16>
    %328 = vector.shape_cast %327 : vector<1x64x128xbf16> to vector<64x128xbf16>
    %cst_184 = arith.constant dense<0.000000e+00> : vector<4x4x128xf32>
    %329 = tpu.matmul %326, %328, %cst_184 {dimension_numbers = #tpu.dot_dimension_numbers<[2], [0], [0, 1], [1], [0, 0, 0, 1, 1, 1], [], []>} : vector<4x4x64xbf16>, vector<64x128xbf16>, vector<4x4x128xf32> -> vector<4x4x128xf32>
    %330 = arith.addf %323, %329 : vector<4x4x128xf32>
    %c0_185 = arith.constant 0 : index
    %c0_186 = arith.constant 0 : index
    %c0_187 = arith.constant 0 : index
    %331 = vector.load %arg13[%c0_185, %c0_186, %c0_187] : memref<1x1x128xf32, #tpu.memory_space<vmem>>, vector<1x1x128xf32>
    %332 = vector.broadcast %331 : vector<1x1x128xf32> to vector<4x4x128xf32>
    %333 = arith.addf %330, %332 : vector<4x4x128xf32>
    %c0_188 = arith.constant 0 : index
    %c0_189 = arith.constant 0 : index
    %c0_190 = arith.constant 0 : index
    %334 = vector.load %arg18[%c0_188, %c0_189, %c0_190] : memref<4x4x128xf32, #tpu.memory_space<vmem>>, vector<4x4x128xf32>
    tpu.vector_store %arg18[%c0_188, %c0_189, %c0_190], %333 {strides = array<i32>} : memref<4x4x128xf32, #tpu.memory_space<vmem>>, vector<4x4x128xf32>,
    return
  }
  func.func @transform_0(%arg0: i32) -> (i32, i32, i32) {
    %c0_i32 = arith.constant 0 : i32
    %c0_i32_0 = arith.constant 0 : i32
    %c0_i32_1 = arith.constant 0 : i32
    return %arg0, %c0_i32, %c0_i32_0 : i32, i32, i32
  }
  func.func @transform_1(%arg0: i32) -> (i32, i32, i32) {
    %c0_i32 = arith.constant 0 : i32
    %c0_i32_0 = arith.constant 0 : i32
    %c0_i32_1 = arith.constant 0 : i32
    %c0_i32_2 = arith.constant 0 : i32
    return %c0_i32, %c0_i32_0, %c0_i32_1 : i32, i32, i32
  }
  func.func @transform_2(%arg0: i32) -> (i32, i32, i32) {
    %c0_i32 = arith.constant 0 : i32
    %c0_i32_0 = arith.constant 0 : i32
    %c0_i32_1 = arith.constant 0 : i32
    %c0_i32_2 = arith.constant 0 : i32
    return %c0_i32, %c0_i32_0, %c0_i32_1 : i32, i32, i32
  }
  func.func @transform_3(%arg0: i32) -> (i32, i32, i32) {
    %c0_i32 = arith.constant 0 : i32
    %c0_i32_0 = arith.constant 0 : i32
    %c0_i32_1 = arith.constant 0 : i32
    %c0_i32_2 = arith.constant 0 : i32
    return %c0_i32, %c0_i32_0, %c0_i32_1 : i32, i32, i32
  }
  func.func @transform_4(%arg0: i32) -> (i32, i32, i32) {
    %c0_i32 = arith.constant 0 : i32
    %c0_i32_0 = arith.constant 0 : i32
    %c0_i32_1 = arith.constant 0 : i32
    %c0_i32_2 = arith.constant 0 : i32
    return %c0_i32, %c0_i32_0, %c0_i32_1 : i32, i32, i32
  }
  func.func @transform_5(%arg0: i32) -> (i32, i32, i32) {
    %c0_i32 = arith.constant 0 : i32
    %c0_i32_0 = arith.constant 0 : i32
    %c0_i32_1 = arith.constant 0 : i32
    %c0_i32_2 = arith.constant 0 : i32
    return %c0_i32, %c0_i32_0, %c0_i32_1 : i32, i32, i32
  }
  func.func @transform_6(%arg0: i32) -> (i32, i32, i32) {
    %c0_i32 = arith.constant 0 : i32
    %c0_i32_0 = arith.constant 0 : i32
    %c0_i32_1 = arith.constant 0 : i32
    %c0_i32_2 = arith.constant 0 : i32
    return %c0_i32, %c0_i32_0, %c0_i32_1 : i32, i32, i32
  }
  func.func @transform_7(%arg0: i32) -> (i32, i32, i32) {
    %c0_i32 = arith.constant 0 : i32
    %c0_i32_0 = arith.constant 0 : i32
    %c0_i32_1 = arith.constant 0 : i32
    %c0_i32_2 = arith.constant 0 : i32
    return %c0_i32, %c0_i32_0, %c0_i32_1 : i32, i32, i32
  }
  func.func @transform_8(%arg0: i32) -> (i32, i32, i32) {
    %c0_i32 = arith.constant 0 : i32
    %c0_i32_0 = arith.constant 0 : i32
    %c0_i32_1 = arith.constant 0 : i32
    %c0_i32_2 = arith.constant 0 : i32
    return %c0_i32, %c0_i32_0, %c0_i32_1 : i32, i32, i32
  }
  func.func @transform_9(%arg0: i32) -> (i32, i32, i32) {
    %c0_i32 = arith.constant 0 : i32
    %c0_i32_0 = arith.constant 0 : i32
    %c0_i32_1 = arith.constant 0 : i32
    %c0_i32_2 = arith.constant 0 : i32
    return %c0_i32, %c0_i32_0, %c0_i32_1 : i32, i32, i32
  }
  func.func @transform_10(%arg0: i32) -> (i32, i32, i32) {
    %c0_i32 = arith.constant 0 : i32
    %c0_i32_0 = arith.constant 0 : i32
    %c0_i32_1 = arith.constant 0 : i32
    %c0_i32_2 = arith.constant 0 : i32
    return %c0_i32, %c0_i32_0, %c0_i32_1 : i32, i32, i32
  }
  func.func @transform_11(%arg0: i32) -> (i32, i32, i32) {
    %c0_i32 = arith.constant 0 : i32
    %c0_i32_0 = arith.constant 0 : i32
    %c0_i32_1 = arith.constant 0 : i32
    %c0_i32_2 = arith.constant 0 : i32
    return %c0_i32, %c0_i32_0, %c0_i32_1 : i32, i32, i32
  }
  func.func @transform_12(%arg0: i32) -> (i32, i32, i32) {
    %c0_i32 = arith.constant 0 : i32
    %c0_i32_0 = arith.constant 0 : i32
    %c0_i32_1 = arith.constant 0 : i32
    %c0_i32_2 = arith.constant 0 : i32
    return %c0_i32, %c0_i32_0, %c0_i32_1 : i32, i32, i32
  }
  func.func @transform_13(%arg0: i32) -> (i32, i32, i32) {
    %c0_i32 = arith.constant 0 : i32
    %c0_i32_0 = arith.constant 0 : i32
    %c0_i32_1 = arith.constant 0 : i32
    return %arg0, %c0_i32, %c0_i32_0 : i32, i32, i32
  }
  func.func @transform_14(%arg0: i32) -> (i32, i32, i32) {
    %c0_i32 = arith.constant 0 : i32
    %c0_i32_0 = arith.constant 0 : i32
    %c0_i32_1 = arith.constant 0 : i32
    return %arg0, %c0_i32, %c0_i32_0 : i32, i32, i32
  }
  func.func @transform_15(%arg0: i32) -> (i32, i32, i32) {
    %c0_i32 = arith.constant 0 : i32
    %c0_i32_0 = arith.constant 0 : i32
    %c0_i32_1 = arith.constant 0 : i32
    return %arg0, %c0_i32, %c0_i32_0 : i32, i32, i32
  }
  func.func @transform_16(%arg0: i32) -> (i32, i32, i32) {
    %c0_i32 = arith.constant 0 : i32
    %c0_i32_0 = arith.constant 0 : i32
    %c0_i32_1 = arith.constant 0 : i32
    return %arg0, %c0_i32, %c0_i32_0 : i32, i32, i32
  }
  func.func @transform_17(%arg0: i32) -> (i32, i32, i32) {
    %c0_i32 = arith.constant 0 : i32
    %c0_i32_0 = arith.constant 0 : i32
    %c0_i32_1 = arith.constant 0 : i32
    return %arg0, %c0_i32, %c0_i32_0 : i32, i32, i32
  }
}

</mosaic_0001>

<llo_original>
// kernel: resnet_forward.1
$region0: #{resnet_forward.1}
  #allocation0 [shape = 'u32[]', space=smem, size = 0x4, offset = 0x4, fixed_abs, tag = 'smem constant byte address 0x4 - core index']
  #allocation1 [shape = 'u32[144,128]{1,0:T(1,128)}', space=vmem, size = 0x12000, scoped, tag = 'internal scratch']
  %s0 = inlined_call_operand.vmem [shape: f32[64,32,12], index: 0, kind: input, shape index: {}]
  %s1 = inlined_call_operand.vmem [shape: bf16[4,12,32], index: 1, kind: input, shape index: {}]
  %s2 = inlined_call_operand.vmem [shape: f32[1,1,32], index: 2, kind: input, shape index: {}]
  %s3 = inlined_call_operand.vmem [shape: f32[1,1,32], index: 3, kind: input, shape index: {}]
  %s4 = inlined_call_operand.vmem [shape: f32[1,1,32], index: 4, kind: input, shape index: {}]
  %s5 = inlined_call_operand.vmem [shape: bf16[4,32,64], index: 5, kind: input, shape index: {}]
  %s6 = inlined_call_operand.vmem [shape: f32[1,1,64], index: 6, kind: input, shape index: {}]
  %s7 = inlined_call_operand.vmem [shape: bf16[4,64,128], index: 7, kind: input, shape index: {}]
  %s8 = inlined_call_operand.vmem [shape: f32[1,1,128], index: 8, kind: input, shape index: {}]
  %s9 = inlined_call_operand.vmem [shape: bf16[4,128,256], index: 9, kind: input, shape index: {}]
  %s10 = inlined_call_operand.vmem [shape: f32[1,1,256], index: 10, kind: input, shape index: {}]
  %s11 = inlined_call_operand.vmem [shape: bf16[4,64,128], index: 11, kind: input, shape index: {}]
  %s12 = inlined_call_operand.vmem [shape: f32[1,1,128], index: 12, kind: input, shape index: {}]
  %s13 = inlined_call_operand.hbm [shape: f32[32,16,32], index: 13, kind: output, shape index: {0}]
  %s14 = inlined_call_operand.vmem [shape: f32[16,8,64], index: 14, kind: output, shape index: {1}]
  %s15 = inlined_call_operand.hbm [shape: f32[8,4,128], index: 15, kind: output, shape index: {2}]
  %s16 = inlined_call_operand.hbm [shape: f32[4,2,256], index: 16, kind: output, shape index: {3}]
  %s17 = inlined_call_operand.hbm [shape: f32[8,4,128], index: 17, kind: output, shape index: {4}]
  %18 = xla_tuple %s13, %s14, %s15, %s16, %s17
  %s19 = sld [smem:[#allocation0]]
  $region117: #{resnet_forward.1} parent=0
    _
  %s21 = ssub.s32 1, %s19
  %s22 = scalar_select 0, %s21, %s19
  $region1: #{resnet_forward.1} parent=0
    #allocation2 [shape = 'u8[262144]{0}', space=vmem, size = 0x40000, scoped, tag = 'output window, operand 0']
    #allocation3 [shape = 's32[2]{0}', space=sflag, size = 0x8, scoped, tag = 'scoped memory for resnet_forward.1']
    #allocation4 [shape = 'u8[16384]{0}', space=vmem, size = 0x4000, scoped, tag = 'output window, operand 2']
    #allocation5 [shape = 's32[2]{0}', space=sflag, size = 0x8, scoped, tag = 'scoped memory for resnet_forward.1']
    #allocation6 [shape = 'u8[8192]{0}', space=vmem, size = 0x2000, scoped, tag = 'output window, operand 3']
    #allocation7 [shape = 'u8[16384]{0}', space=vmem, size = 0x4000, scoped, tag = 'output window, operand 4']
    #allocation8 [shape = 's32[2]{0}', space=sflag, size = 0x8, scoped, tag = 'scoped memory for resnet_forward.1']
    %23 = vsyncpa [#allocation3], 0
    %s24 = scalar_lea.sflag [#allocation3], 1
    %25 = vsyncpa %s24, 0
    %26 = vsyncpa [#allocation5], 0
    %s27 = scalar_lea.sflag [#allocation5], 1
    %28 = vsyncpa %s27, 0
    %29 = vsyncpa [#allocation8], 0
    %s30 = scalar_lea.sflag [#allocation8], 1
    %31 = vsyncpa %s30, 0
    loop: start=0, step=1, limit=4
    $region2: #{resnet_forward.1} parent=1 // loop_pre_header
      _
    $region3: #{resnet_forward.1} parent=1 // loop_header
      %s33 = sphi 0, %s37
      %p34 = scmp.ge.s32.totalorder %s33, 4
      %s43 = sphi 0, %s45
      %s46 = sphi 0, %s43
      %s47 = sphi 0, %s46
      %s63 = sphi 0, %s47
      %s67 = sphi 0, %s67
      %s69 = sphi 0, %s67
      %s70 = sphi 0, %s69
      %s84 = sphi 0, %s70
      %s88 = sphi 0, %s88
      %s90 = sphi 0, %s88
      %s91 = sphi 0, %s90
      %s105 = sphi 0, %s91
      %s109 = sphi 0, %s109
      %s111 = sphi 0, %s109
      %s112 = sphi 0, %s111
      %s126 = sphi 0, %s112
      %s130 = sphi 0, %s130
      %s132 = sphi 0, %s130
      %s133 = sphi 0, %s132
      %s147 = sphi 0, %s133
      %s151 = sphi 0, %s151
      %s153 = sphi 0, %s151
      %s154 = sphi 0, %s153
      %s168 = sphi 0, %s154
      %s172 = sphi 0, %s172
      %s174 = sphi 0, %s172
      %s175 = sphi 0, %s174
      %s189 = sphi 0, %s175
      %s193 = sphi 0, %s193
      %s195 = sphi 0, %s193
      %s196 = sphi 0, %s195
      %s210 = sphi 0, %s196
      %s214 = sphi 0, %s214
      %s216 = sphi 0, %s214
      %s217 = sphi 0, %s216
      %s231 = sphi 0, %s217
      %s235 = sphi 0, %s235
      %s237 = sphi 0, %s235
      %s238 = sphi 0, %s237
      %s252 = sphi 0, %s238
      %s256 = sphi 0, %s256
      %s258 = sphi 0, %s256
      %s259 = sphi 0, %s258
      %s273 = sphi 0, %s259
      %s277 = sphi 0, %s277
      %s279 = sphi 0, %s277
      %s280 = sphi 0, %s279
      %s294 = sphi 0, %s280
      %s298 = sphi 0, %s298
      %s300 = sphi 0, %s298
      %s301 = sphi 0, %s300
      %s315 = sphi 0, %s301
      %s321 = sphi 0, %s323
      %s324 = sphi 0, %s321
      %s325 = sphi 0, %s324
      %s341 = sphi 0, %s325
      %s347 = sphi 0, %s349
      %s350 = sphi 0, %s347
      %s351 = sphi 0, %s350
      %s367 = sphi 0, %s351
      %s373 = sphi 0, %s375
      %s376 = sphi 0, %s373
      %s377 = sphi 0, %s376
      %s393 = sphi 0, %s377
      %s399 = sphi 0, %s401
      %s402 = sphi 0, %s399
      %s403 = sphi 0, %s402
      %s419 = sphi 0, %s403
      %s425 = sphi 0, %s427
      %s428 = sphi 0, %s425
      %s429 = sphi 0, %s428
      %s445 = sphi 0, %s429
    $region4: #{resnet_forward.1} parent=1 // loop_header_branch
      %36 = sbr.rel (%p34) target = $region8
    $region5: #{resnet_forward.1} parent=1 // loop_body
      %s38 = ssub.s32 %s33, 1
      %s39 = ssub.s32 %s33, 2
      %s40 = sadd.s32 %s33, 1
      %s41 = ssub.s32 %s33, %s40
      %p42 = scmp.eq.s32.totalorder %s41, 0
      %s44 = sadd.s32 %s43, 1
      %s45 = scalar_select %p42, %s43, %s44
      %p48 = pneg %p42
      %p49 = scmp.eq.s32.totalorder %s33, 1
      %p50 = por %p48, %p49
      %p51 = scmp.ne.s32.totalorder %s43, %s46
      %p52 = scmp.eq.s32.totalorder %s33, 0
      %p53 = por %p51, %p52
      %p54 = scmp.ne.s32.totalorder %s43, %s46
      %p55 = scmp.eq.s32.totalorder %s38, 1
      %p56 = por %p54, %p55
      %p57 = scmp.ne.s32.totalorder %s46, %s47
      %p58 = scmp.eq.s32.totalorder %s38, 0
      %p59 = por %p57, %p58
      %p60 = scmp.ne.s32.totalorder %s46, %s47
      %p61 = scmp.eq.s32.totalorder %s39, 1
      %p62 = por %p60, %p61
      %p64 = scmp.ne.s32.totalorder %s47, %s63
      %p65 = scmp.eq.s32.totalorder %s39, 0
      %p66 = por %p64, %p65
      %s68 = sadd.s32 %s67, 1
      %p71 = scmp.eq.s32.totalorder %s33, 1
      %p72 = scmp.ne.s32.totalorder %s67, %s69
      %p73 = scmp.eq.s32.totalorder %s33, 0
      %p74 = por %p72, %p73
      %p75 = scmp.ne.s32.totalorder %s67, %s69
      %p76 = scmp.eq.s32.totalorder %s38, 1
      %p77 = por %p75, %p76
      %p78 = scmp.ne.s32.totalorder %s69, %s70
      %p79 = scmp.eq.s32.totalorder %s38, 0
      %p80 = por %p78, %p79
      %p81 = scmp.ne.s32.totalorder %s69, %s70
      %p82 = scmp.eq.s32.totalorder %s39, 1
      %p83 = por %p81, %p82
      %p85 = scmp.ne.s32.totalorder %s70, %s84
      %p86 = scmp.eq.s32.totalorder %s39, 0
      %p87 = por %p85, %p86
      %s89 = sadd.s32 %s88, 1
      %p92 = scmp.eq.s32.totalorder %s33, 1
      %p93 = scmp.ne.s32.totalorder %s88, %s90
      %p94 = scmp.eq.s32.totalorder %s33, 0
      %p95 = por %p93, %p94
      %p96 = scmp.ne.s32.totalorder %s88, %s90
      %p97 = scmp.eq.s32.totalorder %s38, 1
      %p98 = por %p96, %p97
      %p99 = scmp.ne.s32.totalorder %s90, %s91
      %p100 = scmp.eq.s32.totalorder %s38, 0
      %p101 = por %p99, %p100
      %p102 = scmp.ne.s32.totalorder %s90, %s91
      %p103 = scmp.eq.s32.totalorder %s39, 1
      %p104 = por %p102, %p103
      %p106 = scmp.ne.s32.totalorder %s91, %s105
      %p107 = scmp.eq.s32.totalorder %s39, 0
      %p108 = por %p106, %p107
      %s110 = sadd.s32 %s109, 1
      %p113 = scmp.eq.s32.totalorder %s33, 1
      %p114 = scmp.ne.s32.totalorder %s109, %s111
      %p115 = scmp.eq.s32.totalorder %s33, 0
      %p116 = por %p114, %p115
      %p117 = scmp.ne.s32.totalorder %s109, %s111
      %p118 = scmp.eq.s32.totalorder %s38, 1
      %p119 = por %p117, %p118
      %p120 = scmp.ne.s32.totalorder %s111, %s112
      %p121 = scmp.eq.s32.totalorder %s38, 0
      %p122 = por %p120, %p121
      %p123 = scmp.ne.s32.totalorder %s111, %s112
      %p124 = scmp.eq.s32.totalorder %s39, 1
      %p125 = por %p123, %p124
      %p127 = scmp.ne.s32.totalorder %s112, %s126
      %p128 = scmp.eq.s32.totalorder %s39, 0
      %p129 = por %p127, %p128
      %s131 = sadd.s32 %s130, 1
      %p134 = scmp.eq.s32.totalorder %s33, 1
      %p135 = scmp.ne.s32.totalorder %s130, %s132
      %p136 = scmp.eq.s32.totalorder %s33, 0
      %p137 = por %p135, %p136
      %p138 = scmp.ne.s32.totalorder %s130, %s132
      %p139 = scmp.eq.s32.totalorder %s38, 1
      %p140 = por %p138, %p139
      %p141 = scmp.ne.s32.totalorder %s132, %s133
      %p142 = scmp.eq.s32.totalorder %s38, 0
      %p143 = por %p141, %p142
      %p144 = scmp.ne.s32.totalorder %s132, %s133
      %p145 = scmp.eq.s32.totalorder %s39, 1
      %p146 = por %p144, %p145
      %p148 = scmp.ne.s32.totalorder %s133, %s147
      %p149 = scmp.eq.s32.totalorder %s39, 0
      %p150 = por %p148, %p149
      %s152 = sadd.s32 %s151, 1
      %p155 = scmp.eq.s32.totalorder %s33, 1
      %p156 = scmp.ne.s32.totalorder %s151, %s153
      %p157 = scmp.eq.s32.totalorder %s33, 0
      %p158 = por %p156, %p157
      %p159 = scmp.ne.s32.totalorder %s151, %s153
      %p160 = scmp.eq.s32.totalorder %s38, 1
      %p161 = por %p159, %p160
      %p162 = scmp.ne.s32.totalorder %s153, %s154
      %p163 = scmp.eq.s32.totalorder %s38, 0
      %p164 = por %p162, %p163
      %p165 = scmp.ne.s32.totalorder %s153, %s154
      %p166 = scmp.eq.s32.totalorder %s39, 1
      %p167 = por %p165, %p166
      %p169 = scmp.ne.s32.totalorder %s154, %s168
      %p170 = scmp.eq.s32.totalorder %s39, 0
      %p171 = por %p169, %p170
      %s173 = sadd.s32 %s172, 1
      %p176 = scmp.eq.s32.totalorder %s33, 1
      %p177 = scmp.ne.s32.totalorder %s172, %s174
      %p178 = scmp.eq.s32.totalorder %s33, 0
      %p179 = por %p177, %p178
      %p180 = scmp.ne.s32.totalorder %s172, %s174
      %p181 = scmp.eq.s32.totalorder %s38, 1
      %p182 = por %p180, %p181
      %p183 = scmp.ne.s32.totalorder %s174, %s175
      %p184 = scmp.eq.s32.totalorder %s38, 0
      %p185 = por %p183, %p184
      %p186 = scmp.ne.s32.totalorder %s174, %s175
      %p187 = scmp.eq.s32.totalorder %s39, 1
      %p188 = por %p186, %p187
      %p190 = scmp.ne.s32.totalorder %s175, %s189
      %p191 = scmp.eq.s32.totalorder %s39, 0
      %p192 = por %p190, %p191
      %s194 = sadd.s32 %s193, 1
      %p197 = scmp.eq.s32.totalorder %s33, 1
      %p198 = scmp.ne.s32.totalorder %s193, %s195
      %p199 = scmp.eq.s32.totalorder %s33, 0
      %p200 = por %p198, %p199
      %p201 = scmp.ne.s32.totalorder %s193, %s195
      %p202 = scmp.eq.s32.totalorder %s38, 1
      %p203 = por %p201, %p202
      %p204 = scmp.ne.s32.totalorder %s195, %s196
      %p205 = scmp.eq.s32.totalorder %s38, 0
      %p206 = por %p204, %p205
      %p207 = scmp.ne.s32.totalorder %s195, %s196
      %p208 = scmp.eq.s32.totalorder %s39, 1
      %p209 = por %p207, %p208
      %p211 = scmp.ne.s32.totalorder %s196, %s210
      %p212 = scmp.eq.s32.totalorder %s39, 0
      %p213 = por %p211, %p212
      %s215 = sadd.s32 %s214, 1
      %p218 = scmp.eq.s32.totalorder %s33, 1
      %p219 = scmp.ne.s32.totalorder %s214, %s216
      %p220 = scmp.eq.s32.totalorder %s33, 0
      %p221 = por %p219, %p220
      %p222 = scmp.ne.s32.totalorder %s214, %s216
      %p223 = scmp.eq.s32.totalorder %s38, 1
      %p224 = por %p222, %p223
      %p225 = scmp.ne.s32.totalorder %s216, %s217
      %p226 = scmp.eq.s32.totalorder %s38, 0
      %p227 = por %p225, %p226
      %p228 = scmp.ne.s32.totalorder %s216, %s217
      %p229 = scmp.eq.s32.totalorder %s39, 1
      %p230 = por %p228, %p229
      %p232 = scmp.ne.s32.totalorder %s217, %s231
      %p233 = scmp.eq.s32.totalorder %s39, 0
      %p234 = por %p232, %p233
      %s236 = sadd.s32 %s235, 1
      %p239 = scmp.eq.s32.totalorder %s33, 1
      %p240 = scmp.ne.s32.totalorder %s235, %s237
      %p241 = scmp.eq.s32.totalorder %s33, 0
      %p242 = por %p240, %p241
      %p243 = scmp.ne.s32.totalorder %s235, %s237
      %p244 = scmp.eq.s32.totalorder %s38, 1
      %p245 = por %p243, %p244
      %p246 = scmp.ne.s32.totalorder %s237, %s238
      %p247 = scmp.eq.s32.totalorder %s38, 0
      %p248 = por %p246, %p247
      %p249 = scmp.ne.s32.totalorder %s237, %s238
      %p250 = scmp.eq.s32.totalorder %s39, 1
      %p251 = por %p249, %p250
      %p253 = scmp.ne.s32.totalorder %s238, %s252
      %p254 = scmp.eq.s32.totalorder %s39, 0
      %p255 = por %p253, %p254
      %s257 = sadd.s32 %s256, 1
      %p260 = scmp.eq.s32.totalorder %s33, 1
      %p261 = scmp.ne.s32.totalorder %s256, %s258
      %p262 = scmp.eq.s32.totalorder %s33, 0
      %p263 = por %p261, %p262
      %p264 = scmp.ne.s32.totalorder %s256, %s258
      %p265 = scmp.eq.s32.totalorder %s38, 1
      %p266 = por %p264, %p265
      %p267 = scmp.ne.s32.totalorder %s258, %s259
      %p268 = scmp.eq.s32.totalorder %s38, 0
      %p269 = por %p267, %p268
      %p270 = scmp.ne.s32.totalorder %s258, %s259
      %p271 = scmp.eq.s32.totalorder %s39, 1
      %p272 = por %p270, %p271
      %p274 = scmp.ne.s32.totalorder %s259, %s273
      %p275 = scmp.eq.s32.totalorder %s39, 0
      %p276 = por %p274, %p275
      %s278 = sadd.s32 %s277, 1
      %p281 = scmp.eq.s32.totalorder %s33, 1
      %p282 = scmp.ne.s32.totalorder %s277, %s279
      %p283 = scmp.eq.s32.totalorder %s33, 0
      %p284 = por %p282, %p283
      %p285 = scmp.ne.s32.totalorder %s277, %s279
      %p286 = scmp.eq.s32.totalorder %s38, 1
      %p287 = por %p285, %p286
      %p288 = scmp.ne.s32.totalorder %s279, %s280
      %p289 = scmp.eq.s32.totalorder %s38, 0
      %p290 = por %p288, %p289
      %p291 = scmp.ne.s32.totalorder %s279, %s280
      %p292 = scmp.eq.s32.totalorder %s39, 1
      %p293 = por %p291, %p292
      %p295 = scmp.ne.s32.totalorder %s280, %s294
      %p296 = scmp.eq.s32.totalorder %s39, 0
      %p297 = por %p295, %p296
      %s299 = sadd.s32 %s298, 1
      %p302 = scmp.eq.s32.totalorder %s33, 1
      %p303 = scmp.ne.s32.totalorder %s298, %s300
      %p304 = scmp.eq.s32.totalorder %s33, 0
      %p305 = por %p303, %p304
      %p306 = scmp.ne.s32.totalorder %s298, %s300
      %p307 = scmp.eq.s32.totalorder %s38, 1
      %p308 = por %p306, %p307
      %p309 = scmp.ne.s32.totalorder %s300, %s301
      %p310 = scmp.eq.s32.totalorder %s38, 0
      %p311 = por %p309, %p310
      %p312 = scmp.ne.s32.totalorder %s300, %s301
      %p313 = scmp.eq.s32.totalorder %s39, 1
      %p314 = por %p312, %p313
      %p316 = scmp.ne.s32.totalorder %s301, %s315
      %p317 = scmp.eq.s32.totalorder %s39, 0
      %p318 = por %p316, %p317
      %s319 = ssub.s32 %s33, %s40
      %p320 = scmp.eq.s32.totalorder %s319, 0
      %s322 = sadd.s32 %s321, 1
      %s323 = scalar_select %p320, %s321, %s322
      %p326 = pneg %p320
      %p327 = scmp.eq.s32.totalorder %s33, 1
      %p328 = por %p326, %p327
      %p329 = scmp.ne.s32.totalorder %s321, %s324
      %p330 = scmp.eq.s32.totalorder %s33, 0
      %p331 = por %p329, %p330
      %p332 = scmp.ne.s32.totalorder %s321, %s324
      %p333 = scmp.eq.s32.totalorder %s38, 1
      %p334 = por %p332, %p333
      %p335 = scmp.ne.s32.totalorder %s324, %s325
      %p336 = scmp.eq.s32.totalorder %s38, 0
      %p337 = por %p335, %p336
      %p338 = scmp.ne.s32.totalorder %s324, %s325
      %p339 = scmp.eq.s32.totalorder %s39, 1
      %p340 = por %p338, %p339
      %p342 = scmp.ne.s32.totalorder %s325, %s341
      %p343 = scmp.eq.s32.totalorder %s39, 0
      %p344 = por %p342, %p343
      %s345 = ssub.s32 %s33, %s40
      %p346 = scmp.eq.s32.totalorder %s345, 0
      %s348 = sadd.s32 %s347, 1
      %s349 = scalar_select %p346, %s347, %s348
      %p352 = pneg %p346
      %p353 = scmp.eq.s32.totalorder %s33, 1
      %p354 = por %p352, %p353
      %p355 = scmp.ne.s32.totalorder %s347, %s350
      %p356 = scmp.eq.s32.totalorder %s33, 0
      %p357 = por %p355, %p356
      %p358 = scmp.ne.s32.totalorder %s347, %s350
      %p359 = scmp.eq.s32.totalorder %s38, 1
      %p360 = por %p358, %p359
      %p361 = scmp.ne.s32.totalorder %s350, %s351
      %p362 = scmp.eq.s32.totalorder %s38, 0
      %p363 = por %p361, %p362
      %p364 = scmp.ne.s32.totalorder %s350, %s351
      %p365 = scmp.eq.s32.totalorder %s39, 1
      %p366 = por %p364, %p365
      %p368 = scmp.ne.s32.totalorder %s351, %s367
      %p369 = scmp.eq.s32.totalorder %s39, 0
      %p370 = por %p368, %p369
      %s371 = ssub.s32 %s33, %s40
      %p372 = scmp.eq.s32.totalorder %s371, 0
      %s374 = sadd.s32 %s373, 1
      %s375 = scalar_select %p372, %s373, %s374
      %p378 = pneg %p372
      %p379 = scmp.eq.s32.totalorder %s33, 1
      %p380 = por %p378, %p379
      %p381 = scmp.ne.s32.totalorder %s373, %s376
      %p382 = scmp.eq.s32.totalorder %s33, 0
      %p383 = por %p381, %p382
      %p384 = scmp.ne.s32.totalorder %s373, %s376
      %p385 = scmp.eq.s32.totalorder %s38, 1
      %p386 = por %p384, %p385
      %p387 = scmp.ne.s32.totalorder %s376, %s377
      %p388 = scmp.eq.s32.totalorder %s38, 0
      %p389 = por %p387, %p388
      %p390 = scmp.ne.s32.totalorder %s376, %s377
      %p391 = scmp.eq.s32.totalorder %s39, 1
      %p392 = por %p390, %p391
      %p394 = scmp.ne.s32.totalorder %s377, %s393
      %p395 = scmp.eq.s32.totalorder %s39, 0
      %p396 = por %p394, %p395
      %s397 = ssub.s32 %s33, %s40
      %p398 = scmp.eq.s32.totalorder %s397, 0
      %s400 = sadd.s32 %s399, 1
      %s401 = scalar_select %p398, %s399, %s400
      %p404 = pneg %p398
      %p405 = scmp.eq.s32.totalorder %s33, 1
      %p406 = por %p404, %p405
      %p407 = scmp.ne.s32.totalorder %s399, %s402
      %p408 = scmp.eq.s32.totalorder %s33, 0
      %p409 = por %p407, %p408
      %p410 = scmp.ne.s32.totalorder %s399, %s402
      %p411 = scmp.eq.s32.totalorder %s38, 1
      %p412 = por %p410, %p411
      %p413 = scmp.ne.s32.totalorder %s402, %s403
      %p414 = scmp.eq.s32.totalorder %s38, 0
      %p415 = por %p413, %p414
      %p416 = scmp.ne.s32.totalorder %s402, %s403
      %p417 = scmp.eq.s32.totalorder %s39, 1
      %p418 = por %p416, %p417
      %p420 = scmp.ne.s32.totalorder %s403, %s419
      %p421 = scmp.eq.s32.totalorder %s39, 0
      %p422 = por %p420, %p421
      %s423 = ssub.s32 %s33, %s40
      %p424 = scmp.eq.s32.totalorder %s423, 0
      %s426 = sadd.s32 %s425, 1
      %s427 = scalar_select %p424, %s425, %s426
      %p430 = pneg %p424
      %p431 = scmp.eq.s32.totalorder %s33, 1
      %p432 = por %p430, %p431
      %p433 = scmp.ne.s32.totalorder %s425, %s428
      %p434 = scmp.eq.s32.totalorder %s33, 0
      %p435 = por %p433, %p434
      %p436 = scmp.ne.s32.totalorder %s425, %s428
      %p437 = scmp.eq.s32.totalorder %s38, 1
      %p438 = por %p436, %p437
      %p439 = scmp.ne.s32.totalorder %s428, %s429
      %p440 = scmp.eq.s32.totalorder %s38, 0
      %p441 = por %p439, %p440
      %p442 = scmp.ne.s32.totalorder %s428, %s429
      %p443 = scmp.eq.s32.totalorder %s39, 1
      %p444 = por %p442, %p443
      %p446 = scmp.ne.s32.totalorder %s429, %s445
      %p447 = scmp.eq.s32.totalorder %s39, 0
      %p448 = por %p446, %p447
      %p449 = scmp.le.s32.totalorder 1, %s33
      %p450 = scmp.lt.s32.totalorder %s33, 3
      %p451 = pnand %p449, %p450
      %p452 = pneg %p451
      // Predicated region
      $region9: #{resnet_forward.1} parent=5 // pred_check
        _
      $region10: #{resnet_forward.1} parent=5 // pred_check_branch
        %454 = sbr.rel (%p451) target = $region12
      $region11: #{resnet_forward.1} parent=5 // pred_region
        %s455 = ssub.s32 %s33, 1
        // Predicated region
        $region13: #{resnet_forward.1} parent=11 // pred_check
          %p456 = pneg %p80
        $region14: #{resnet_forward.1} parent=11 // pred_check_branch
          %458 = sbr.rel (%p456) target = $region16
        $region15: #{resnet_forward.1} parent=11 // pred_region
          _
        $region16: #{resnet_forward.1} parent=11 // pred_fallthru
          _
        // Predicated region
        $region17: #{resnet_forward.1} parent=11 // pred_check
          %p459 = pneg %p101
        $region18: #{resnet_forward.1} parent=11 // pred_check_branch
          %461 = sbr.rel (%p459) target = $region20
        $region19: #{resnet_forward.1} parent=11 // pred_region
          _
        $region20: #{resnet_forward.1} parent=11 // pred_fallthru
          _
        // Predicated region
        $region21: #{resnet_forward.1} parent=11 // pred_check
          %p462 = pneg %p122
        $region22: #{resnet_forward.1} parent=11 // pred_check_branch
          %464 = sbr.rel (%p462) target = $region24
        $region23: #{resnet_forward.1} parent=11 // pred_region
          _
        $region24: #{resnet_forward.1} parent=11 // pred_fallthru
          _
        // Predicated region
        $region25: #{resnet_forward.1} parent=11 // pred_check
          %p465 = pneg %p143
        $region26: #{resnet_forward.1} parent=11 // pred_check_branch
          %467 = sbr.rel (%p465) target = $region28
        $region27: #{resnet_forward.1} parent=11 // pred_region
          _
        $region28: #{resnet_forward.1} parent=11 // pred_fallthru
          _
        // Predicated region
        $region29: #{resnet_forward.1} parent=11 // pred_check
          %p468 = pneg %p164
        $region30: #{resnet_forward.1} parent=11 // pred_check_branch
          %470 = sbr.rel (%p468) target = $region32
        $region31: #{resnet_forward.1} parent=11 // pred_region
          _
        $region32: #{resnet_forward.1} parent=11 // pred_fallthru
          _
        // Predicated region
        $region33: #{resnet_forward.1} parent=11 // pred_check
          %p471 = pneg %p185
        $region34: #{resnet_forward.1} parent=11 // pred_check_branch
          %473 = sbr.rel (%p471) target = $region36
        $region35: #{resnet_forward.1} parent=11 // pred_region
          _
        $region36: #{resnet_forward.1} parent=11 // pred_fallthru
          _
        // Predicated region
        $region37: #{resnet_forward.1} parent=11 // pred_check
          %p474 = pneg %p206
        $region38: #{resnet_forward.1} parent=11 // pred_check_branch
          %476 = sbr.rel (%p474) target = $region40
        $region39: #{resnet_forward.1} parent=11 // pred_region
          _
        $region40: #{resnet_forward.1} parent=11 // pred_fallthru
          _
        // Predicated region
        $region41: #{resnet_forward.1} parent=11 // pred_check
          %p477 = pneg %p227
        $region42: #{resnet_forward.1} parent=11 // pred_check_branch
          %479 = sbr.rel (%p477) target = $region44
        $region43: #{resnet_forward.1} parent=11 // pred_region
          _
        $region44: #{resnet_forward.1} parent=11 // pred_fallthru
          _
        // Predicated region
        $region45: #{resnet_forward.1} parent=11 // pred_check
          %p480 = pneg %p248
        $region46: #{resnet_forward.1} parent=11 // pred_check_branch
          %482 = sbr.rel (%p480) target = $region48
        $region47: #{resnet_forward.1} parent=11 // pred_region
          _
        $region48: #{resnet_forward.1} parent=11 // pred_fallthru
          _
        // Predicated region
        $region49: #{resnet_forward.1} parent=11 // pred_check
          %p483 = pneg %p269
        $region50: #{resnet_forward.1} parent=11 // pred_check_branch
          %485 = sbr.rel (%p483) target = $region52
        $region51: #{resnet_forward.1} parent=11 // pred_region
          _
        $region52: #{resnet_forward.1} parent=11 // pred_fallthru
          _
        // Predicated region
        $region53: #{resnet_forward.1} parent=11 // pred_check
          %p486 = pneg %p290
        $region54: #{resnet_forward.1} parent=11 // pred_check_branch
          %488 = sbr.rel (%p486) target = $region56
        $region55: #{resnet_forward.1} parent=11 // pred_region
          _
        $region56: #{resnet_forward.1} parent=11 // pred_fallthru
          _
        // Predicated region
        $region57: #{resnet_forward.1} parent=11 // pred_check
          %p489 = pneg %p311
        $region58: #{resnet_forward.1} parent=11 // pred_check_branch
          %491 = sbr.rel (%p489) target = $region60
        $region59: #{resnet_forward.1} parent=11 // pred_region
          _
        $region60: #{resnet_forward.1} parent=11 // pred_fallthru
          _
      $region12: #{resnet_forward.1} parent=5 // pred_fallthru
        _
      %p492 = scmp.lt.s32.totalorder %s33, 2
      // Predicated region
      $region61: #{resnet_forward.1} parent=5 // pred_check
        %p493 = pneg %p492
      $region62: #{resnet_forward.1} parent=5 // pred_check_branch
        %495 = sbr.rel (%p493) target = $region64
      $region63: #{resnet_forward.1} parent=5 // pred_region
        // Predicated region
        $region65: #{resnet_forward.1} parent=63 // pred_check
          %p496 = pneg %p53
        $region66: #{resnet_forward.1} parent=63 // pred_check_branch
          %498 = sbr.rel (%p496) target = $region68
        $region67: #{resnet_forward.1} parent=63 // pred_region
          %s499 = smul.u32 32, %s33
          %p500 = scmp.lt.s32.totalorder %s499, 63
          %s501 = scalar_select %p500, %s499, 63
          %s502 = smul.addr %s501, 4
          %s503 = smul.addr %s502, 8
          %s504 = scalar_lea.vmem %s0, %s503
          %s505 = smul.u32 32, %s33
        $region68: #{resnet_forward.1} parent=63 // pred_fallthru
          _
      $region64: #{resnet_forward.1} parent=5 // pred_fallthru
        _
      %p506 = scmp.le.s32.totalorder 1, %s33
      %p507 = scmp.lt.s32.totalorder %s33, 3
      %p508 = pnand %p506, %p507
      %p509 = pneg %p508
      // Predicated region
      $region69: #{resnet_forward.1} parent=5 // pred_check
        _
      $region70: #{resnet_forward.1} parent=5 // pred_check_branch
        %511 = sbr.rel (%p508) target = $region72
      $region71: #{resnet_forward.1} parent=5 // pred_region
        %s512 = ssub.s32 %s33, 1
        %s513 = smul.u32 32, %s38
        %p514 = scmp.lt.s32.totalorder %s513, 63
        %s515 = scalar_select %p514, %s513, 63
        %s516 = smul.addr %s515, 4
        %s517 = smul.addr %s516, 8
        %s518 = scalar_lea.vmem %s0, %s517
        %p519 = pneg %p59
        %p520 = pneg %p56
        %p521 = pneg %p80
        %p522 = pneg %p77
        %p523 = pneg %p101
        %p524 = pneg %p98
        %p525 = pneg %p122
        %p526 = pneg %p119
        %p527 = pneg %p143
        %p528 = pneg %p140
        %p529 = pneg %p164
        %p530 = pneg %p161
        %p531 = pneg %p185
        %p532 = pneg %p182
        %p533 = pneg %p206
        %p534 = pneg %p203
        %p535 = pneg %p227
        %p536 = pneg %p224
        %p537 = pneg %p248
        %p538 = pneg %p245
        %p539 = pneg %p269
        %p540 = pneg %p266
        %p541 = pneg %p290
        %p542 = pneg %p287
        %p543 = pneg %p311
        %p544 = pneg %p308
        %p545 = pneg %p337
        %p546 = pneg %p334
        %s547 = sand.u32 %s324, 1
        %s548 = scalar_lea.sflag [#allocation3], %s547
        %s549 = sand.u32 %s324, 1
        %s550 = smul.addr %s549, 256
        %s551 = scalar_lea.vmem [#allocation2], %s550
        %p552 = pneg %p363
        %p553 = pneg %p360
        %s554 = smul.u32 8, %s38
        %p555 = scmp.lt.s32.totalorder %s554, 15
        %s556 = scalar_select %p555, %s554, 15
        %s557 = smul.addr %s556, 8
        %s558 = scalar_lea.vmem %s14, %s557
        %p559 = pneg %p389
        %p560 = pneg %p386
        %s561 = sand.u32 %s38, 1
        %s562 = scalar_lea.sflag [#allocation5], %s561
        %s563 = sand.u32 %s376, 1
        %s564 = smul.addr %s563, 16
        %s565 = scalar_lea.vmem [#allocation4], %s564
        %p566 = pneg %p415
        %p567 = pneg %p412
        %s568 = sand.u32 %s38, 1
        %s569 = scalar_lea.sflag [#allocation5], %s568
        %s570 = sand.u32 %s402, 1
        %s571 = smul.addr %s570, 8
        %s572 = scalar_lea.vmem [#allocation6], %s571
        %p573 = pneg %p441
        %p574 = pneg %p438
        %s575 = sand.u32 %s428, 1
        %s576 = scalar_lea.sflag [#allocation8], %s575
        %s577 = sand.u32 %s428, 1
        %s578 = smul.addr %s577, 16
        %s579 = scalar_lea.vmem [#allocation7], %s578
        %s580 = smul.u32 32, %s38
        %p581 = scmp.lt.s32.totalorder %s580, 63
        %s582 = scalar_select %p581, %s580, 63
        %s583 = smul.addr %s582, 4
        %s584 = smul.addr %s583, 8
        %s585 = scalar_lea.vmem %s0, %s584
        %s586 = smul.u32 32, %s38
        %s587 = smul.u32 16, %s38
        %s588 = smul.u32 8, %s38
        %p589 = scmp.lt.s32.totalorder %s588, 15
        %s590 = scalar_select %p589, %s588, 15
        %s591 = smul.addr %s590, 8
        %s592 = scalar_lea.vmem %s14, %s591
        %s593 = smul.u32 8, %s38
        %s594 = smul.u32 4, %s38
        %s595 = smul.u32 2, %s38
        %s596 = smul.u32 4, %s38
        %v598 = vld [vmem:[%s585] ss:$2 sm:$0xff]
        %s599 = scalar_lea.vmem %s585, 16
        %v600 = vld [vmem:[%s599] ss:$2 sm:$0xff]
        %s601 = scalar_lea.vmem %s585, 32
        %v602 = vld [vmem:[%s601] ss:$2 sm:$0xff]
        %s603 = scalar_lea.vmem %s585, 48
        %v604 = vld [vmem:[%s603] ss:$2 sm:$0xff]
        %s605 = scalar_lea.vmem %s585, 64
        %v606 = vld [vmem:[%s605] ss:$2 sm:$0xff]
        %s607 = scalar_lea.vmem %s585, 80
        %v608 = vld [vmem:[%s607] ss:$2 sm:$0xff]
        %s609 = scalar_lea.vmem %s585, 96
        %v610 = vld [vmem:[%s609] ss:$2 sm:$0xff]
        %s611 = scalar_lea.vmem %s585, 112
        %v612 = vld [vmem:[%s611] ss:$2 sm:$0xff]
        %s613 = scalar_lea.vmem %s585, 128
        %v614 = vld [vmem:[%s613] ss:$2 sm:$0xff]
        %s615 = scalar_lea.vmem %s585, 144
        %v616 = vld [vmem:[%s615] ss:$2 sm:$0xff]
        %s617 = scalar_lea.vmem %s585, 160
        %v618 = vld [vmem:[%s617] ss:$2 sm:$0xff]
        %s619 = scalar_lea.vmem %s585, 176
        %v620 = vld [vmem:[%s619] ss:$2 sm:$0xff]
        %s621 = scalar_lea.vmem %s585, 192
        %v622 = vld [vmem:[%s621] ss:$2 sm:$0xff]
        %s623 = scalar_lea.vmem %s585, 208
        %v624 = vld [vmem:[%s623] ss:$2 sm:$0xff]
        %s625 = scalar_lea.vmem %s585, 224
        %v626 = vld [vmem:[%s625] ss:$2 sm:$0xff]
        %s627 = scalar_lea.vmem %s585, 240
        %v628 = vld [vmem:[%s627] ss:$2 sm:$0xff]
        %s629 = scalar_lea.vmem %s585, 256
        %v630 = vld [vmem:[%s629] ss:$2 sm:$0xff]
        %s631 = scalar_lea.vmem %s585, 272
        %v632 = vld [vmem:[%s631] ss:$2 sm:$0xff]
        %s633 = scalar_lea.vmem %s585, 288
        %v634 = vld [vmem:[%s633] ss:$2 sm:$0xff]
        %s635 = scalar_lea.vmem %s585, 304
        %v636 = vld [vmem:[%s635] ss:$2 sm:$0xff]
        %s637 = scalar_lea.vmem %s585, 320
        %v638 = vld [vmem:[%s637] ss:$2 sm:$0xff]
        %s639 = scalar_lea.vmem %s585, 336
        %v640 = vld [vmem:[%s639] ss:$2 sm:$0xff]
        %s641 = scalar_lea.vmem %s585, 352
        %v642 = vld [vmem:[%s641] ss:$2 sm:$0xff]
        %s643 = scalar_lea.vmem %s585, 368
        %v644 = vld [vmem:[%s643] ss:$2 sm:$0xff]
        %s645 = scalar_lea.vmem %s585, 384
        %v646 = vld [vmem:[%s645] ss:$2 sm:$0xff]
        %s647 = scalar_lea.vmem %s585, 400
        %v648 = vld [vmem:[%s647] ss:$2 sm:$0xff]
        %s649 = scalar_lea.vmem %s585, 416
        %v650 = vld [vmem:[%s649] ss:$2 sm:$0xff]
        %s651 = scalar_lea.vmem %s585, 432
        %v652 = vld [vmem:[%s651] ss:$2 sm:$0xff]
        %s653 = scalar_lea.vmem %s585, 448
        %v654 = vld [vmem:[%s653] ss:$2 sm:$0xff]
        %s655 = scalar_lea.vmem %s585, 464
        %v656 = vld [vmem:[%s655] ss:$2 sm:$0xff]
        %s657 = scalar_lea.vmem %s585, 480
        %v658 = vld [vmem:[%s657] ss:$2 sm:$0xff]
        %s659 = scalar_lea.vmem %s585, 496
        %v660 = vld [vmem:[%s659] ss:$2 sm:$0xff]
        %s661 = scalar_lea.vmem %s585, 512
        %v662 = vld [vmem:[%s661] ss:$2 sm:$0xff]
        %s663 = scalar_lea.vmem %s585, 528
        %v664 = vld [vmem:[%s663] ss:$2 sm:$0xff]
        %s665 = scalar_lea.vmem %s585, 544
        %v666 = vld [vmem:[%s665] ss:$2 sm:$0xff]
        %s667 = scalar_lea.vmem %s585, 560
        %v668 = vld [vmem:[%s667] ss:$2 sm:$0xff]
        %s669 = scalar_lea.vmem %s585, 576
        %v670 = vld [vmem:[%s669] ss:$2 sm:$0xff]
        %s671 = scalar_lea.vmem %s585, 592
        %v672 = vld [vmem:[%s671] ss:$2 sm:$0xff]
        %s673 = scalar_lea.vmem %s585, 608
        %v674 = vld [vmem:[%s673] ss:$2 sm:$0xff]
        %s675 = scalar_lea.vmem %s585, 624
        %v676 = vld [vmem:[%s675] ss:$2 sm:$0xff]
        %s677 = scalar_lea.vmem %s585, 640
        %v678 = vld [vmem:[%s677] ss:$2 sm:$0xff]
        %s679 = scalar_lea.vmem %s585, 656
        %v680 = vld [vmem:[%s679] ss:$2 sm:$0xff]
        %s681 = scalar_lea.vmem %s585, 672
        %v682 = vld [vmem:[%s681] ss:$2 sm:$0xff]
        %s683 = scalar_lea.vmem %s585, 688
        %v684 = vld [vmem:[%s683] ss:$2 sm:$0xff]
        %s685 = scalar_lea.vmem %s585, 704
        %v686 = vld [vmem:[%s685] ss:$2 sm:$0xff]
        %s687 = scalar_lea.vmem %s585, 720
        %v688 = vld [vmem:[%s687] ss:$2 sm:$0xff]
        %s689 = scalar_lea.vmem %s585, 736
        %v690 = vld [vmem:[%s689] ss:$2 sm:$0xff]
        %s691 = scalar_lea.vmem %s585, 752
        %v692 = vld [vmem:[%s691] ss:$2 sm:$0xff]
        %s693 = scalar_lea.vmem %s585, 768
        %v694 = vld [vmem:[%s693] ss:$2 sm:$0xff]
        %s695 = scalar_lea.vmem %s585, 784
        %v696 = vld [vmem:[%s695] ss:$2 sm:$0xff]
        %s697 = scalar_lea.vmem %s585, 800
        %v698 = vld [vmem:[%s697] ss:$2 sm:$0xff]
        %s699 = scalar_lea.vmem %s585, 816
        %v700 = vld [vmem:[%s699] ss:$2 sm:$0xff]
        %s701 = scalar_lea.vmem %s585, 832
        %v702 = vld [vmem:[%s701] ss:$2 sm:$0xff]
        %s703 = scalar_lea.vmem %s585, 848
        %v704 = vld [vmem:[%s703] ss:$2 sm:$0xff]
        %s705 = scalar_lea.vmem %s585, 864
        %v706 = vld [vmem:[%s705] ss:$2 sm:$0xff]
        %s707 = scalar_lea.vmem %s585, 880
        %v708 = vld [vmem:[%s707] ss:$2 sm:$0xff]
        %s709 = scalar_lea.vmem %s585, 896
        %v710 = vld [vmem:[%s709] ss:$2 sm:$0xff]
        %s711 = scalar_lea.vmem %s585, 912
        %v712 = vld [vmem:[%s711] ss:$2 sm:$0xff]
        %s713 = scalar_lea.vmem %s585, 928
        %v714 = vld [vmem:[%s713] ss:$2 sm:$0xff]
        %s715 = scalar_lea.vmem %s585, 944
        %v716 = vld [vmem:[%s715] ss:$2 sm:$0xff]
        %s717 = scalar_lea.vmem %s585, 960
        %v718 = vld [vmem:[%s717] ss:$2 sm:$0xff]
        %s719 = scalar_lea.vmem %s585, 976
        %v720 = vld [vmem:[%s719] ss:$2 sm:$0xff]
        %s721 = scalar_lea.vmem %s585, 992
        %v722 = vld [vmem:[%s721] ss:$2 sm:$0xff]
        %s723 = scalar_lea.vmem %s585, 1008
        %v724 = vld [vmem:[%s723] ss:$2 sm:$0xff]
        %v725 = vpack.c.bf16 %v600, %v598
        %v726 = vpack.c.bf16 %v608, %v606
        %v727 = vpack.c.bf16 %v616, %v614
        %v728 = vpack.c.bf16 %v624, %v622
        %v729 = vpack.c.bf16 %v632, %v630
        %v730 = vpack.c.bf16 %v640, %v638
        %v731 = vpack.c.bf16 %v648, %v646
        %v732 = vpack.c.bf16 %v656, %v654
        %v733 = vpack.c.bf16 %v664, %v662
        %v734 = vpack.c.bf16 %v672, %v670
        %v735 = vpack.c.bf16 %v680, %v678
        %v736 = vpack.c.bf16 %v688, %v686
        %v737 = vpack.c.bf16 %v696, %v694
        %v738 = vpack.c.bf16 %v704, %v702
        %v739 = vpack.c.bf16 %v712, %v710
        %v740 = vpack.c.bf16 %v720, %v718
        %v741 = vld [vmem:[%s1] sm:$0xf]
        %v742 = vld [vmem:[%s1 + $0x4] sm:$0x3]
        %v743 = vpack.c.bf16 %v604, %v602
        %v744 = vpack.c.bf16 %v612, %v610
        %v745 = vpack.c.bf16 %v620, %v618
        %v746 = vpack.c.bf16 %v628, %v626
        %v747 = vpack.c.bf16 %v636, %v634
        %v748 = vpack.c.bf16 %v644, %v642
        %v749 = vpack.c.bf16 %v652, %v650
        %v750 = vpack.c.bf16 %v660, %v658
        %v751 = vpack.c.bf16 %v668, %v666
        %v752 = vpack.c.bf16 %v676, %v674
        %v753 = vpack.c.bf16 %v684, %v682
        %v754 = vpack.c.bf16 %v692, %v690
        %v755 = vpack.c.bf16 %v700, %v698
        %v756 = vpack.c.bf16 %v708, %v706
        %v757 = vpack.c.bf16 %v716, %v714
        %v758 = vpack.c.bf16 %v724, %v722
        %s759 = scalar_lea.vmem %s1, 16
        %v760 = vld [vmem:[%s759] sm:$0xf]
        %v761 = vld [vmem:[%s759 + $0x4] sm:$0x3]
        %v764 = vunpack.c.l.b16 %v760
        %v765 = vunpack.c.l.b16 %v761
        %v766 = vpack.c.b16 %v765, %v764
        %vm767 = vcmask 97280
        %v769 = vsel %vm767, %v743, 0
        %v772 = vsel %vm767, %v744, 0
        %v775 = vsel %vm767, %v745, 0
        %v778 = vsel %vm767, %v746, 0
        %v781 = vsel %vm767, %v747, 0
        %v784 = vsel %vm767, %v748, 0
        %v787 = vsel %vm767, %v749, 0
        %v790 = vsel %vm767, %v750, 0
        %v793 = vsel %vm767, %v751, 0
        %v796 = vsel %vm767, %v752, 0
        %v799 = vsel %vm767, %v753, 0
        %v802 = vsel %vm767, %v754, 0
        %v805 = vsel %vm767, %v755, 0
        %v808 = vsel %vm767, %v756, 0
        %v811 = vsel %vm767, %v757, 0
        %v814 = vsel %vm767, %v758, 0
        %vm816 = vcmask 1045504
        %v818 = vsel %vm816, %v766, 0
        %820 = vmatprep.subr.bf16.mxu0 0
        %821 = vmatpush1.bf16.msra.mxu0 0
        %822 = vmatprep.subr.bf16.mxu0 0
        %823 = vmatpush1.bf16.msra.mxu0 0
        %824 = vmatprep.subr.bf16.mxu0 0
        %825 = vmatpush1.bf16.msra.mxu0 0
        %826 = vmatprep.subr.bf16.mxu0 0
        %827 = vmatpush1.bf16.msra.mxu0 0
        %828 = vmatprep.subr.bf16.mxu0 0
        %829 = vmatpush1.bf16.msra.mxu0 0
        %830 = vmatprep.subr.bf16.mxu0 0
        %831 = vmatpush1.bf16.msra.mxu0 0
        %832 = vmatprep.subr.bf16.mxu0 0
        %833 = vmatpush1.bf16.msra.mxu0 0
        %834 = vmatprep.subr.bf16.mxu0 0
        %835 = vmatpush1.bf16.msra.mxu0 %v818
        %836 = vmatprep.subr.bf16.mxu0 0
        %837 = vmatpush2.bf16.msra.mxu0 0
        %838 = vmatprep.subr.bf16.mxu0 0
        %839 = vmatpush2.bf16.msra.mxu0 0
        %840 = vmatprep.subr.bf16.mxu0 0
        %841 = vmatpush2.bf16.msra.mxu0 0
        %842 = vmatprep.subr.bf16.mxu0 0
        %843 = vmatpush2.bf16.msra.mxu0 0
        %844 = vmatprep.subr.bf16.mxu0 0
        %845 = vmatpush2.bf16.msra.mxu0 0
        %846 = vmatprep.subr.bf16.mxu0 0
        %847 = vmatpush2.bf16.msra.mxu0 0
        %848 = vmatprep.subr.bf16.mxu0 0
        %849 = vmatpush2.bf16.msra.mxu0 0
        %850 = vmatprep.subr.bf16.mxu0 0
        %851 = vmatpush2.bf16.msra.mxu0 0
        %852 = vmatprep.mubr.bf16.mxu0 0
        %853 = vmatmul.mubr.bf16.gmra.mxu0 %v769
        %v854 = vpop.f32.mrf.mxu0
        %v855 = vadd.f32 0.0, %v854
        %v856 = vpop.f32.mrf.mxu0
        %v857 = vpop.f32.mrf.mxu0
        %v858 = vadd.f32 0.0, %v857
        %v859 = vpop.f32.mrf.mxu0
        %860 = vmatprep.mubr.bf16.mxu0 0
        %861 = vmatmul.mubr.bf16.gmra.mxu0 %v772
        %v862 = vpop.f32.mrf.mxu0
        %v863 = vadd.f32 0.0, %v862
        %v864 = vpop.f32.mrf.mxu0
        %v865 = vpop.f32.mrf.mxu0
        %v866 = vadd.f32 0.0, %v865
        %v867 = vpop.f32.mrf.mxu0
        %868 = vmatprep.mubr.bf16.mxu0 0
        %869 = vmatmul.mubr.bf16.gmra.mxu0 %v775
        %v870 = vpop.f32.mrf.mxu0
        %v871 = vadd.f32 0.0, %v870
        %v872 = vpop.f32.mrf.mxu0
        %v873 = vpop.f32.mrf.mxu0
        %v874 = vadd.f32 0.0, %v873
        %v875 = vpop.f32.mrf.mxu0
        %876 = vmatprep.mubr.bf16.mxu0 0
        %877 = vmatmul.mubr.bf16.gmra.mxu0 %v778
        %v878 = vpop.f32.mrf.mxu0
        %v879 = vadd.f32 0.0, %v878
        %v880 = vpop.f32.mrf.mxu0
        %v881 = vpop.f32.mrf.mxu0
        %v882 = vadd.f32 0.0, %v881
        %v883 = vpop.f32.mrf.mxu0
        %884 = vmatprep.mubr.bf16.mxu0 0
        %885 = vmatmul.mubr.bf16.gmra.mxu0 %v781
        %v886 = vpop.f32.mrf.mxu0
        %v887 = vadd.f32 0.0, %v886
        %v888 = vpop.f32.mrf.mxu0
        %v889 = vpop.f32.mrf.mxu0
        %v890 = vadd.f32 0.0, %v889
        %v891 = vpop.f32.mrf.mxu0
        %892 = vmatprep.mubr.bf16.mxu0 0
        %893 = vmatmul.mubr.bf16.gmra.mxu0 %v784
        %v894 = vpop.f32.mrf.mxu0
        %v895 = vadd.f32 0.0, %v894
        %v896 = vpop.f32.mrf.mxu0
        %v897 = vpop.f32.mrf.mxu0
        %v898 = vadd.f32 0.0, %v897
        %v899 = vpop.f32.mrf.mxu0
        %900 = vmatprep.mubr.bf16.mxu0 0
        %901 = vmatmul.mubr.bf16.gmra.mxu0 %v787
        %v902 = vpop.f32.mrf.mxu0
        %v903 = vadd.f32 0.0, %v902
        %v904 = vpop.f32.mrf.mxu0
        %v905 = vpop.f32.mrf.mxu0
        %v906 = vadd.f32 0.0, %v905
        %v907 = vpop.f32.mrf.mxu0
        %908 = vmatprep.mubr.bf16.mxu0 0
        %909 = vmatmul.mubr.bf16.gmra.mxu0 %v790
        %v910 = vpop.f32.mrf.mxu0
        %v911 = vadd.f32 0.0, %v910
        %v912 = vpop.f32.mrf.mxu0
        %v913 = vpop.f32.mrf.mxu0
        %v914 = vadd.f32 0.0, %v913
        %v915 = vpop.f32.mrf.mxu0
        %916 = vmatprep.mubr.bf16.mxu0 0
        %917 = vmatmul.mubr.bf16.gmra.mxu0 %v793
        %v918 = vpop.f32.mrf.mxu0
        %v919 = vadd.f32 0.0, %v918
        %v920 = vpop.f32.mrf.mxu0
        %v921 = vpop.f32.mrf.mxu0
        %v922 = vadd.f32 0.0, %v921
        %v923 = vpop.f32.mrf.mxu0
        %924 = vmatprep.mubr.bf16.mxu0 0
        %925 = vmatmul.mubr.bf16.gmra.mxu0 %v796
        %v926 = vpop.f32.mrf.mxu0
        %v927 = vadd.f32 0.0, %v926
        %v928 = vpop.f32.mrf.mxu0
        %v929 = vpop.f32.mrf.mxu0
        %v930 = vadd.f32 0.0, %v929
        %v931 = vpop.f32.mrf.mxu0
        %932 = vmatprep.mubr.bf16.mxu0 0
        %933 = vmatmul.mubr.bf16.gmra.mxu0 %v799
        %v934 = vpop.f32.mrf.mxu0
        %v935 = vadd.f32 0.0, %v934
        %v936 = vpop.f32.mrf.mxu0
        %v937 = vpop.f32.mrf.mxu0
        %v938 = vadd.f32 0.0, %v937
        %v939 = vpop.f32.mrf.mxu0
        %940 = vmatprep.mubr.bf16.mxu0 0
        %941 = vmatmul.mubr.bf16.gmra.mxu0 %v802
        %v942 = vpop.f32.mrf.mxu0
        %v943 = vadd.f32 0.0, %v942
        %v944 = vpop.f32.mrf.mxu0
        %v945 = vpop.f32.mrf.mxu0
        %v946 = vadd.f32 0.0, %v945
        %v947 = vpop.f32.mrf.mxu0
        %948 = vmatprep.mubr.bf16.mxu0 0
        %949 = vmatmul.mubr.bf16.gmra.mxu0 %v805
        %v950 = vpop.f32.mrf.mxu0
        %v951 = vadd.f32 0.0, %v950
        %v952 = vpop.f32.mrf.mxu0
        %v953 = vpop.f32.mrf.mxu0
        %v954 = vadd.f32 0.0, %v953
        %v955 = vpop.f32.mrf.mxu0
        %956 = vmatprep.mubr.bf16.mxu0 0
        %957 = vmatmul.mubr.bf16.gmra.mxu0 %v808
        %v958 = vpop.f32.mrf.mxu0
        %v959 = vadd.f32 0.0, %v958
        %v960 = vpop.f32.mrf.mxu0
        %v961 = vpop.f32.mrf.mxu0
        %v962 = vadd.f32 0.0, %v961
        %v963 = vpop.f32.mrf.mxu0
        %964 = vmatprep.mubr.bf16.mxu0 0
        %965 = vmatmul.mubr.bf16.gmra.mxu0 %v811
        %v966 = vpop.f32.mrf.mxu0
        %v967 = vadd.f32 0.0, %v966
        %v968 = vpop.f32.mrf.mxu0
        %v969 = vpop.f32.mrf.mxu0
        %v970 = vadd.f32 0.0, %v969
        %v971 = vpop.f32.mrf.mxu0
        %972 = vmatprep.mubr.bf16.mxu0 0
        %973 = vmatmul.mubr.bf16.gmra.mxu0 %v814
        %v974 = vpop.f32.mrf.mxu0
        %v975 = vadd.f32 0.0, %v974
        %v976 = vpop.f32.mrf.mxu0
        %v977 = vpop.f32.mrf.mxu0
        %v978 = vadd.f32 0.0, %v977
        %v979 = vpop.f32.mrf.mxu0
        %980 = vdwg.mxu0
        %v983 = vunpack.c.l.b16 %v741
        %v984 = vunpack.c.l.b16 %v742
        %v985 = vpack.c.b16 %v984, %v983
        %v987 = vsel %vm767, %v725, 0
        %v990 = vsel %vm767, %v726, 0
        %v993 = vsel %vm767, %v727, 0
        %v996 = vsel %vm767, %v728, 0
        %v999 = vsel %vm767, %v729, 0
        %v1002 = vsel %vm767, %v730, 0
        %v1005 = vsel %vm767, %v731, 0
        %v1008 = vsel %vm767, %v732, 0
        %v1011 = vsel %vm767, %v733, 0
        %v1014 = vsel %vm767, %v734, 0
        %v1017 = vsel %vm767, %v735, 0
        %v1020 = vsel %vm767, %v736, 0
        %v1023 = vsel %vm767, %v737, 0
        %v1026 = vsel %vm767, %v738, 0
        %v1029 = vsel %vm767, %v739, 0
        %v1032 = vsel %vm767, %v740, 0
        %v1035 = vsel %vm816, %v985, 0
        %1037 = vmatprep.subr.bf16.mxu0 0
        %1038 = vmatpush1.bf16.msra.mxu0 0
        %1039 = vmatprep.subr.bf16.mxu0 0
        %1040 = vmatpush1.bf16.msra.mxu0 0
        %1041 = vmatprep.subr.bf16.mxu0 0
        %1042 = vmatpush1.bf16.msra.mxu0 0
        %1043 = vmatprep.subr.bf16.mxu0 0
        %1044 = vmatpush1.bf16.msra.mxu0 0
        %1045 = vmatprep.subr.bf16.mxu0 0
        %1046 = vmatpush1.bf16.msra.mxu0 0
        %1047 = vmatprep.subr.bf16.mxu0 0
        %1048 = vmatpush1.bf16.msra.mxu0 0
        %1049 = vmatprep.subr.bf16.mxu0 0
        %1050 = vmatpush1.bf16.msra.mxu0 0
        %1051 = vmatprep.subr.bf16.mxu0 0
        %1052 = vmatpush1.bf16.msra.mxu0 %v1035
        %1053 = vmatprep.subr.bf16.mxu0 0
        %1054 = vmatpush2.bf16.msra.mxu0 0
        %1055 = vmatprep.subr.bf16.mxu0 0
        %1056 = vmatpush2.bf16.msra.mxu0 0
        %1057 = vmatprep.subr.bf16.mxu0 0
        %1058 = vmatpush2.bf16.msra.mxu0 0
        %1059 = vmatprep.subr.bf16.mxu0 0
        %1060 = vmatpush2.bf16.msra.mxu0 0
        %1061 = vmatprep.subr.bf16.mxu0 0
        %1062 = vmatpush2.bf16.msra.mxu0 0
        %1063 = vmatprep.subr.bf16.mxu0 0
        %1064 = vmatpush2.bf16.msra.mxu0 0
        %1065 = vmatprep.subr.bf16.mxu0 0
        %1066 = vmatpush2.bf16.msra.mxu0 0
        %1067 = vmatprep.subr.bf16.mxu0 0
        %1068 = vmatpush2.bf16.msra.mxu0 0
        %1069 = vmatprep.mubr.bf16.mxu0 0
        %1070 = vmatmul.mubr.bf16.gmra.mxu0 %v987
        %v1071 = vpop.f32.mrf.mxu0
        %v1072 = vadd.f32 %v855, %v1071
        %v1073 = vpop.f32.mrf.mxu0
        %v1074 = vpop.f32.mrf.mxu0
        %v1075 = vadd.f32 %v858, %v1074
        %v1076 = vpop.f32.mrf.mxu0
        %1077 = vmatprep.mubr.bf16.mxu0 0
        %1078 = vmatmul.mubr.bf16.gmra.mxu0 %v990
        %v1079 = vpop.f32.mrf.mxu0
        %v1080 = vadd.f32 %v863, %v1079
        %v1081 = vpop.f32.mrf.mxu0
        %v1082 = vpop.f32.mrf.mxu0
        %v1083 = vadd.f32 %v866, %v1082
        %v1084 = vpop.f32.mrf.mxu0
        %1085 = vmatprep.mubr.bf16.mxu0 0
        %1086 = vmatmul.mubr.bf16.gmra.mxu0 %v993
        %v1087 = vpop.f32.mrf.mxu0
        %v1088 = vadd.f32 %v871, %v1087
        %v1089 = vpop.f32.mrf.mxu0
        %v1090 = vpop.f32.mrf.mxu0
        %v1091 = vadd.f32 %v874, %v1090
        %v1092 = vpop.f32.mrf.mxu0
        %1093 = vmatprep.mubr.bf16.mxu0 0
        %1094 = vmatmul.mubr.bf16.gmra.mxu0 %v996
        %v1095 = vpop.f32.mrf.mxu0
        %v1096 = vadd.f32 %v879, %v1095
        %v1097 = vpop.f32.mrf.mxu0
        %v1098 = vpop.f32.mrf.mxu0
        %v1099 = vadd.f32 %v882, %v1098
        %v1100 = vpop.f32.mrf.mxu0
        %1101 = vmatprep.mubr.bf16.mxu0 0
        %1102 = vmatmul.mubr.bf16.gmra.mxu0 %v999
        %v1103 = vpop.f32.mrf.mxu0
        %v1104 = vadd.f32 %v887, %v1103
        %v1105 = vpop.f32.mrf.mxu0
        %v1106 = vpop.f32.mrf.mxu0
        %v1107 = vadd.f32 %v890, %v1106
        %v1108 = vpop.f32.mrf.mxu0
        %1109 = vmatprep.mubr.bf16.mxu0 0
        %1110 = vmatmul.mubr.bf16.gmra.mxu0 %v1002
        %v1111 = vpop.f32.mrf.mxu0
        %v1112 = vadd.f32 %v895, %v1111
        %v1113 = vpop.f32.mrf.mxu0
        %v1114 = vpop.f32.mrf.mxu0
        %v1115 = vadd.f32 %v898, %v1114
        %v1116 = vpop.f32.mrf.mxu0
        %1117 = vmatprep.mubr.bf16.mxu0 0
        %1118 = vmatmul.mubr.bf16.gmra.mxu0 %v1005
        %v1119 = vpop.f32.mrf.mxu0
        %v1120 = vadd.f32 %v903, %v1119
        %v1121 = vpop.f32.mrf.mxu0
        %v1122 = vpop.f32.mrf.mxu0
        %v1123 = vadd.f32 %v906, %v1122
        %v1124 = vpop.f32.mrf.mxu0
        %1125 = vmatprep.mubr.bf16.mxu0 0
        %1126 = vmatmul.mubr.bf16.gmra.mxu0 %v1008
        %v1127 = vpop.f32.mrf.mxu0
        %v1128 = vadd.f32 %v911, %v1127
        %v1129 = vpop.f32.mrf.mxu0
        %v1130 = vpop.f32.mrf.mxu0
        %v1131 = vadd.f32 %v914, %v1130
        %v1132 = vpop.f32.mrf.mxu0
        %1133 = vmatprep.mubr.bf16.mxu0 0
        %1134 = vmatmul.mubr.bf16.gmra.mxu0 %v1011
        %v1135 = vpop.f32.mrf.mxu0
        %v1136 = vadd.f32 %v919, %v1135
        %v1137 = vpop.f32.mrf.mxu0
        %v1138 = vpop.f32.mrf.mxu0
        %v1139 = vadd.f32 %v922, %v1138
        %v1140 = vpop.f32.mrf.mxu0
        %1141 = vmatprep.mubr.bf16.mxu0 0
        %1142 = vmatmul.mubr.bf16.gmra.mxu0 %v1014
        %v1143 = vpop.f32.mrf.mxu0
        %v1144 = vadd.f32 %v927, %v1143
        %v1145 = vpop.f32.mrf.mxu0
        %v1146 = vpop.f32.mrf.mxu0
        %v1147 = vadd.f32 %v930, %v1146
        %v1148 = vpop.f32.mrf.mxu0
        %1149 = vmatprep.mubr.bf16.mxu0 0
        %1150 = vmatmul.mubr.bf16.gmra.mxu0 %v1017
        %v1151 = vpop.f32.mrf.mxu0
        %v1152 = vadd.f32 %v935, %v1151
        %v1153 = vpop.f32.mrf.mxu0
        %v1154 = vpop.f32.mrf.mxu0
        %v1155 = vadd.f32 %v938, %v1154
        %v1156 = vpop.f32.mrf.mxu0
        %1157 = vmatprep.mubr.bf16.mxu0 0
        %1158 = vmatmul.mubr.bf16.gmra.mxu0 %v1020
        %v1159 = vpop.f32.mrf.mxu0
        %v1160 = vadd.f32 %v943, %v1159
        %v1161 = vpop.f32.mrf.mxu0
        %v1162 = vpop.f32.mrf.mxu0
        %v1163 = vadd.f32 %v946, %v1162
        %v1164 = vpop.f32.mrf.mxu0
        %1165 = vmatprep.mubr.bf16.mxu0 0
        %1166 = vmatmul.mubr.bf16.gmra.mxu0 %v1023
        %v1167 = vpop.f32.mrf.mxu0
        %v1168 = vadd.f32 %v951, %v1167
        %v1169 = vpop.f32.mrf.mxu0
        %v1170 = vpop.f32.mrf.mxu0
        %v1171 = vadd.f32 %v954, %v1170
        %v1172 = vpop.f32.mrf.mxu0
        %1173 = vmatprep.mubr.bf16.mxu0 0
        %1174 = vmatmul.mubr.bf16.gmra.mxu0 %v1026
        %v1175 = vpop.f32.mrf.mxu0
        %v1176 = vadd.f32 %v959, %v1175
        %v1177 = vpop.f32.mrf.mxu0
        %v1178 = vpop.f32.mrf.mxu0
        %v1179 = vadd.f32 %v962, %v1178
        %v1180 = vpop.f32.mrf.mxu0
        %1181 = vmatprep.mubr.bf16.mxu0 0
        %1182 = vmatmul.mubr.bf16.gmra.mxu0 %v1029
        %v1183 = vpop.f32.mrf.mxu0
        %v1184 = vadd.f32 %v967, %v1183
        %v1185 = vpop.f32.mrf.mxu0
        %v1186 = vpop.f32.mrf.mxu0
        %v1187 = vadd.f32 %v970, %v1186
        %v1188 = vpop.f32.mrf.mxu0
        %1189 = vmatprep.mubr.bf16.mxu0 0
        %1190 = vmatmul.mubr.bf16.gmra.mxu0 %v1032
        %v1191 = vpop.f32.mrf.mxu0
        %v1192 = vadd.f32 %v975, %v1191
        %v1193 = vpop.f32.mrf.mxu0
        %v1194 = vpop.f32.mrf.mxu0
        %v1195 = vadd.f32 %v978, %v1194
        %v1196 = vpop.f32.mrf.mxu0
        %1197 = vdwg.mxu0
        %s1198 = scalar_lea.vmem %s585, 1
        %v1199 = vld [vmem:[%s1198] ss:$2 sm:$0xff]
        %s1200 = scalar_lea.vmem %s585, 17
        %v1201 = vld [vmem:[%s1200] ss:$2 sm:$0xff]
        %s1202 = scalar_lea.vmem %s585, 33
        %v1203 = vld [vmem:[%s1202] ss:$2 sm:$0xff]
        %s1204 = scalar_lea.vmem %s585, 49
        %v1205 = vld [vmem:[%s1204] ss:$2 sm:$0xff]
        %s1206 = scalar_lea.vmem %s585, 65
        %v1207 = vld [vmem:[%s1206] ss:$2 sm:$0xff]
        %s1208 = scalar_lea.vmem %s585, 81
        %v1209 = vld [vmem:[%s1208] ss:$2 sm:$0xff]
        %s1210 = scalar_lea.vmem %s585, 97
        %v1211 = vld [vmem:[%s1210] ss:$2 sm:$0xff]
        %s1212 = scalar_lea.vmem %s585, 113
        %v1213 = vld [vmem:[%s1212] ss:$2 sm:$0xff]
        %s1214 = scalar_lea.vmem %s585, 129
        %v1215 = vld [vmem:[%s1214] ss:$2 sm:$0xff]
        %s1216 = scalar_lea.vmem %s585, 145
        %v1217 = vld [vmem:[%s1216] ss:$2 sm:$0xff]
        %s1218 = scalar_lea.vmem %s585, 161
        %v1219 = vld [vmem:[%s1218] ss:$2 sm:$0xff]
        %s1220 = scalar_lea.vmem %s585, 177
        %v1221 = vld [vmem:[%s1220] ss:$2 sm:$0xff]
        %s1222 = scalar_lea.vmem %s585, 193
        %v1223 = vld [vmem:[%s1222] ss:$2 sm:$0xff]
        %s1224 = scalar_lea.vmem %s585, 209
        %v1225 = vld [vmem:[%s1224] ss:$2 sm:$0xff]
        %s1226 = scalar_lea.vmem %s585, 225
        %v1227 = vld [vmem:[%s1226] ss:$2 sm:$0xff]
        %s1228 = scalar_lea.vmem %s585, 241
        %v1229 = vld [vmem:[%s1228] ss:$2 sm:$0xff]
        %s1230 = scalar_lea.vmem %s585, 257
        %v1231 = vld [vmem:[%s1230] ss:$2 sm:$0xff]
        %s1232 = scalar_lea.vmem %s585, 273
        %v1233 = vld [vmem:[%s1232] ss:$2 sm:$0xff]
        %s1234 = scalar_lea.vmem %s585, 289
        %v1235 = vld [vmem:[%s1234] ss:$2 sm:$0xff]
        %s1236 = scalar_lea.vmem %s585, 305
        %v1237 = vld [vmem:[%s1236] ss:$2 sm:$0xff]
        %s1238 = scalar_lea.vmem %s585, 321
        %v1239 = vld [vmem:[%s1238] ss:$2 sm:$0xff]
        %s1240 = scalar_lea.vmem %s585, 337
        %v1241 = vld [vmem:[%s1240] ss:$2 sm:$0xff]
        %s1242 = scalar_lea.vmem %s585, 353
        %v1243 = vld [vmem:[%s1242] ss:$2 sm:$0xff]
        %s1244 = scalar_lea.vmem %s585, 369
        %v1245 = vld [vmem:[%s1244] ss:$2 sm:$0xff]
        %s1246 = scalar_lea.vmem %s585, 385
        %v1247 = vld [vmem:[%s1246] ss:$2 sm:$0xff]
        %s1248 = scalar_lea.vmem %s585, 401
        %v1249 = vld [vmem:[%s1248] ss:$2 sm:$0xff]
        %s1250 = scalar_lea.vmem %s585, 417
        %v1251 = vld [vmem:[%s1250] ss:$2 sm:$0xff]
        %s1252 = scalar_lea.vmem %s585, 433
        %v1253 = vld [vmem:[%s1252] ss:$2 sm:$0xff]
        %s1254 = scalar_lea.vmem %s585, 449
        %v1255 = vld [vmem:[%s1254] ss:$2 sm:$0xff]
        %s1256 = scalar_lea.vmem %s585, 465
        %v1257 = vld [vmem:[%s1256] ss:$2 sm:$0xff]
        %s1258 = scalar_lea.vmem %s585, 481
        %v1259 = vld [vmem:[%s1258] ss:$2 sm:$0xff]
        %s1260 = scalar_lea.vmem %s585, 497
        %v1261 = vld [vmem:[%s1260] ss:$2 sm:$0xff]
        %s1262 = scalar_lea.vmem %s585, 513
        %v1263 = vld [vmem:[%s1262] ss:$2 sm:$0xff]
        %s1264 = scalar_lea.vmem %s585, 529
        %v1265 = vld [vmem:[%s1264] ss:$2 sm:$0xff]
        %s1266 = scalar_lea.vmem %s585, 545
        %v1267 = vld [vmem:[%s1266] ss:$2 sm:$0xff]
        %s1268 = scalar_lea.vmem %s585, 561
        %v1269 = vld [vmem:[%s1268] ss:$2 sm:$0xff]
        %s1270 = scalar_lea.vmem %s585, 577
        %v1271 = vld [vmem:[%s1270] ss:$2 sm:$0xff]
        %s1272 = scalar_lea.vmem %s585, 593
        %v1273 = vld [vmem:[%s1272] ss:$2 sm:$0xff]
        %s1274 = scalar_lea.vmem %s585, 609
        %v1275 = vld [vmem:[%s1274] ss:$2 sm:$0xff]
        %s1276 = scalar_lea.vmem %s585, 625
        %v1277 = vld [vmem:[%s1276] ss:$2 sm:$0xff]
        %s1278 = scalar_lea.vmem %s585, 641
        %v1279 = vld [vmem:[%s1278] ss:$2 sm:$0xff]
        %s1280 = scalar_lea.vmem %s585, 657
        %v1281 = vld [vmem:[%s1280] ss:$2 sm:$0xff]
        %s1282 = scalar_lea.vmem %s585, 673
        %v1283 = vld [vmem:[%s1282] ss:$2 sm:$0xff]
        %s1284 = scalar_lea.vmem %s585, 689
        %v1285 = vld [vmem:[%s1284] ss:$2 sm:$0xff]
        %s1286 = scalar_lea.vmem %s585, 705
        %v1287 = vld [vmem:[%s1286] ss:$2 sm:$0xff]
        %s1288 = scalar_lea.vmem %s585, 721
        %v1289 = vld [vmem:[%s1288] ss:$2 sm:$0xff]
        %s1290 = scalar_lea.vmem %s585, 737
        %v1291 = vld [vmem:[%s1290] ss:$2 sm:$0xff]
        %s1292 = scalar_lea.vmem %s585, 753
        %v1293 = vld [vmem:[%s1292] ss:$2 sm:$0xff]
        %s1294 = scalar_lea.vmem %s585, 769
        %v1295 = vld [vmem:[%s1294] ss:$2 sm:$0xff]
        %s1296 = scalar_lea.vmem %s585, 785
        %v1297 = vld [vmem:[%s1296] ss:$2 sm:$0xff]
        %s1298 = scalar_lea.vmem %s585, 801
        %v1299 = vld [vmem:[%s1298] ss:$2 sm:$0xff]
        %s1300 = scalar_lea.vmem %s585, 817
        %v1301 = vld [vmem:[%s1300] ss:$2 sm:$0xff]
        %s1302 = scalar_lea.vmem %s585, 833
        %v1303 = vld [vmem:[%s1302] ss:$2 sm:$0xff]
        %s1304 = scalar_lea.vmem %s585, 849
        %v1305 = vld [vmem:[%s1304] ss:$2 sm:$0xff]
        %s1306 = scalar_lea.vmem %s585, 865
        %v1307 = vld [vmem:[%s1306] ss:$2 sm:$0xff]
        %s1308 = scalar_lea.vmem %s585, 881
        %v1309 = vld [vmem:[%s1308] ss:$2 sm:$0xff]
        %s1310 = scalar_lea.vmem %s585, 897
        %v1311 = vld [vmem:[%s1310] ss:$2 sm:$0xff]
        %s1312 = scalar_lea.vmem %s585, 913
        %v1313 = vld [vmem:[%s1312] ss:$2 sm:$0xff]
        %s1314 = scalar_lea.vmem %s585, 929
        %v1315 = vld [vmem:[%s1314] ss:$2 sm:$0xff]
        %s1316 = scalar_lea.vmem %s585, 945
        %v1317 = vld [vmem:[%s1316] ss:$2 sm:$0xff]
        %s1318 = scalar_lea.vmem %s585, 961
        %v1319 = vld [vmem:[%s1318] ss:$2 sm:$0xff]
        %s1320 = scalar_lea.vmem %s585, 977
        %v1321 = vld [vmem:[%s1320] ss:$2 sm:$0xff]
        %s1322 = scalar_lea.vmem %s585, 993
        %v1323 = vld [vmem:[%s1322] ss:$2 sm:$0xff]
        %s1324 = scalar_lea.vmem %s585, 1009
        %v1325 = vld [vmem:[%s1324] ss:$2 sm:$0xff]
        %v1326 = vpack.c.bf16 %v1201, %v1199
        %v1327 = vpack.c.bf16 %v1209, %v1207
        %v1328 = vpack.c.bf16 %v1217, %v1215
        %v1329 = vpack.c.bf16 %v1225, %v1223
        %v1330 = vpack.c.bf16 %v1233, %v1231
        %v1331 = vpack.c.bf16 %v1241, %v1239
        %v1332 = vpack.c.bf16 %v1249, %v1247
        %v1333 = vpack.c.bf16 %v1257, %v1255
        %v1334 = vpack.c.bf16 %v1265, %v1263
        %v1335 = vpack.c.bf16 %v1273, %v1271
        %v1336 = vpack.c.bf16 %v1281, %v1279
        %v1337 = vpack.c.bf16 %v1289, %v1287
        %v1338 = vpack.c.bf16 %v1297, %v1295
        %v1339 = vpack.c.bf16 %v1305, %v1303
        %v1340 = vpack.c.bf16 %v1313, %v1311
        %v1341 = vpack.c.bf16 %v1321, %v1319
        %s1342 = scalar_lea.vmem %s1, 8
        %v1343 = vld [vmem:[%s1342] sm:$0xf]
        %v1344 = vld [vmem:[%s1342 + $0x4] sm:$0x3]
        %v1347 = vunpack.c.l.b16 %v1343
        %v1348 = vunpack.c.l.b16 %v1344
        %v1349 = vpack.c.b16 %v1348, %v1347
        %v1351 = vsel %vm767, %v1326, 0
        %v1354 = vsel %vm767, %v1327, 0
        %v1357 = vsel %vm767, %v1328, 0
        %v1360 = vsel %vm767, %v1329, 0
        %v1363 = vsel %vm767, %v1330, 0
        %v1366 = vsel %vm767, %v1331, 0
        %v1369 = vsel %vm767, %v1332, 0
        %v1372 = vsel %vm767, %v1333, 0
        %v1375 = vsel %vm767, %v1334, 0
        %v1378 = vsel %vm767, %v1335, 0
        %v1381 = vsel %vm767, %v1336, 0
        %v1384 = vsel %vm767, %v1337, 0
        %v1387 = vsel %vm767, %v1338, 0
        %v1390 = vsel %vm767, %v1339, 0
        %v1393 = vsel %vm767, %v1340, 0
        %v1396 = vsel %vm767, %v1341, 0
        %v1399 = vsel %vm816, %v1349, 0
        %1401 = vmatprep.subr.bf16.mxu0 0
        %1402 = vmatpush1.bf16.msra.mxu0 0
        %1403 = vmatprep.subr.bf16.mxu0 0
        %1404 = vmatpush1.bf16.msra.mxu0 0
        %1405 = vmatprep.subr.bf16.mxu0 0
        %1406 = vmatpush1.bf16.msra.mxu0 0
        %1407 = vmatprep.subr.bf16.mxu0 0
        %1408 = vmatpush1.bf16.msra.mxu0 0
        %1409 = vmatprep.subr.bf16.mxu0 0
        %1410 = vmatpush1.bf16.msra.mxu0 0
        %1411 = vmatprep.subr.bf16.mxu0 0
        %1412 = vmatpush1.bf16.msra.mxu0 0
        %1413 = vmatprep.subr.bf16.mxu0 0
        %1414 = vmatpush1.bf16.msra.mxu0 0
        %1415 = vmatprep.subr.bf16.mxu0 0
        %1416 = vmatpush1.bf16.msra.mxu0 %v1399
        %1417 = vmatprep.subr.bf16.mxu0 0
        %1418 = vmatpush2.bf16.msra.mxu0 0
        %1419 = vmatprep.subr.bf16.mxu0 0
        %1420 = vmatpush2.bf16.msra.mxu0 0
        %1421 = vmatprep.subr.bf16.mxu0 0
        %1422 = vmatpush2.bf16.msra.mxu0 0
        %1423 = vmatprep.subr.bf16.mxu0 0
        %1424 = vmatpush2.bf16.msra.mxu0 0
        %1425 = vmatprep.subr.bf16.mxu0 0
        %1426 = vmatpush2.bf16.msra.mxu0 0
        %1427 = vmatprep.subr.bf16.mxu0 0
        %1428 = vmatpush2.bf16.msra.mxu0 0
        %1429 = vmatprep.subr.bf16.mxu0 0
        %1430 = vmatpush2.bf16.msra.mxu0 0
        %1431 = vmatprep.subr.bf16.mxu0 0
        %1432 = vmatpush2.bf16.msra.mxu0 0
        %1433 = vmatprep.mubr.bf16.mxu0 0
        %1434 = vmatmul.mubr.bf16.gmra.mxu0 %v1351
        %v1435 = vpop.f32.mrf.mxu0
        %v1436 = vadd.f32 0.0, %v1435
        %v1437 = vpop.f32.mrf.mxu0
        %v1438 = vpop.f32.mrf.mxu0
        %v1439 = vadd.f32 0.0, %v1438
        %v1440 = vpop.f32.mrf.mxu0
        %1441 = vmatprep.mubr.bf16.mxu0 0
        %1442 = vmatmul.mubr.bf16.gmra.mxu0 %v1354
        %v1443 = vpop.f32.mrf.mxu0
        %v1444 = vadd.f32 0.0, %v1443
        %v1445 = vpop.f32.mrf.mxu0
        %v1446 = vpop.f32.mrf.mxu0
        %v1447 = vadd.f32 0.0, %v1446
        %v1448 = vpop.f32.mrf.mxu0
        %1449 = vmatprep.mubr.bf16.mxu0 0
        %1450 = vmatmul.mubr.bf16.gmra.mxu0 %v1357
        %v1451 = vpop.f32.mrf.mxu0
        %v1452 = vadd.f32 0.0, %v1451
        %v1453 = vpop.f32.mrf.mxu0
        %v1454 = vpop.f32.mrf.mxu0
        %v1455 = vadd.f32 0.0, %v1454
        %v1456 = vpop.f32.mrf.mxu0
        %1457 = vmatprep.mubr.bf16.mxu0 0
        %1458 = vmatmul.mubr.bf16.gmra.mxu0 %v1360
        %v1459 = vpop.f32.mrf.mxu0
        %v1460 = vadd.f32 0.0, %v1459
        %v1461 = vpop.f32.mrf.mxu0
        %v1462 = vpop.f32.mrf.mxu0
        %v1463 = vadd.f32 0.0, %v1462
        %v1464 = vpop.f32.mrf.mxu0
        %1465 = vmatprep.mubr.bf16.mxu0 0
        %1466 = vmatmul.mubr.bf16.gmra.mxu0 %v1363
        %v1467 = vpop.f32.mrf.mxu0
        %v1468 = vadd.f32 0.0, %v1467
        %v1469 = vpop.f32.mrf.mxu0
        %v1470 = vpop.f32.mrf.mxu0
        %v1471 = vadd.f32 0.0, %v1470
        %v1472 = vpop.f32.mrf.mxu0
        %1473 = vmatprep.mubr.bf16.mxu0 0
        %1474 = vmatmul.mubr.bf16.gmra.mxu0 %v1366
        %v1475 = vpop.f32.mrf.mxu0
        %v1476 = vadd.f32 0.0, %v1475
        %v1477 = vpop.f32.mrf.mxu0
        %v1478 = vpop.f32.mrf.mxu0
        %v1479 = vadd.f32 0.0, %v1478
        %v1480 = vpop.f32.mrf.mxu0
        %1481 = vmatprep.mubr.bf16.mxu0 0
        %1482 = vmatmul.mubr.bf16.gmra.mxu0 %v1369
        %v1483 = vpop.f32.mrf.mxu0
        %v1484 = vadd.f32 0.0, %v1483
        %v1485 = vpop.f32.mrf.mxu0
        %v1486 = vpop.f32.mrf.mxu0
        %v1487 = vadd.f32 0.0, %v1486
        %v1488 = vpop.f32.mrf.mxu0
        %1489 = vmatprep.mubr.bf16.mxu0 0
        %1490 = vmatmul.mubr.bf16.gmra.mxu0 %v1372
        %v1491 = vpop.f32.mrf.mxu0
        %v1492 = vadd.f32 0.0, %v1491
        %v1493 = vpop.f32.mrf.mxu0
        %v1494 = vpop.f32.mrf.mxu0
        %v1495 = vadd.f32 0.0, %v1494
        %v1496 = vpop.f32.mrf.mxu0
        %1497 = vmatprep.mubr.bf16.mxu0 0
        %1498 = vmatmul.mubr.bf16.gmra.mxu0 %v1375
        %v1499 = vpop.f32.mrf.mxu0
        %v1500 = vadd.f32 0.0, %v1499
        %v1501 = vpop.f32.mrf.mxu0
        %v1502 = vpop.f32.mrf.mxu0
        %v1503 = vadd.f32 0.0, %v1502
        %v1504 = vpop.f32.mrf.mxu0
        %1505 = vmatprep.mubr.bf16.mxu0 0
        %1506 = vmatmul.mubr.bf16.gmra.mxu0 %v1378
        %v1507 = vpop.f32.mrf.mxu0
        %v1508 = vadd.f32 0.0, %v1507
        %v1509 = vpop.f32.mrf.mxu0
        %v1510 = vpop.f32.mrf.mxu0
        %v1511 = vadd.f32 0.0, %v1510
        %v1512 = vpop.f32.mrf.mxu0
        %1513 = vmatprep.mubr.bf16.mxu0 0
        %1514 = vmatmul.mubr.bf16.gmra.mxu0 %v1381
        %v1515 = vpop.f32.mrf.mxu0
        %v1516 = vadd.f32 0.0, %v1515
        %v1517 = vpop.f32.mrf.mxu0
        %v1518 = vpop.f32.mrf.mxu0
        %v1519 = vadd.f32 0.0, %v1518
        %v1520 = vpop.f32.mrf.mxu0
        %1521 = vmatprep.mubr.bf16.mxu0 0
        %1522 = vmatmul.mubr.bf16.gmra.mxu0 %v1384
        %v1523 = vpop.f32.mrf.mxu0
        %v1524 = vadd.f32 0.0, %v1523
        %v1525 = vpop.f32.mrf.mxu0
        %v1526 = vpop.f32.mrf.mxu0
        %v1527 = vadd.f32 0.0, %v1526
        %v1528 = vpop.f32.mrf.mxu0
        %1529 = vmatprep.mubr.bf16.mxu0 0
        %1530 = vmatmul.mubr.bf16.gmra.mxu0 %v1387
        %v1531 = vpop.f32.mrf.mxu0
        %v1532 = vadd.f32 0.0, %v1531
        %v1533 = vpop.f32.mrf.mxu0
        %v1534 = vpop.f32.mrf.mxu0
        %v1535 = vadd.f32 0.0, %v1534
        %v1536 = vpop.f32.mrf.mxu0
        %1537 = vmatprep.mubr.bf16.mxu0 0
        %1538 = vmatmul.mubr.bf16.gmra.mxu0 %v1390
        %v1539 = vpop.f32.mrf.mxu0
        %v1540 = vadd.f32 0.0, %v1539
        %v1541 = vpop.f32.mrf.mxu0
        %v1542 = vpop.f32.mrf.mxu0
        %v1543 = vadd.f32 0.0, %v1542
        %v1544 = vpop.f32.mrf.mxu0
        %1545 = vmatprep.mubr.bf16.mxu0 0
        %1546 = vmatmul.mubr.bf16.gmra.mxu0 %v1393
        %v1547 = vpop.f32.mrf.mxu0
        %v1548 = vadd.f32 0.0, %v1547
        %v1549 = vpop.f32.mrf.mxu0
        %v1550 = vpop.f32.mrf.mxu0
        %v1551 = vadd.f32 0.0, %v1550
        %v1552 = vpop.f32.mrf.mxu0
        %1553 = vmatprep.mubr.bf16.mxu0 0
        %1554 = vmatmul.mubr.bf16.gmra.mxu0 %v1396
        %v1555 = vpop.f32.mrf.mxu0
        %v1556 = vadd.f32 0.0, %v1555
        %v1557 = vpop.f32.mrf.mxu0
        %v1558 = vpop.f32.mrf.mxu0
        %v1559 = vadd.f32 0.0, %v1558
        %v1560 = vpop.f32.mrf.mxu0
        %1561 = vdwg.mxu0
        %v1562 = vadd.f32 %v1072, %v1436
        %v1563 = vadd.f32 %v1075, %v1439
        %v1564 = vadd.f32 %v1080, %v1444
        %v1565 = vadd.f32 %v1083, %v1447
        %v1566 = vadd.f32 %v1088, %v1452
        %v1567 = vadd.f32 %v1091, %v1455
        %v1568 = vadd.f32 %v1096, %v1460
        %v1569 = vadd.f32 %v1099, %v1463
        %v1570 = vadd.f32 %v1104, %v1468
        %v1571 = vadd.f32 %v1107, %v1471
        %v1572 = vadd.f32 %v1112, %v1476
        %v1573 = vadd.f32 %v1115, %v1479
        %v1574 = vadd.f32 %v1120, %v1484
        %v1575 = vadd.f32 %v1123, %v1487
        %v1576 = vadd.f32 %v1128, %v1492
        %v1577 = vadd.f32 %v1131, %v1495
        %v1578 = vadd.f32 %v1136, %v1500
        %v1579 = vadd.f32 %v1139, %v1503
        %v1580 = vadd.f32 %v1144, %v1508
        %v1581 = vadd.f32 %v1147, %v1511
        %v1582 = vadd.f32 %v1152, %v1516
        %v1583 = vadd.f32 %v1155, %v1519
        %v1584 = vadd.f32 %v1160, %v1524
        %v1585 = vadd.f32 %v1163, %v1527
        %v1586 = vadd.f32 %v1168, %v1532
        %v1587 = vadd.f32 %v1171, %v1535
        %v1588 = vadd.f32 %v1176, %v1540
        %v1589 = vadd.f32 %v1179, %v1543
        %v1590 = vadd.f32 %v1184, %v1548
        %v1591 = vadd.f32 %v1187, %v1551
        %v1592 = vadd.f32 %v1192, %v1556
        %v1593 = vadd.f32 %v1195, %v1559
        %v1594 = vpack.c.bf16 %v1205, %v1203
        %v1595 = vpack.c.bf16 %v1213, %v1211
        %v1596 = vpack.c.bf16 %v1221, %v1219
        %v1597 = vpack.c.bf16 %v1229, %v1227
        %v1598 = vpack.c.bf16 %v1237, %v1235
        %v1599 = vpack.c.bf16 %v1245, %v1243
        %v1600 = vpack.c.bf16 %v1253, %v1251
        %v1601 = vpack.c.bf16 %v1261, %v1259
        %v1602 = vpack.c.bf16 %v1269, %v1267
        %v1603 = vpack.c.bf16 %v1277, %v1275
        %v1604 = vpack.c.bf16 %v1285, %v1283
        %v1605 = vpack.c.bf16 %v1293, %v1291
        %v1606 = vpack.c.bf16 %v1301, %v1299
        %v1607 = vpack.c.bf16 %v1309, %v1307
        %v1608 = vpack.c.bf16 %v1317, %v1315
        %v1609 = vpack.c.bf16 %v1325, %v1323
        %s1610 = scalar_lea.vmem %s1, 24
        %v1611 = vld [vmem:[%s1610] sm:$0xf]
        %v1612 = vld [vmem:[%s1610 + $0x4] sm:$0x3]
        %v1615 = vunpack.c.l.b16 %v1611
        %v1616 = vunpack.c.l.b16 %v1612
        %v1617 = vpack.c.b16 %v1616, %v1615
        %v1619 = vsel %vm767, %v1594, 0
        %v1622 = vsel %vm767, %v1595, 0
        %v1625 = vsel %vm767, %v1596, 0
        %v1628 = vsel %vm767, %v1597, 0
        %v1631 = vsel %vm767, %v1598, 0
        %v1634 = vsel %vm767, %v1599, 0
        %v1637 = vsel %vm767, %v1600, 0
        %v1640 = vsel %vm767, %v1601, 0
        %v1643 = vsel %vm767, %v1602, 0
        %v1646 = vsel %vm767, %v1603, 0
        %v1649 = vsel %vm767, %v1604, 0
        %v1652 = vsel %vm767, %v1605, 0
        %v1655 = vsel %vm767, %v1606, 0
        %v1658 = vsel %vm767, %v1607, 0
        %v1661 = vsel %vm767, %v1608, 0
        %v1664 = vsel %vm767, %v1609, 0
        %v1667 = vsel %vm816, %v1617, 0
        %1669 = vmatprep.subr.bf16.mxu0 0
        %1670 = vmatpush1.bf16.msra.mxu0 0
        %1671 = vmatprep.subr.bf16.mxu0 0
        %1672 = vmatpush1.bf16.msra.mxu0 0
        %1673 = vmatprep.subr.bf16.mxu0 0
        %1674 = vmatpush1.bf16.msra.mxu0 0
        %1675 = vmatprep.subr.bf16.mxu0 0
        %1676 = vmatpush1.bf16.msra.mxu0 0
        %1677 = vmatprep.subr.bf16.mxu0 0
        %1678 = vmatpush1.bf16.msra.mxu0 0
        %1679 = vmatprep.subr.bf16.mxu0 0
        %1680 = vmatpush1.bf16.msra.mxu0 0
        %1681 = vmatprep.subr.bf16.mxu0 0
        %1682 = vmatpush1.bf16.msra.mxu0 0
        %1683 = vmatprep.subr.bf16.mxu0 0
        %1684 = vmatpush1.bf16.msra.mxu0 %v1667
        %1685 = vmatprep.subr.bf16.mxu0 0
        %1686 = vmatpush2.bf16.msra.mxu0 0
        %1687 = vmatprep.subr.bf16.mxu0 0
        %1688 = vmatpush2.bf16.msra.mxu0 0
        %1689 = vmatprep.subr.bf16.mxu0 0
        %1690 = vmatpush2.bf16.msra.mxu0 0
        %1691 = vmatprep.subr.bf16.mxu0 0
        %1692 = vmatpush2.bf16.msra.mxu0 0
        %1693 = vmatprep.subr.bf16.mxu0 0
        %1694 = vmatpush2.bf16.msra.mxu0 0
        %1695 = vmatprep.subr.bf16.mxu0 0
        %1696 = vmatpush2.bf16.msra.mxu0 0
        %1697 = vmatprep.subr.bf16.mxu0 0
        %1698 = vmatpush2.bf16.msra.mxu0 0
        %1699 = vmatprep.subr.bf16.mxu0 0
        %1700 = vmatpush2.bf16.msra.mxu0 0
        %1701 = vmatprep.mubr.bf16.mxu0 0
        %1702 = vmatmul.mubr.bf16.gmra.mxu0 %v1619
        %v1703 = vpop.f32.mrf.mxu0
        %v1704 = vadd.f32 0.0, %v1703
        %v1705 = vpop.f32.mrf.mxu0
        %v1706 = vpop.f32.mrf.mxu0
        %v1707 = vadd.f32 0.0, %v1706
        %v1708 = vpop.f32.mrf.mxu0
        %1709 = vmatprep.mubr.bf16.mxu0 0
        %1710 = vmatmul.mubr.bf16.gmra.mxu0 %v1622
        %v1711 = vpop.f32.mrf.mxu0
        %v1712 = vadd.f32 0.0, %v1711
        %v1713 = vpop.f32.mrf.mxu0
        %v1714 = vpop.f32.mrf.mxu0
        %v1715 = vadd.f32 0.0, %v1714
        %v1716 = vpop.f32.mrf.mxu0
        %1717 = vmatprep.mubr.bf16.mxu0 0
        %1718 = vmatmul.mubr.bf16.gmra.mxu0 %v1625
        %v1719 = vpop.f32.mrf.mxu0
        %v1720 = vadd.f32 0.0, %v1719
        %v1721 = vpop.f32.mrf.mxu0
        %v1722 = vpop.f32.mrf.mxu0
        %v1723 = vadd.f32 0.0, %v1722
        %v1724 = vpop.f32.mrf.mxu0
        %1725 = vmatprep.mubr.bf16.mxu0 0
        %1726 = vmatmul.mubr.bf16.gmra.mxu0 %v1628
        %v1727 = vpop.f32.mrf.mxu0
        %v1728 = vadd.f32 0.0, %v1727
        %v1729 = vpop.f32.mrf.mxu0
        %v1730 = vpop.f32.mrf.mxu0
        %v1731 = vadd.f32 0.0, %v1730
        %v1732 = vpop.f32.mrf.mxu0
        %1733 = vmatprep.mubr.bf16.mxu0 0
        %1734 = vmatmul.mubr.bf16.gmra.mxu0 %v1631
        %v1735 = vpop.f32.mrf.mxu0
        %v1736 = vadd.f32 0.0, %v1735
        %v1737 = vpop.f32.mrf.mxu0
        %v1738 = vpop.f32.mrf.mxu0
        %v1739 = vadd.f32 0.0, %v1738
        %v1740 = vpop.f32.mrf.mxu0
        %1741 = vmatprep.mubr.bf16.mxu0 0
        %1742 = vmatmul.mubr.bf16.gmra.mxu0 %v1634
        %v1743 = vpop.f32.mrf.mxu0
        %v1744 = vadd.f32 0.0, %v1743
        %v1745 = vpop.f32.mrf.mxu0
        %v1746 = vpop.f32.mrf.mxu0
        %v1747 = vadd.f32 0.0, %v1746
        %v1748 = vpop.f32.mrf.mxu0
        %1749 = vmatprep.mubr.bf16.mxu0 0
        %1750 = vmatmul.mubr.bf16.gmra.mxu0 %v1637
        %v1751 = vpop.f32.mrf.mxu0
        %v1752 = vadd.f32 0.0, %v1751
        %v1753 = vpop.f32.mrf.mxu0
        %v1754 = vpop.f32.mrf.mxu0
        %v1755 = vadd.f32 0.0, %v1754
        %v1756 = vpop.f32.mrf.mxu0
        %1757 = vmatprep.mubr.bf16.mxu0 0
        %1758 = vmatmul.mubr.bf16.gmra.mxu0 %v1640
        %v1759 = vpop.f32.mrf.mxu0
        %v1760 = vadd.f32 0.0, %v1759
        %v1761 = vpop.f32.mrf.mxu0
        %v1762 = vpop.f32.mrf.mxu0
        %v1763 = vadd.f32 0.0, %v1762
        %v1764 = vpop.f32.mrf.mxu0
        %1765 = vmatprep.mubr.bf16.mxu0 0
        %1766 = vmatmul.mubr.bf16.gmra.mxu0 %v1643
        %v1767 = vpop.f32.mrf.mxu0
        %v1768 = vadd.f32 0.0, %v1767
        %v1769 = vpop.f32.mrf.mxu0
        %v1770 = vpop.f32.mrf.mxu0
        %v1771 = vadd.f32 0.0, %v1770
        %v1772 = vpop.f32.mrf.mxu0
        %1773 = vmatprep.mubr.bf16.mxu0 0
        %1774 = vmatmul.mubr.bf16.gmra.mxu0 %v1646
        %v1775 = vpop.f32.mrf.mxu0
        %v1776 = vadd.f32 0.0, %v1775
        %v1777 = vpop.f32.mrf.mxu0
        %v1778 = vpop.f32.mrf.mxu0
        %v1779 = vadd.f32 0.0, %v1778
        %v1780 = vpop.f32.mrf.mxu0
        %1781 = vmatprep.mubr.bf16.mxu0 0
        %1782 = vmatmul.mubr.bf16.gmra.mxu0 %v1649
        %v1783 = vpop.f32.mrf.mxu0
        %v1784 = vadd.f32 0.0, %v1783
        %v1785 = vpop.f32.mrf.mxu0
        %v1786 = vpop.f32.mrf.mxu0
        %v1787 = vadd.f32 0.0, %v1786
        %v1788 = vpop.f32.mrf.mxu0
        %1789 = vmatprep.mubr.bf16.mxu0 0
        %1790 = vmatmul.mubr.bf16.gmra.mxu0 %v1652
        %v1791 = vpop.f32.mrf.mxu0
        %v1792 = vadd.f32 0.0, %v1791
        %v1793 = vpop.f32.mrf.mxu0
        %v1794 = vpop.f32.mrf.mxu0
        %v1795 = vadd.f32 0.0, %v1794
        %v1796 = vpop.f32.mrf.mxu0
        %1797 = vmatprep.mubr.bf16.mxu0 0
        %1798 = vmatmul.mubr.bf16.gmra.mxu0 %v1655
        %v1799 = vpop.f32.mrf.mxu0
        %v1800 = vadd.f32 0.0, %v1799
        %v1801 = vpop.f32.mrf.mxu0
        %v1802 = vpop.f32.mrf.mxu0
        %v1803 = vadd.f32 0.0, %v1802
        %v1804 = vpop.f32.mrf.mxu0
        %1805 = vmatprep.mubr.bf16.mxu0 0
        %1806 = vmatmul.mubr.bf16.gmra.mxu0 %v1658
        %v1807 = vpop.f32.mrf.mxu0
        %v1808 = vadd.f32 0.0, %v1807
        %v1809 = vpop.f32.mrf.mxu0
        %v1810 = vpop.f32.mrf.mxu0
        %v1811 = vadd.f32 0.0, %v1810
        %v1812 = vpop.f32.mrf.mxu0
        %1813 = vmatprep.mubr.bf16.mxu0 0
        %1814 = vmatmul.mubr.bf16.gmra.mxu0 %v1661
        %v1815 = vpop.f32.mrf.mxu0
        %v1816 = vadd.f32 0.0, %v1815
        %v1817 = vpop.f32.mrf.mxu0
        %v1818 = vpop.f32.mrf.mxu0
        %v1819 = vadd.f32 0.0, %v1818
        %v1820 = vpop.f32.mrf.mxu0
        %1821 = vmatprep.mubr.bf16.mxu0 0
        %1822 = vmatmul.mubr.bf16.gmra.mxu0 %v1664
        %v1823 = vpop.f32.mrf.mxu0
        %v1824 = vadd.f32 0.0, %v1823
        %v1825 = vpop.f32.mrf.mxu0
        %v1826 = vpop.f32.mrf.mxu0
        %v1827 = vadd.f32 0.0, %v1826
        %v1828 = vpop.f32.mrf.mxu0
        %1829 = vdwg.mxu0
        %v1830 = vadd.f32 %v1562, %v1704
        %v1831 = vadd.f32 %v1563, %v1707
        %v1832 = vadd.f32 %v1564, %v1712
        %v1833 = vadd.f32 %v1565, %v1715
        %v1834 = vadd.f32 %v1566, %v1720
        %v1835 = vadd.f32 %v1567, %v1723
        %v1836 = vadd.f32 %v1568, %v1728
        %v1837 = vadd.f32 %v1569, %v1731
        %v1838 = vadd.f32 %v1570, %v1736
        %v1839 = vadd.f32 %v1571, %v1739
        %v1840 = vadd.f32 %v1572, %v1744
        %v1841 = vadd.f32 %v1573, %v1747
        %v1842 = vadd.f32 %v1574, %v1752
        %v1843 = vadd.f32 %v1575, %v1755
        %v1844 = vadd.f32 %v1576, %v1760
        %v1845 = vadd.f32 %v1577, %v1763
        %v1846 = vadd.f32 %v1578, %v1768
        %v1847 = vadd.f32 %v1579, %v1771
        %v1848 = vadd.f32 %v1580, %v1776
        %v1849 = vadd.f32 %v1581, %v1779
        %v1850 = vadd.f32 %v1582, %v1784
        %v1851 = vadd.f32 %v1583, %v1787
        %v1852 = vadd.f32 %v1584, %v1792
        %v1853 = vadd.f32 %v1585, %v1795
        %v1854 = vadd.f32 %v1586, %v1800
        %v1855 = vadd.f32 %v1587, %v1803
        %v1856 = vadd.f32 %v1588, %v1808
        %v1857 = vadd.f32 %v1589, %v1811
        %v1858 = vadd.f32 %v1590, %v1816
        %v1859 = vadd.f32 %v1591, %v1819
        %v1860 = vadd.f32 %v1592, %v1824
        %v1861 = vadd.f32 %v1593, %v1827
        %v1862 = vld [vmem:[%s2] sm:$0x1]
        %v1864 = vlaneseq
        %v1865 = vshrl.u32 %v1864, 7
        %v1866 = vsub.s32 0, %v1865
        %v1867 = vrot.slane %v1862, %v1866
        %v1869 = vadd.f32 %v1830, %v1867
        %v1870 = vadd.f32 %v1831, %v1867
        %v1871 = vadd.f32 %v1832, %v1867
        %v1872 = vadd.f32 %v1833, %v1867
        %v1873 = vadd.f32 %v1834, %v1867
        %v1874 = vadd.f32 %v1835, %v1867
        %v1875 = vadd.f32 %v1836, %v1867
        %v1876 = vadd.f32 %v1837, %v1867
        %v1877 = vadd.f32 %v1838, %v1867
        %v1878 = vadd.f32 %v1839, %v1867
        %v1879 = vadd.f32 %v1840, %v1867
        %v1880 = vadd.f32 %v1841, %v1867
        %v1881 = vadd.f32 %v1842, %v1867
        %v1882 = vadd.f32 %v1843, %v1867
        %v1883 = vadd.f32 %v1844, %v1867
        %v1884 = vadd.f32 %v1845, %v1867
        %v1885 = vadd.f32 %v1846, %v1867
        %v1886 = vadd.f32 %v1847, %v1867
        %v1887 = vadd.f32 %v1848, %v1867
        %v1888 = vadd.f32 %v1849, %v1867
        %v1889 = vadd.f32 %v1850, %v1867
        %v1890 = vadd.f32 %v1851, %v1867
        %v1891 = vadd.f32 %v1852, %v1867
        %v1892 = vadd.f32 %v1853, %v1867
        %v1893 = vadd.f32 %v1854, %v1867
        %v1894 = vadd.f32 %v1855, %v1867
        %v1895 = vadd.f32 %v1856, %v1867
        %v1896 = vadd.f32 %v1857, %v1867
        %v1897 = vadd.f32 %v1858, %v1867
        %v1898 = vadd.f32 %v1859, %v1867
        %v1899 = vadd.f32 %v1860, %v1867
        %v1900 = vadd.f32 %v1861, %v1867
        %vm1901 = vcmask 261120
        %v1902 = vsel %vm1901, %v1869, 0.0
        %1903 = vadd.xlane.f32.xlu0 %v1902
        %v1904 = vpop.xlane.xlu0 %1903
        %v1905 = vsel %vm1901, %v1870, 0.0
        %1906 = vadd.xlane.f32.xlu0 %v1905
        %v1907 = vpop.xlane.xlu0 %1906
        %v1908 = vsel %vm1901, %v1871, 0.0
        %1909 = vadd.xlane.f32.xlu0 %v1908
        %v1910 = vpop.xlane.xlu0 %1909
        %v1911 = vsel %vm1901, %v1872, 0.0
        %1912 = vadd.xlane.f32.xlu0 %v1911
        %v1913 = vpop.xlane.xlu0 %1912
        %v1914 = vsel %vm1901, %v1873, 0.0
        %1915 = vadd.xlane.f32.xlu0 %v1914
        %v1916 = vpop.xlane.xlu0 %1915
        %v1917 = vsel %vm1901, %v1874, 0.0
        %1918 = vadd.xlane.f32.xlu0 %v1917
        %v1919 = vpop.xlane.xlu0 %1918
        %v1920 = vsel %vm1901, %v1875, 0.0
        %1921 = vadd.xlane.f32.xlu0 %v1920
        %v1922 = vpop.xlane.xlu0 %1921
        %v1923 = vsel %vm1901, %v1876, 0.0
        %1924 = vadd.xlane.f32.xlu0 %v1923
        %v1925 = vpop.xlane.xlu0 %1924
        %v1926 = vsel %vm1901, %v1877, 0.0
        %1927 = vadd.xlane.f32.xlu0 %v1926
        %v1928 = vpop.xlane.xlu0 %1927
        %v1929 = vsel %vm1901, %v1878, 0.0
        %1930 = vadd.xlane.f32.xlu0 %v1929
        %v1931 = vpop.xlane.xlu0 %1930
        %v1932 = vsel %vm1901, %v1879, 0.0
        %1933 = vadd.xlane.f32.xlu0 %v1932
        %v1934 = vpop.xlane.xlu0 %1933
        %v1935 = vsel %vm1901, %v1880, 0.0
        %1936 = vadd.xlane.f32.xlu0 %v1935
        %v1937 = vpop.xlane.xlu0 %1936
        %v1938 = vsel %vm1901, %v1881, 0.0
        %1939 = vadd.xlane.f32.xlu0 %v1938
        %v1940 = vpop.xlane.xlu0 %1939
        %v1941 = vsel %vm1901, %v1882, 0.0
        %1942 = vadd.xlane.f32.xlu0 %v1941
        %v1943 = vpop.xlane.xlu0 %1942
        %v1944 = vsel %vm1901, %v1883, 0.0
        %1945 = vadd.xlane.f32.xlu0 %v1944
        %v1946 = vpop.xlane.xlu0 %1945
        %v1947 = vsel %vm1901, %v1884, 0.0
        %1948 = vadd.xlane.f32.xlu0 %v1947
        %v1949 = vpop.xlane.xlu0 %1948
        %v1950 = vsel %vm1901, %v1885, 0.0
        %1951 = vadd.xlane.f32.xlu0 %v1950
        %v1952 = vpop.xlane.xlu0 %1951
        %v1953 = vsel %vm1901, %v1886, 0.0
        %1954 = vadd.xlane.f32.xlu0 %v1953
        %v1955 = vpop.xlane.xlu0 %1954
        %v1956 = vsel %vm1901, %v1887, 0.0
        %1957 = vadd.xlane.f32.xlu0 %v1956
        %v1958 = vpop.xlane.xlu0 %1957
        %v1959 = vsel %vm1901, %v1888, 0.0
        %1960 = vadd.xlane.f32.xlu0 %v1959
        %v1961 = vpop.xlane.xlu0 %1960
        %v1962 = vsel %vm1901, %v1889, 0.0
        %1963 = vadd.xlane.f32.xlu0 %v1962
        %v1964 = vpop.xlane.xlu0 %1963
        %v1965 = vsel %vm1901, %v1890, 0.0
        %1966 = vadd.xlane.f32.xlu0 %v1965
        %v1967 = vpop.xlane.xlu0 %1966
        %v1968 = vsel %vm1901, %v1891, 0.0
        %1969 = vadd.xlane.f32.xlu0 %v1968
        %v1970 = vpop.xlane.xlu0 %1969
        %v1971 = vsel %vm1901, %v1892, 0.0
        %1972 = vadd.xlane.f32.xlu0 %v1971
        %v1973 = vpop.xlane.xlu0 %1972
        %v1974 = vsel %vm1901, %v1893, 0.0
        %1975 = vadd.xlane.f32.xlu0 %v1974
        %v1976 = vpop.xlane.xlu0 %1975
        %v1977 = vsel %vm1901, %v1894, 0.0
        %1978 = vadd.xlane.f32.xlu0 %v1977
        %v1979 = vpop.xlane.xlu0 %1978
        %v1980 = vsel %vm1901, %v1895, 0.0
        %1981 = vadd.xlane.f32.xlu0 %v1980
        %v1982 = vpop.xlane.xlu0 %1981
        %v1983 = vsel %vm1901, %v1896, 0.0
        %1984 = vadd.xlane.f32.xlu0 %v1983
        %v1985 = vpop.xlane.xlu0 %1984
        %v1986 = vsel %vm1901, %v1897, 0.0
        %1987 = vadd.xlane.f32.xlu0 %v1986
        %v1988 = vpop.xlane.xlu0 %1987
        %v1989 = vsel %vm1901, %v1898, 0.0
        %1990 = vadd.xlane.f32.xlu0 %v1989
        %v1991 = vpop.xlane.xlu0 %1990
        %v1992 = vsel %vm1901, %v1899, 0.0
        %1993 = vadd.xlane.f32.xlu0 %v1992
        %v1994 = vpop.xlane.xlu0 %1993
        %v1995 = vsel %vm1901, %v1900, 0.0
        %1996 = vadd.xlane.f32.xlu0 %v1995
        %v1997 = vpop.xlane.xlu0 %1996
        %v1998 = vrcp.pop 32.0
        %v1999 = vmul.f32 %v1904, %v1998
        %v2000 = vmul.f32 %v1907, %v1998
        %v2001 = vmul.f32 %v1910, %v1998
        %v2002 = vmul.f32 %v1913, %v1998
        %v2003 = vmul.f32 %v1916, %v1998
        %v2004 = vmul.f32 %v1919, %v1998
        %v2005 = vmul.f32 %v1922, %v1998
        %v2006 = vmul.f32 %v1925, %v1998
        %v2007 = vmul.f32 %v1928, %v1998
        %v2008 = vmul.f32 %v1931, %v1998
        %v2009 = vmul.f32 %v1934, %v1998
        %v2010 = vmul.f32 %v1937, %v1998
        %v2011 = vmul.f32 %v1940, %v1998
        %v2012 = vmul.f32 %v1943, %v1998
        %v2013 = vmul.f32 %v1946, %v1998
        %v2014 = vmul.f32 %v1949, %v1998
        %v2015 = vmul.f32 %v1952, %v1998
        %v2016 = vmul.f32 %v1955, %v1998
        %v2017 = vmul.f32 %v1958, %v1998
        %v2018 = vmul.f32 %v1961, %v1998
        %v2019 = vmul.f32 %v1964, %v1998
        %v2020 = vmul.f32 %v1967, %v1998
        %v2021 = vmul.f32 %v1970, %v1998
        %v2022 = vmul.f32 %v1973, %v1998
        %v2023 = vmul.f32 %v1976, %v1998
        %v2024 = vmul.f32 %v1979, %v1998
        %v2025 = vmul.f32 %v1982, %v1998
        %v2026 = vmul.f32 %v1985, %v1998
        %v2027 = vmul.f32 %v1988, %v1998
        %v2028 = vmul.f32 %v1991, %v1998
        %v2029 = vmul.f32 %v1994, %v1998
        %v2030 = vmul.f32 %v1997, %v1998
        %v2031 = vsub.f32 %v1869, %v1999
        %v2032 = vsub.f32 %v1870, %v2000
        %v2033 = vsub.f32 %v1871, %v2001
        %v2034 = vsub.f32 %v1872, %v2002
        %v2035 = vsub.f32 %v1873, %v2003
        %v2036 = vsub.f32 %v1874, %v2004
        %v2037 = vsub.f32 %v1875, %v2005
        %v2038 = vsub.f32 %v1876, %v2006
        %v2039 = vsub.f32 %v1877, %v2007
        %v2040 = vsub.f32 %v1878, %v2008
        %v2041 = vsub.f32 %v1879, %v2009
        %v2042 = vsub.f32 %v1880, %v2010
        %v2043 = vsub.f32 %v1881, %v2011
        %v2044 = vsub.f32 %v1882, %v2012
        %v2045 = vsub.f32 %v1883, %v2013
        %v2046 = vsub.f32 %v1884, %v2014
        %v2047 = vsub.f32 %v1885, %v2015
        %v2048 = vsub.f32 %v1886, %v2016
        %v2049 = vsub.f32 %v1887, %v2017
        %v2050 = vsub.f32 %v1888, %v2018
        %v2051 = vsub.f32 %v1889, %v2019
        %v2052 = vsub.f32 %v1890, %v2020
        %v2053 = vsub.f32 %v1891, %v2021
        %v2054 = vsub.f32 %v1892, %v2022
        %v2055 = vsub.f32 %v1893, %v2023
        %v2056 = vsub.f32 %v1894, %v2024
        %v2057 = vsub.f32 %v1895, %v2025
        %v2058 = vsub.f32 %v1896, %v2026
        %v2059 = vsub.f32 %v1897, %v2027
        %v2060 = vsub.f32 %v1898, %v2028
        %v2061 = vsub.f32 %v1899, %v2029
        %v2062 = vsub.f32 %v1900, %v2030
        %v2063 = vmul.f32 %v2031, %v2031
        %v2064 = vmul.f32 %v2032, %v2032
        %v2065 = vmul.f32 %v2033, %v2033
        %v2066 = vmul.f32 %v2034, %v2034
        %v2067 = vmul.f32 %v2035, %v2035
        %v2068 = vmul.f32 %v2036, %v2036
        %v2069 = vmul.f32 %v2037, %v2037
        %v2070 = vmul.f32 %v2038, %v2038
        %v2071 = vmul.f32 %v2039, %v2039
        %v2072 = vmul.f32 %v2040, %v2040
        %v2073 = vmul.f32 %v2041, %v2041
        %v2074 = vmul.f32 %v2042, %v2042
        %v2075 = vmul.f32 %v2043, %v2043
        %v2076 = vmul.f32 %v2044, %v2044
        %v2077 = vmul.f32 %v2045, %v2045
        %v2078 = vmul.f32 %v2046, %v2046
        %v2079 = vmul.f32 %v2047, %v2047
        %v2080 = vmul.f32 %v2048, %v2048
        %v2081 = vmul.f32 %v2049, %v2049
        %v2082 = vmul.f32 %v2050, %v2050
        %v2083 = vmul.f32 %v2051, %v2051
        %v2084 = vmul.f32 %v2052, %v2052
        %v2085 = vmul.f32 %v2053, %v2053
        %v2086 = vmul.f32 %v2054, %v2054
        %v2087 = vmul.f32 %v2055, %v2055
        %v2088 = vmul.f32 %v2056, %v2056
        %v2089 = vmul.f32 %v2057, %v2057
        %v2090 = vmul.f32 %v2058, %v2058
        %v2091 = vmul.f32 %v2059, %v2059
        %v2092 = vmul.f32 %v2060, %v2060
        %v2093 = vmul.f32 %v2061, %v2061
        %v2094 = vmul.f32 %v2062, %v2062
        %v2095 = vsel %vm1901, %v2063, 0.0
        %2096 = vadd.xlane.f32.xlu0 %v2095
        %v2097 = vpop.xlane.xlu0 %2096
        %v2098 = vsel %vm1901, %v2064, 0.0
        %2099 = vadd.xlane.f32.xlu0 %v2098
        %v2100 = vpop.xlane.xlu0 %2099
        %v2101 = vsel %vm1901, %v2065, 0.0
        %2102 = vadd.xlane.f32.xlu0 %v2101
        %v2103 = vpop.xlane.xlu0 %2102
        %v2104 = vsel %vm1901, %v2066, 0.0
        %2105 = vadd.xlane.f32.xlu0 %v2104
        %v2106 = vpop.xlane.xlu0 %2105
        %v2107 = vsel %vm1901, %v2067, 0.0
        %2108 = vadd.xlane.f32.xlu0 %v2107
        %v2109 = vpop.xlane.xlu0 %2108
        %v2110 = vsel %vm1901, %v2068, 0.0
        %2111 = vadd.xlane.f32.xlu0 %v2110
        %v2112 = vpop.xlane.xlu0 %2111
        %v2113 = vsel %vm1901, %v2069, 0.0
        %2114 = vadd.xlane.f32.xlu0 %v2113
        %v2115 = vpop.xlane.xlu0 %2114
        %v2116 = vsel %vm1901, %v2070, 0.0
        %2117 = vadd.xlane.f32.xlu0 %v2116
        %v2118 = vpop.xlane.xlu0 %2117
        %v2119 = vsel %vm1901, %v2071, 0.0
        %2120 = vadd.xlane.f32.xlu0 %v2119
        %v2121 = vpop.xlane.xlu0 %2120
        %v2122 = vsel %vm1901, %v2072, 0.0
        %2123 = vadd.xlane.f32.xlu0 %v2122
        %v2124 = vpop.xlane.xlu0 %2123
        %v2125 = vsel %vm1901, %v2073, 0.0
        %2126 = vadd.xlane.f32.xlu0 %v2125
        %v2127 = vpop.xlane.xlu0 %2126
        %v2128 = vsel %vm1901, %v2074, 0.0
        %2129 = vadd.xlane.f32.xlu0 %v2128
        %v2130 = vpop.xlane.xlu0 %2129
        %v2131 = vsel %vm1901, %v2075, 0.0
        %2132 = vadd.xlane.f32.xlu0 %v2131
        %v2133 = vpop.xlane.xlu0 %2132
        %v2134 = vsel %vm1901, %v2076, 0.0
        %2135 = vadd.xlane.f32.xlu0 %v2134
        %v2136 = vpop.xlane.xlu0 %2135
        %v2137 = vsel %vm1901, %v2077, 0.0
        %2138 = vadd.xlane.f32.xlu0 %v2137
        %v2139 = vpop.xlane.xlu0 %2138
        %v2140 = vsel %vm1901, %v2078, 0.0
        %2141 = vadd.xlane.f32.xlu0 %v2140
        %v2142 = vpop.xlane.xlu0 %2141
        %v2143 = vsel %vm1901, %v2079, 0.0
        %2144 = vadd.xlane.f32.xlu0 %v2143
        %v2145 = vpop.xlane.xlu0 %2144
        %v2146 = vsel %vm1901, %v2080, 0.0
        %2147 = vadd.xlane.f32.xlu0 %v2146
        %v2148 = vpop.xlane.xlu0 %2147
        %v2149 = vsel %vm1901, %v2081, 0.0
        %2150 = vadd.xlane.f32.xlu0 %v2149
        %v2151 = vpop.xlane.xlu0 %2150
        %v2152 = vsel %vm1901, %v2082, 0.0
        %2153 = vadd.xlane.f32.xlu0 %v2152
        %v2154 = vpop.xlane.xlu0 %2153
        %v2155 = vsel %vm1901, %v2083, 0.0
        %2156 = vadd.xlane.f32.xlu0 %v2155
        %v2157 = vpop.xlane.xlu0 %2156
        %v2158 = vsel %vm1901, %v2084, 0.0
        %2159 = vadd.xlane.f32.xlu0 %v2158
        %v2160 = vpop.xlane.xlu0 %2159
        %v2161 = vsel %vm1901, %v2085, 0.0
        %2162 = vadd.xlane.f32.xlu0 %v2161
        %v2163 = vpop.xlane.xlu0 %2162
        %v2164 = vsel %vm1901, %v2086, 0.0
        %2165 = vadd.xlane.f32.xlu0 %v2164
        %v2166 = vpop.xlane.xlu0 %2165
        %v2167 = vsel %vm1901, %v2087, 0.0
        %2168 = vadd.xlane.f32.xlu0 %v2167
        %v2169 = vpop.xlane.xlu0 %2168
        %v2170 = vsel %vm1901, %v2088, 0.0
        %2171 = vadd.xlane.f32.xlu0 %v2170
        %v2172 = vpop.xlane.xlu0 %2171
        %v2173 = vsel %vm1901, %v2089, 0.0
        %2174 = vadd.xlane.f32.xlu0 %v2173
        %v2175 = vpop.xlane.xlu0 %2174
        %v2176 = vsel %vm1901, %v2090, 0.0
        %2177 = vadd.xlane.f32.xlu0 %v2176
        %v2178 = vpop.xlane.xlu0 %2177
        %v2179 = vsel %vm1901, %v2091, 0.0
        %2180 = vadd.xlane.f32.xlu0 %v2179
        %v2181 = vpop.xlane.xlu0 %2180
        %v2182 = vsel %vm1901, %v2092, 0.0
        %2183 = vadd.xlane.f32.xlu0 %v2182
        %v2184 = vpop.xlane.xlu0 %2183
        %v2185 = vsel %vm1901, %v2093, 0.0
        %2186 = vadd.xlane.f32.xlu0 %v2185
        %v2187 = vpop.xlane.xlu0 %2186
        %v2188 = vsel %vm1901, %v2094, 0.0
        %2189 = vadd.xlane.f32.xlu0 %v2188
        %v2190 = vpop.xlane.xlu0 %2189
        %v2191 = vmul.f32 %v2097, %v1998
        %v2192 = vmul.f32 %v2100, %v1998
        %v2193 = vmul.f32 %v2103, %v1998
        %v2194 = vmul.f32 %v2106, %v1998
        %v2195 = vmul.f32 %v2109, %v1998
        %v2196 = vmul.f32 %v2112, %v1998
        %v2197 = vmul.f32 %v2115, %v1998
        %v2198 = vmul.f32 %v2118, %v1998
        %v2199 = vmul.f32 %v2121, %v1998
        %v2200 = vmul.f32 %v2124, %v1998
        %v2201 = vmul.f32 %v2127, %v1998
        %v2202 = vmul.f32 %v2130, %v1998
        %v2203 = vmul.f32 %v2133, %v1998
        %v2204 = vmul.f32 %v2136, %v1998
        %v2205 = vmul.f32 %v2139, %v1998
        %v2206 = vmul.f32 %v2142, %v1998
        %v2207 = vmul.f32 %v2145, %v1998
        %v2208 = vmul.f32 %v2148, %v1998
        %v2209 = vmul.f32 %v2151, %v1998
        %v2210 = vmul.f32 %v2154, %v1998
        %v2211 = vmul.f32 %v2157, %v1998
        %v2212 = vmul.f32 %v2160, %v1998
        %v2213 = vmul.f32 %v2163, %v1998
        %v2214 = vmul.f32 %v2166, %v1998
        %v2215 = vmul.f32 %v2169, %v1998
        %v2216 = vmul.f32 %v2172, %v1998
        %v2217 = vmul.f32 %v2175, %v1998
        %v2218 = vmul.f32 %v2178, %v1998
        %v2219 = vmul.f32 %v2181, %v1998
        %v2220 = vmul.f32 %v2184, %v1998
        %v2221 = vmul.f32 %v2187, %v1998
        %v2222 = vmul.f32 %v2190, %v1998
        %v2223 = vadd.f32 %v2191, 1e-06
        %v2224 = vadd.f32 %v2192, 1e-06
        %v2225 = vadd.f32 %v2193, 1e-06
        %v2226 = vadd.f32 %v2194, 1e-06
        %v2227 = vadd.f32 %v2195, 1e-06
        %v2228 = vadd.f32 %v2196, 1e-06
        %v2229 = vadd.f32 %v2197, 1e-06
        %v2230 = vadd.f32 %v2198, 1e-06
        %v2231 = vadd.f32 %v2199, 1e-06
        %v2232 = vadd.f32 %v2200, 1e-06
        %v2233 = vadd.f32 %v2201, 1e-06
        %v2234 = vadd.f32 %v2202, 1e-06
        %v2235 = vadd.f32 %v2203, 1e-06
        %v2236 = vadd.f32 %v2204, 1e-06
        %v2237 = vadd.f32 %v2205, 1e-06
        %v2238 = vadd.f32 %v2206, 1e-06
        %v2239 = vadd.f32 %v2207, 1e-06
        %v2240 = vadd.f32 %v2208, 1e-06
        %v2241 = vadd.f32 %v2209, 1e-06
        %v2242 = vadd.f32 %v2210, 1e-06
        %v2243 = vadd.f32 %v2211, 1e-06
        %v2244 = vadd.f32 %v2212, 1e-06
        %v2245 = vadd.f32 %v2213, 1e-06
        %v2246 = vadd.f32 %v2214, 1e-06
        %v2247 = vadd.f32 %v2215, 1e-06
        %v2248 = vadd.f32 %v2216, 1e-06
        %v2249 = vadd.f32 %v2217, 1e-06
        %v2250 = vadd.f32 %v2218, 1e-06
        %v2251 = vadd.f32 %v2219, 1e-06
        %v2252 = vadd.f32 %v2220, 1e-06
        %v2253 = vadd.f32 %v2221, 1e-06
        %v2254 = vadd.f32 %v2222, 1e-06
        %v2255 = vrsqrt.pop %v2223
        %v2256 = vrsqrt.pop %v2224
        %v2257 = vrsqrt.pop %v2225
        %v2258 = vrsqrt.pop %v2226
        %v2259 = vrsqrt.pop %v2227
        %v2260 = vrsqrt.pop %v2228
        %v2261 = vrsqrt.pop %v2229
        %v2262 = vrsqrt.pop %v2230
        %v2263 = vrsqrt.pop %v2231
        %v2264 = vrsqrt.pop %v2232
        %v2265 = vrsqrt.pop %v2233
        %v2266 = vrsqrt.pop %v2234
        %v2267 = vrsqrt.pop %v2235
        %v2268 = vrsqrt.pop %v2236
        %v2269 = vrsqrt.pop %v2237
        %v2270 = vrsqrt.pop %v2238
        %v2271 = vrsqrt.pop %v2239
        %v2272 = vrsqrt.pop %v2240
        %v2273 = vrsqrt.pop %v2241
        %v2274 = vrsqrt.pop %v2242
        %v2275 = vrsqrt.pop %v2243
        %v2276 = vrsqrt.pop %v2244
        %v2277 = vrsqrt.pop %v2245
        %v2278 = vrsqrt.pop %v2246
        %v2279 = vrsqrt.pop %v2247
        %v2280 = vrsqrt.pop %v2248
        %v2281 = vrsqrt.pop %v2249
        %v2282 = vrsqrt.pop %v2250
        %v2283 = vrsqrt.pop %v2251
        %v2284 = vrsqrt.pop %v2252
        %v2285 = vrsqrt.pop %v2253
        %v2286 = vrsqrt.pop %v2254
        %v2287 = vmul.f32 %v2031, %v2255
        %v2288 = vmul.f32 %v2032, %v2256
        %v2289 = vmul.f32 %v2033, %v2257
        %v2290 = vmul.f32 %v2034, %v2258
        %v2291 = vmul.f32 %v2035, %v2259
        %v2292 = vmul.f32 %v2036, %v2260
        %v2293 = vmul.f32 %v2037, %v2261
        %v2294 = vmul.f32 %v2038, %v2262
        %v2295 = vmul.f32 %v2039, %v2263
        %v2296 = vmul.f32 %v2040, %v2264
        %v2297 = vmul.f32 %v2041, %v2265
        %v2298 = vmul.f32 %v2042, %v2266
        %v2299 = vmul.f32 %v2043, %v2267
        %v2300 = vmul.f32 %v2044, %v2268
        %v2301 = vmul.f32 %v2045, %v2269
        %v2302 = vmul.f32 %v2046, %v2270
        %v2303 = vmul.f32 %v2047, %v2271
        %v2304 = vmul.f32 %v2048, %v2272
        %v2305 = vmul.f32 %v2049, %v2273
        %v2306 = vmul.f32 %v2050, %v2274
        %v2307 = vmul.f32 %v2051, %v2275
        %v2308 = vmul.f32 %v2052, %v2276
        %v2309 = vmul.f32 %v2053, %v2277
        %v2310 = vmul.f32 %v2054, %v2278
        %v2311 = vmul.f32 %v2055, %v2279
        %v2312 = vmul.f32 %v2056, %v2280
        %v2313 = vmul.f32 %v2057, %v2281
        %v2314 = vmul.f32 %v2058, %v2282
        %v2315 = vmul.f32 %v2059, %v2283
        %v2316 = vmul.f32 %v2060, %v2284
        %v2317 = vmul.f32 %v2061, %v2285
        %v2318 = vmul.f32 %v2062, %v2286
        %v2319 = vld [vmem:[%s3] sm:$0x1]
        %v2321 = vlaneseq
        %v2322 = vshrl.u32 %v2321, 7
        %v2323 = vsub.s32 0, %v2322
        %v2324 = vrot.slane %v2319, %v2323
        %v2326 = vmul.f32 %v2287, %v2324
        %v2327 = vmul.f32 %v2288, %v2324
        %v2328 = vmul.f32 %v2289, %v2324
        %v2329 = vmul.f32 %v2290, %v2324
        %v2330 = vmul.f32 %v2291, %v2324
        %v2331 = vmul.f32 %v2292, %v2324
        %v2332 = vmul.f32 %v2293, %v2324
        %v2333 = vmul.f32 %v2294, %v2324
        %v2334 = vmul.f32 %v2295, %v2324
        %v2335 = vmul.f32 %v2296, %v2324
        %v2336 = vmul.f32 %v2297, %v2324
        %v2337 = vmul.f32 %v2298, %v2324
        %v2338 = vmul.f32 %v2299, %v2324
        %v2339 = vmul.f32 %v2300, %v2324
        %v2340 = vmul.f32 %v2301, %v2324
        %v2341 = vmul.f32 %v2302, %v2324
        %v2342 = vmul.f32 %v2303, %v2324
        %v2343 = vmul.f32 %v2304, %v2324
        %v2344 = vmul.f32 %v2305, %v2324
        %v2345 = vmul.f32 %v2306, %v2324
        %v2346 = vmul.f32 %v2307, %v2324
        %v2347 = vmul.f32 %v2308, %v2324
        %v2348 = vmul.f32 %v2309, %v2324
        %v2349 = vmul.f32 %v2310, %v2324
        %v2350 = vmul.f32 %v2311, %v2324
        %v2351 = vmul.f32 %v2312, %v2324
        %v2352 = vmul.f32 %v2313, %v2324
        %v2353 = vmul.f32 %v2314, %v2324
        %v2354 = vmul.f32 %v2315, %v2324
        %v2355 = vmul.f32 %v2316, %v2324
        %v2356 = vmul.f32 %v2317, %v2324
        %v2357 = vmul.f32 %v2318, %v2324
        %v2358 = vld [vmem:[%s4] sm:$0x1]
        %v2360 = vlaneseq
        %v2361 = vshrl.u32 %v2360, 7
        %v2362 = vsub.s32 0, %v2361
        %v2363 = vrot.slane %v2358, %v2362
        %v2365 = vadd.f32 %v2326, %v2363
        %v2366 = vadd.f32 %v2327, %v2363
        %v2367 = vadd.f32 %v2328, %v2363
        %v2368 = vadd.f32 %v2329, %v2363
        %v2369 = vadd.f32 %v2330, %v2363
        %v2370 = vadd.f32 %v2331, %v2363
        %v2371 = vadd.f32 %v2332, %v2363
        %v2372 = vadd.f32 %v2333, %v2363
        %v2373 = vadd.f32 %v2334, %v2363
        %v2374 = vadd.f32 %v2335, %v2363
        %v2375 = vadd.f32 %v2336, %v2363
        %v2376 = vadd.f32 %v2337, %v2363
        %v2377 = vadd.f32 %v2338, %v2363
        %v2378 = vadd.f32 %v2339, %v2363
        %v2379 = vadd.f32 %v2340, %v2363
        %v2380 = vadd.f32 %v2341, %v2363
        %v2381 = vadd.f32 %v2342, %v2363
        %v2382 = vadd.f32 %v2343, %v2363
        %v2383 = vadd.f32 %v2344, %v2363
        %v2384 = vadd.f32 %v2345, %v2363
        %v2385 = vadd.f32 %v2346, %v2363
        %v2386 = vadd.f32 %v2347, %v2363
        %v2387 = vadd.f32 %v2348, %v2363
        %v2388 = vadd.f32 %v2349, %v2363
        %v2389 = vadd.f32 %v2350, %v2363
        %v2390 = vadd.f32 %v2351, %v2363
        %v2391 = vadd.f32 %v2352, %v2363
        %v2392 = vadd.f32 %v2353, %v2363
        %v2393 = vadd.f32 %v2354, %v2363
        %v2394 = vadd.f32 %v2355, %v2363
        %v2395 = vadd.f32 %v2356, %v2363
        %v2396 = vadd.f32 %v2357, %v2363
        %2397 = vst.msk [vmem:[%s551] sm:$0xff] %vm1901, %v2365
        %2398 = vst.msk [vmem:[%s551 + $0x8] sm:$0xff] %vm1901, %v2366
        %2399 = vst.msk [vmem:[%s551 + $0x10] sm:$0xff] %vm1901, %v2367
        %2400 = vst.msk [vmem:[%s551 + $0x18] sm:$0xff] %vm1901, %v2368
        %2401 = vst.msk [vmem:[%s551 + $0x20] sm:$0xff] %vm1901, %v2369
        %2402 = vst.msk [vmem:[%s551 + $0x28] sm:$0xff] %vm1901, %v2370
        %2403 = vst.msk [vmem:[%s551 + $0x30] sm:$0xff] %vm1901, %v2371
        %2404 = vst.msk [vmem:[%s551 + $0x38] sm:$0xff] %vm1901, %v2372
        %2405 = vst.msk [vmem:[%s551 + $0x40] sm:$0xff] %vm1901, %v2373
        %2406 = vst.msk [vmem:[%s551 + $0x48] sm:$0xff] %vm1901, %v2374
        %2407 = vst.msk [vmem:[%s551 + $0x50] sm:$0xff] %vm1901, %v2375
        %2408 = vst.msk [vmem:[%s551 + $0x58] sm:$0xff] %vm1901, %v2376
        %2409 = vst.msk [vmem:[%s551 + $0x60] sm:$0xff] %vm1901, %v2377
        %2410 = vst.msk [vmem:[%s551 + $0x68] sm:$0xff] %vm1901, %v2378
        %2411 = vst.msk [vmem:[%s551 + $0x70] sm:$0xff] %vm1901, %v2379
        %2412 = vst.msk [vmem:[%s551 + $0x78] sm:$0xff] %vm1901, %v2380
        %2413 = vst.msk [vmem:[%s551 + $0x80] sm:$0xff] %vm1901, %v2381
        %2414 = vst.msk [vmem:[%s551 + $0x88] sm:$0xff] %vm1901, %v2382
        %2415 = vst.msk [vmem:[%s551 + $0x90] sm:$0xff] %vm1901, %v2383
        %2416 = vst.msk [vmem:[%s551 + $0x98] sm:$0xff] %vm1901, %v2384
        %2417 = vst.msk [vmem:[%s551 + $0xa0] sm:$0xff] %vm1901, %v2385
        %2418 = vst.msk [vmem:[%s551 + $0xa8] sm:$0xff] %vm1901, %v2386
        %2419 = vst.msk [vmem:[%s551 + $0xb0] sm:$0xff] %vm1901, %v2387
        %2420 = vst.msk [vmem:[%s551 + $0xb8] sm:$0xff] %vm1901, %v2388
        %2421 = vst.msk [vmem:[%s551 + $0xc0] sm:$0xff] %vm1901, %v2389
        %2422 = vst.msk [vmem:[%s551 + $0xc8] sm:$0xff] %vm1901, %v2390
        %2423 = vst.msk [vmem:[%s551 + $0xd0] sm:$0xff] %vm1901, %v2391
        %2424 = vst.msk [vmem:[%s551 + $0xd8] sm:$0xff] %vm1901, %v2392
        %2425 = vst.msk [vmem:[%s551 + $0xe0] sm:$0xff] %vm1901, %v2393
        %2426 = vst.msk [vmem:[%s551 + $0xe8] sm:$0xff] %vm1901, %v2394
        %2427 = vst.msk [vmem:[%s551 + $0xf0] sm:$0xff] %vm1901, %v2395
        %2428 = vst.msk [vmem:[%s551 + $0xf8] sm:$0xff] %vm1901, %v2396
        %v2429 = vld [vmem:[%s551] ss:$2 sm:$0xff]
        %s2430 = scalar_lea.vmem %s551, 16 [#allocation2]
        %v2431 = vld [vmem:[%s2430] ss:$2 sm:$0xff]
        %s2432 = scalar_lea.vmem %s551, 32 [#allocation2]
        %v2433 = vld [vmem:[%s2432] ss:$2 sm:$0xff]
        %s2434 = scalar_lea.vmem %s551, 48 [#allocation2]
        %v2435 = vld [vmem:[%s2434] ss:$2 sm:$0xff]
        %s2436 = scalar_lea.vmem %s551, 64 [#allocation2]
        %v2437 = vld [vmem:[%s2436] ss:$2 sm:$0xff]
        %s2438 = scalar_lea.vmem %s551, 80 [#allocation2]
        %v2439 = vld [vmem:[%s2438] ss:$2 sm:$0xff]
        %s2440 = scalar_lea.vmem %s551, 96 [#allocation2]
        %v2441 = vld [vmem:[%s2440] ss:$2 sm:$0xff]
        %s2442 = scalar_lea.vmem %s551, 112 [#allocation2]
        %v2443 = vld [vmem:[%s2442] ss:$2 sm:$0xff]
        %s2444 = scalar_lea.vmem %s551, 128 [#allocation2]
        %v2445 = vld [vmem:[%s2444] ss:$2 sm:$0xff]
        %s2446 = scalar_lea.vmem %s551, 144 [#allocation2]
        %v2447 = vld [vmem:[%s2446] ss:$2 sm:$0xff]
        %s2448 = scalar_lea.vmem %s551, 160 [#allocation2]
        %v2449 = vld [vmem:[%s2448] ss:$2 sm:$0xff]
        %s2450 = scalar_lea.vmem %s551, 176 [#allocation2]
        %v2451 = vld [vmem:[%s2450] ss:$2 sm:$0xff]
        %s2452 = scalar_lea.vmem %s551, 192 [#allocation2]
        %v2453 = vld [vmem:[%s2452] ss:$2 sm:$0xff]
        %s2454 = scalar_lea.vmem %s551, 208 [#allocation2]
        %v2455 = vld [vmem:[%s2454] ss:$2 sm:$0xff]
        %s2456 = scalar_lea.vmem %s551, 224 [#allocation2]
        %v2457 = vld [vmem:[%s2456] ss:$2 sm:$0xff]
        %s2458 = scalar_lea.vmem %s551, 240 [#allocation2]
        %v2459 = vld [vmem:[%s2458] ss:$2 sm:$0xff]
        %v2460 = vsel %vm1901, %v2429, 0.0
        %2461 = vadd.xlane.f32.xlu0 %v2460
        %v2462 = vpop.xlane.xlu0 %2461
        %v2463 = vsel %vm1901, %v2431, 0.0
        %2464 = vadd.xlane.f32.xlu0 %v2463
        %v2465 = vpop.xlane.xlu0 %2464
        %v2466 = vsel %vm1901, %v2433, 0.0
        %2467 = vadd.xlane.f32.xlu0 %v2466
        %v2468 = vpop.xlane.xlu0 %2467
        %v2469 = vsel %vm1901, %v2435, 0.0
        %2470 = vadd.xlane.f32.xlu0 %v2469
        %v2471 = vpop.xlane.xlu0 %2470
        %v2472 = vsel %vm1901, %v2437, 0.0
        %2473 = vadd.xlane.f32.xlu0 %v2472
        %v2474 = vpop.xlane.xlu0 %2473
        %v2475 = vsel %vm1901, %v2439, 0.0
        %2476 = vadd.xlane.f32.xlu0 %v2475
        %v2477 = vpop.xlane.xlu0 %2476
        %v2478 = vsel %vm1901, %v2441, 0.0
        %2479 = vadd.xlane.f32.xlu0 %v2478
        %v2480 = vpop.xlane.xlu0 %2479
        %v2481 = vsel %vm1901, %v2443, 0.0
        %2482 = vadd.xlane.f32.xlu0 %v2481
        %v2483 = vpop.xlane.xlu0 %2482
        %v2484 = vsel %vm1901, %v2445, 0.0
        %2485 = vadd.xlane.f32.xlu0 %v2484
        %v2486 = vpop.xlane.xlu0 %2485
        %v2487 = vsel %vm1901, %v2447, 0.0
        %2488 = vadd.xlane.f32.xlu0 %v2487
        %v2489 = vpop.xlane.xlu0 %2488
        %v2490 = vsel %vm1901, %v2449, 0.0
        %2491 = vadd.xlane.f32.xlu0 %v2490
        %v2492 = vpop.xlane.xlu0 %2491
        %v2493 = vsel %vm1901, %v2451, 0.0
        %2494 = vadd.xlane.f32.xlu0 %v2493
        %v2495 = vpop.xlane.xlu0 %2494
        %v2496 = vsel %vm1901, %v2453, 0.0
        %2497 = vadd.xlane.f32.xlu0 %v2496
        %v2498 = vpop.xlane.xlu0 %2497
        %v2499 = vsel %vm1901, %v2455, 0.0
        %2500 = vadd.xlane.f32.xlu0 %v2499
        %v2501 = vpop.xlane.xlu0 %2500
        %v2502 = vsel %vm1901, %v2457, 0.0
        %2503 = vadd.xlane.f32.xlu0 %v2502
        %v2504 = vpop.xlane.xlu0 %2503
        %v2505 = vsel %vm1901, %v2459, 0.0
        %2506 = vadd.xlane.f32.xlu0 %v2505
        %v2507 = vpop.xlane.xlu0 %2506
        %v2508 = vmul.f32 %v2462, %v1998
        %v2509 = vmul.f32 %v2465, %v1998
        %v2510 = vmul.f32 %v2468, %v1998
        %v2511 = vmul.f32 %v2471, %v1998
        %v2512 = vmul.f32 %v2474, %v1998
        %v2513 = vmul.f32 %v2477, %v1998
        %v2514 = vmul.f32 %v2480, %v1998
        %v2515 = vmul.f32 %v2483, %v1998
        %v2516 = vmul.f32 %v2486, %v1998
        %v2517 = vmul.f32 %v2489, %v1998
        %v2518 = vmul.f32 %v2492, %v1998
        %v2519 = vmul.f32 %v2495, %v1998
        %v2520 = vmul.f32 %v2498, %v1998
        %v2521 = vmul.f32 %v2501, %v1998
        %v2522 = vmul.f32 %v2504, %v1998
        %v2523 = vmul.f32 %v2507, %v1998
        %v2524 = vsub.f32 %v2429, %v2508
        %v2525 = vsub.f32 %v2431, %v2509
        %v2526 = vsub.f32 %v2433, %v2510
        %v2527 = vsub.f32 %v2435, %v2511
        %v2528 = vsub.f32 %v2437, %v2512
        %v2529 = vsub.f32 %v2439, %v2513
        %v2530 = vsub.f32 %v2441, %v2514
        %v2531 = vsub.f32 %v2443, %v2515
        %v2532 = vsub.f32 %v2445, %v2516
        %v2533 = vsub.f32 %v2447, %v2517
        %v2534 = vsub.f32 %v2449, %v2518
        %v2535 = vsub.f32 %v2451, %v2519
        %v2536 = vsub.f32 %v2453, %v2520
        %v2537 = vsub.f32 %v2455, %v2521
        %v2538 = vsub.f32 %v2457, %v2522
        %v2539 = vsub.f32 %v2459, %v2523
        %v2540 = vmul.f32 %v2524, %v2524
        %v2541 = vmul.f32 %v2525, %v2525
        %v2542 = vmul.f32 %v2526, %v2526
        %v2543 = vmul.f32 %v2527, %v2527
        %v2544 = vmul.f32 %v2528, %v2528
        %v2545 = vmul.f32 %v2529, %v2529
        %v2546 = vmul.f32 %v2530, %v2530
        %v2547 = vmul.f32 %v2531, %v2531
        %v2548 = vmul.f32 %v2532, %v2532
        %v2549 = vmul.f32 %v2533, %v2533
        %v2550 = vmul.f32 %v2534, %v2534
        %v2551 = vmul.f32 %v2535, %v2535
        %v2552 = vmul.f32 %v2536, %v2536
        %v2553 = vmul.f32 %v2537, %v2537
        %v2554 = vmul.f32 %v2538, %v2538
        %v2555 = vmul.f32 %v2539, %v2539
        %v2556 = vsel %vm1901, %v2540, 0.0
        %2557 = vadd.xlane.f32.xlu0 %v2556
        %v2558 = vpop.xlane.xlu0 %2557
        %v2559 = vsel %vm1901, %v2541, 0.0
        %2560 = vadd.xlane.f32.xlu0 %v2559
        %v2561 = vpop.xlane.xlu0 %2560
        %v2562 = vsel %vm1901, %v2542, 0.0
        %2563 = vadd.xlane.f32.xlu0 %v2562
        %v2564 = vpop.xlane.xlu0 %2563
        %v2565 = vsel %vm1901, %v2543, 0.0
        %2566 = vadd.xlane.f32.xlu0 %v2565
        %v2567 = vpop.xlane.xlu0 %2566
        %v2568 = vsel %vm1901, %v2544, 0.0
        %2569 = vadd.xlane.f32.xlu0 %v2568
        %v2570 = vpop.xlane.xlu0 %2569
        %v2571 = vsel %vm1901, %v2545, 0.0
        %2572 = vadd.xlane.f32.xlu0 %v2571
        %v2573 = vpop.xlane.xlu0 %2572
        %v2574 = vsel %vm1901, %v2546, 0.0
        %2575 = vadd.xlane.f32.xlu0 %v2574
        %v2576 = vpop.xlane.xlu0 %2575
        %v2577 = vsel %vm1901, %v2547, 0.0
        %2578 = vadd.xlane.f32.xlu0 %v2577
        %v2579 = vpop.xlane.xlu0 %2578
        %v2580 = vsel %vm1901, %v2548, 0.0
        %2581 = vadd.xlane.f32.xlu0 %v2580
        %v2582 = vpop.xlane.xlu0 %2581
        %v2583 = vsel %vm1901, %v2549, 0.0
        %2584 = vadd.xlane.f32.xlu0 %v2583
        %v2585 = vpop.xlane.xlu0 %2584
        %v2586 = vsel %vm1901, %v2550, 0.0
        %2587 = vadd.xlane.f32.xlu0 %v2586
        %v2588 = vpop.xlane.xlu0 %2587
        %v2589 = vsel %vm1901, %v2551, 0.0
        %2590 = vadd.xlane.f32.xlu0 %v2589
        %v2591 = vpop.xlane.xlu0 %2590
        %v2592 = vsel %vm1901, %v2552, 0.0
        %2593 = vadd.xlane.f32.xlu0 %v2592
        %v2594 = vpop.xlane.xlu0 %2593
        %v2595 = vsel %vm1901, %v2553, 0.0
        %2596 = vadd.xlane.f32.xlu0 %v2595
        %v2597 = vpop.xlane.xlu0 %2596
        %v2598 = vsel %vm1901, %v2554, 0.0
        %2599 = vadd.xlane.f32.xlu0 %v2598
        %v2600 = vpop.xlane.xlu0 %2599
        %v2601 = vsel %vm1901, %v2555, 0.0
        %2602 = vadd.xlane.f32.xlu0 %v2601
        %v2603 = vpop.xlane.xlu0 %2602
        %v2604 = vmul.f32 %v2558, %v1998
        %v2605 = vmul.f32 %v2561, %v1998
        %v2606 = vmul.f32 %v2564, %v1998
        %v2607 = vmul.f32 %v2567, %v1998
        %v2608 = vmul.f32 %v2570, %v1998
        %v2609 = vmul.f32 %v2573, %v1998
        %v2610 = vmul.f32 %v2576, %v1998
        %v2611 = vmul.f32 %v2579, %v1998
        %v2612 = vmul.f32 %v2582, %v1998
        %v2613 = vmul.f32 %v2585, %v1998
        %v2614 = vmul.f32 %v2588, %v1998
        %v2615 = vmul.f32 %v2591, %v1998
        %v2616 = vmul.f32 %v2594, %v1998
        %v2617 = vmul.f32 %v2597, %v1998
        %v2618 = vmul.f32 %v2600, %v1998
        %v2619 = vmul.f32 %v2603, %v1998
        %v2620 = vadd.f32 %v2604, 1e-06
        %v2621 = vadd.f32 %v2605, 1e-06
        %v2622 = vadd.f32 %v2606, 1e-06
        %v2623 = vadd.f32 %v2607, 1e-06
        %v2624 = vadd.f32 %v2608, 1e-06
        %v2625 = vadd.f32 %v2609, 1e-06
        %v2626 = vadd.f32 %v2610, 1e-06
        %v2627 = vadd.f32 %v2611, 1e-06
        %v2628 = vadd.f32 %v2612, 1e-06
        %v2629 = vadd.f32 %v2613, 1e-06
        %v2630 = vadd.f32 %v2614, 1e-06
        %v2631 = vadd.f32 %v2615, 1e-06
        %v2632 = vadd.f32 %v2616, 1e-06
        %v2633 = vadd.f32 %v2617, 1e-06
        %v2634 = vadd.f32 %v2618, 1e-06
        %v2635 = vadd.f32 %v2619, 1e-06
        %v2636 = vrsqrt.pop %v2620
        %v2637 = vrsqrt.pop %v2621
        %v2638 = vrsqrt.pop %v2622
        %v2639 = vrsqrt.pop %v2623
        %v2640 = vrsqrt.pop %v2624
        %v2641 = vrsqrt.pop %v2625
        %v2642 = vrsqrt.pop %v2626
        %v2643 = vrsqrt.pop %v2627
        %v2644 = vrsqrt.pop %v2628
        %v2645 = vrsqrt.pop %v2629
        %v2646 = vrsqrt.pop %v2630
        %v2647 = vrsqrt.pop %v2631
        %v2648 = vrsqrt.pop %v2632
        %v2649 = vrsqrt.pop %v2633
        %v2650 = vrsqrt.pop %v2634
        %v2651 = vrsqrt.pop %v2635
        %v2652 = vmul.f32 %v2524, %v2636
        %v2653 = vmul.f32 %v2525, %v2637
        %v2654 = vmul.f32 %v2526, %v2638
        %v2655 = vmul.f32 %v2527, %v2639
        %v2656 = vmul.f32 %v2528, %v2640
        %v2657 = vmul.f32 %v2529, %v2641
        %v2658 = vmul.f32 %v2530, %v2642
        %v2659 = vmul.f32 %v2531, %v2643
        %v2660 = vmul.f32 %v2532, %v2644
        %v2661 = vmul.f32 %v2533, %v2645
        %v2662 = vmul.f32 %v2534, %v2646
        %v2663 = vmul.f32 %v2535, %v2647
        %v2664 = vmul.f32 %v2536, %v2648
        %v2665 = vmul.f32 %v2537, %v2649
        %v2666 = vmul.f32 %v2538, %v2650
        %v2667 = vmul.f32 %v2539, %v2651
        %v2668 = vpack.c.bf16 %v2652, %v2652
        %v2669 = vpack.c.bf16 %v2654, %v2654
        %v2670 = vpack.c.bf16 %v2656, %v2656
        %v2671 = vpack.c.bf16 %v2658, %v2658
        %v2672 = vpack.c.bf16 %v2660, %v2660
        %v2673 = vpack.c.bf16 %v2662, %v2662
        %v2674 = vpack.c.bf16 %v2664, %v2664
        %v2675 = vpack.c.bf16 %v2666, %v2666
        %v2676 = vld [vmem:[%s5] sm:$0xf]
        %v2677 = vld [vmem:[%s5 + $0x4] sm:$0xf]
        %v2678 = vld [vmem:[%s5 + $0x8] sm:$0xf]
        %v2679 = vld [vmem:[%s5 + $0xc] sm:$0xf]
        %v2680 = vpack.c.bf16 %v2653, %v2653
        %v2681 = vpack.c.bf16 %v2655, %v2655
        %v2682 = vpack.c.bf16 %v2657, %v2657
        %v2683 = vpack.c.bf16 %v2659, %v2659
        %v2684 = vpack.c.bf16 %v2661, %v2661
        %v2685 = vpack.c.bf16 %v2663, %v2663
        %v2686 = vpack.c.bf16 %v2665, %v2665
        %v2687 = vpack.c.bf16 %v2667, %v2667
        %s2688 = scalar_lea.vmem %s5, 32
        %v2689 = vld [vmem:[%s2688] sm:$0xf]
        %v2690 = vld [vmem:[%s2688 + $0x4] sm:$0xf]
        %v2691 = vld [vmem:[%s2688 + $0x8] sm:$0xf]
        %v2692 = vld [vmem:[%s2688 + $0xc] sm:$0xf]
        %v2701 = vunpack.c.l.b16 %v2680
        %v2702 = vunpack.c.l.b16 %v2681
        %v2703 = vunpack.c.l.b16 %v2682
        %v2704 = vunpack.c.l.b16 %v2683
        %v2705 = vunpack.c.l.b16 %v2684
        %v2706 = vunpack.c.l.b16 %v2685
        %v2707 = vunpack.c.l.b16 %v2686
        %v2708 = vunpack.c.l.b16 %v2687
        %v2709 = vpack.c.b16 %v2702, %v2701
        %v2710 = vpack.c.b16 %v2704, %v2703
        %v2711 = vpack.c.b16 %v2706, %v2705
        %v2712 = vpack.c.b16 %v2708, %v2707
        %v2717 = vunpack.c.l.b16 %v2689
        %v2718 = vunpack.c.l.b16 %v2690
        %v2719 = vunpack.c.l.b16 %v2691
        %v2720 = vunpack.c.l.b16 %v2692
        %v2721 = vpack.c.b16 %v2718, %v2717
        %v2722 = vpack.c.b16 %v2720, %v2719
        %v2726 = vsel %vm1901, %v2709, 0
        %v2729 = vsel %vm1901, %v2710, 0
        %v2732 = vsel %vm1901, %v2711, 0
        %v2735 = vsel %vm1901, %v2712, 0
        %2737 = vmatprep.subr.bf16.mxu0 0
        %2738 = vmatpush1.bf16.msra.mxu0 0
        %2739 = vmatprep.subr.bf16.mxu0 0
        %2740 = vmatpush1.bf16.msra.mxu0 0
        %2741 = vmatprep.subr.bf16.mxu0 0
        %2742 = vmatpush1.bf16.msra.mxu0 0
        %2743 = vmatprep.subr.bf16.mxu0 0
        %2744 = vmatpush1.bf16.msra.mxu0 0
        %2745 = vmatprep.subr.bf16.mxu0 0
        %2746 = vmatpush1.bf16.msra.mxu0 0
        %2747 = vmatprep.subr.bf16.mxu0 0
        %2748 = vmatpush1.bf16.msra.mxu0 0
        %2749 = vmatprep.subr.bf16.mxu0 0
        %2750 = vmatpush1.bf16.msra.mxu0 %v2722
        %2751 = vmatprep.subr.bf16.mxu0 0
        %2752 = vmatpush1.bf16.msra.mxu0 %v2721
        %2753 = vmatprep.subr.bf16.mxu0 0
        %2754 = vmatpush2.bf16.msra.mxu0 0
        %2755 = vmatprep.subr.bf16.mxu0 0
        %2756 = vmatpush2.bf16.msra.mxu0 0
        %2757 = vmatprep.subr.bf16.mxu0 0
        %2758 = vmatpush2.bf16.msra.mxu0 0
        %2759 = vmatprep.subr.bf16.mxu0 0
        %2760 = vmatpush2.bf16.msra.mxu0 0
        %2761 = vmatprep.subr.bf16.mxu0 0
        %2762 = vmatpush2.bf16.msra.mxu0 0
        %2763 = vmatprep.subr.bf16.mxu0 0
        %2764 = vmatpush2.bf16.msra.mxu0 0
        %2765 = vmatprep.subr.bf16.mxu0 0
        %2766 = vmatpush2.bf16.msra.mxu0 0
        %2767 = vmatprep.subr.bf16.mxu0 0
        %2768 = vmatpush2.bf16.msra.mxu0 0
        %2769 = vmatprep.mubr.bf16.mxu0 0
        %2770 = vmatmul.mubr.bf16.gmra.mxu0 %v2726
        %v2771 = vpop.f32.mrf.mxu0
        %v2772 = vadd.f32 0.0, %v2771
        %v2773 = vpop.f32.mrf.mxu0
        %v2774 = vpop.f32.mrf.mxu0
        %v2775 = vadd.f32 0.0, %v2774
        %v2776 = vpop.f32.mrf.mxu0
        %2777 = vmatprep.mubr.bf16.mxu0 0
        %2778 = vmatmul.mubr.bf16.gmra.mxu0 %v2729
        %v2779 = vpop.f32.mrf.mxu0
        %v2780 = vadd.f32 0.0, %v2779
        %v2781 = vpop.f32.mrf.mxu0
        %v2782 = vpop.f32.mrf.mxu0
        %v2783 = vadd.f32 0.0, %v2782
        %v2784 = vpop.f32.mrf.mxu0
        %2785 = vmatprep.mubr.bf16.mxu0 0
        %2786 = vmatmul.mubr.bf16.gmra.mxu0 %v2732
        %v2787 = vpop.f32.mrf.mxu0
        %v2788 = vadd.f32 0.0, %v2787
        %v2789 = vpop.f32.mrf.mxu0
        %v2790 = vpop.f32.mrf.mxu0
        %v2791 = vadd.f32 0.0, %v2790
        %v2792 = vpop.f32.mrf.mxu0
        %2793 = vmatprep.mubr.bf16.mxu0 0
        %2794 = vmatmul.mubr.bf16.gmra.mxu0 %v2735
        %v2795 = vpop.f32.mrf.mxu0
        %v2796 = vadd.f32 0.0, %v2795
        %v2797 = vpop.f32.mrf.mxu0
        %v2798 = vpop.f32.mrf.mxu0
        %v2799 = vadd.f32 0.0, %v2798
        %v2800 = vpop.f32.mrf.mxu0
        %2801 = vdwg.mxu0
        %v2810 = vunpack.c.l.b16 %v2668
        %v2811 = vunpack.c.l.b16 %v2669
        %v2812 = vunpack.c.l.b16 %v2670
        %v2813 = vunpack.c.l.b16 %v2671
        %v2814 = vunpack.c.l.b16 %v2672
        %v2815 = vunpack.c.l.b16 %v2673
        %v2816 = vunpack.c.l.b16 %v2674
        %v2817 = vunpack.c.l.b16 %v2675
        %v2818 = vpack.c.b16 %v2811, %v2810
        %v2819 = vpack.c.b16 %v2813, %v2812
        %v2820 = vpack.c.b16 %v2815, %v2814
        %v2821 = vpack.c.b16 %v2817, %v2816
        %v2826 = vunpack.c.l.b16 %v2676
        %v2827 = vunpack.c.l.b16 %v2677
        %v2828 = vunpack.c.l.b16 %v2678
        %v2829 = vunpack.c.l.b16 %v2679
        %v2830 = vpack.c.b16 %v2827, %v2826
        %v2831 = vpack.c.b16 %v2829, %v2828
        %v2835 = vsel %vm1901, %v2818, 0
        %v2838 = vsel %vm1901, %v2819, 0
        %v2841 = vsel %vm1901, %v2820, 0
        %v2844 = vsel %vm1901, %v2821, 0
        %2846 = vmatprep.subr.bf16.mxu0 0
        %2847 = vmatpush1.bf16.msra.mxu0 0
        %2848 = vmatprep.subr.bf16.mxu0 0
        %2849 = vmatpush1.bf16.msra.mxu0 0
        %2850 = vmatprep.subr.bf16.mxu0 0
        %2851 = vmatpush1.bf16.msra.mxu0 0
        %2852 = vmatprep.subr.bf16.mxu0 0
        %2853 = vmatpush1.bf16.msra.mxu0 0
        %2854 = vmatprep.subr.bf16.mxu0 0
        %2855 = vmatpush1.bf16.msra.mxu0 0
        %2856 = vmatprep.subr.bf16.mxu0 0
        %2857 = vmatpush1.bf16.msra.mxu0 0
        %2858 = vmatprep.subr.bf16.mxu0 0
        %2859 = vmatpush1.bf16.msra.mxu0 %v2831
        %2860 = vmatprep.subr.bf16.mxu0 0
        %2861 = vmatpush1.bf16.msra.mxu0 %v2830
        %2862 = vmatprep.subr.bf16.mxu0 0
        %2863 = vmatpush2.bf16.msra.mxu0 0
        %2864 = vmatprep.subr.bf16.mxu0 0
        %2865 = vmatpush2.bf16.msra.mxu0 0
        %2866 = vmatprep.subr.bf16.mxu0 0
        %2867 = vmatpush2.bf16.msra.mxu0 0
        %2868 = vmatprep.subr.bf16.mxu0 0
        %2869 = vmatpush2.bf16.msra.mxu0 0
        %2870 = vmatprep.subr.bf16.mxu0 0
        %2871 = vmatpush2.bf16.msra.mxu0 0
        %2872 = vmatprep.subr.bf16.mxu0 0
        %2873 = vmatpush2.bf16.msra.mxu0 0
        %2874 = vmatprep.subr.bf16.mxu0 0
        %2875 = vmatpush2.bf16.msra.mxu0 0
        %2876 = vmatprep.subr.bf16.mxu0 0
        %2877 = vmatpush2.bf16.msra.mxu0 0
        %2878 = vmatprep.mubr.bf16.mxu0 0
        %2879 = vmatmul.mubr.bf16.gmra.mxu0 %v2835
        %v2880 = vpop.f32.mrf.mxu0
        %v2881 = vadd.f32 %v2772, %v2880
        %v2882 = vpop.f32.mrf.mxu0
        %v2883 = vpop.f32.mrf.mxu0
        %v2884 = vadd.f32 %v2775, %v2883
        %v2885 = vpop.f32.mrf.mxu0
        %2886 = vmatprep.mubr.bf16.mxu0 0
        %2887 = vmatmul.mubr.bf16.gmra.mxu0 %v2838
        %v2888 = vpop.f32.mrf.mxu0
        %v2889 = vadd.f32 %v2780, %v2888
        %v2890 = vpop.f32.mrf.mxu0
        %v2891 = vpop.f32.mrf.mxu0
        %v2892 = vadd.f32 %v2783, %v2891
        %v2893 = vpop.f32.mrf.mxu0
        %2894 = vmatprep.mubr.bf16.mxu0 0
        %2895 = vmatmul.mubr.bf16.gmra.mxu0 %v2841
        %v2896 = vpop.f32.mrf.mxu0
        %v2897 = vadd.f32 %v2788, %v2896
        %v2898 = vpop.f32.mrf.mxu0
        %v2899 = vpop.f32.mrf.mxu0
        %v2900 = vadd.f32 %v2791, %v2899
        %v2901 = vpop.f32.mrf.mxu0
        %2902 = vmatprep.mubr.bf16.mxu0 0
        %2903 = vmatmul.mubr.bf16.gmra.mxu0 %v2844
        %v2904 = vpop.f32.mrf.mxu0
        %v2905 = vadd.f32 %v2796, %v2904
        %v2906 = vpop.f32.mrf.mxu0
        %v2907 = vpop.f32.mrf.mxu0
        %v2908 = vadd.f32 %v2799, %v2907
        %v2909 = vpop.f32.mrf.mxu0
        %2910 = vdwg.mxu0
        %s2911 = scalar_lea.vmem %s551, 1 [#allocation2]
        %v2912 = vld [vmem:[%s2911] ss:$2 sm:$0xff]
        %s2913 = scalar_lea.vmem %s551, 17 [#allocation2]
        %v2914 = vld [vmem:[%s2913] ss:$2 sm:$0xff]
        %s2915 = scalar_lea.vmem %s551, 33 [#allocation2]
        %v2916 = vld [vmem:[%s2915] ss:$2 sm:$0xff]
        %s2917 = scalar_lea.vmem %s551, 49 [#allocation2]
        %v2918 = vld [vmem:[%s2917] ss:$2 sm:$0xff]
        %s2919 = scalar_lea.vmem %s551, 65 [#allocation2]
        %v2920 = vld [vmem:[%s2919] ss:$2 sm:$0xff]
        %s2921 = scalar_lea.vmem %s551, 81 [#allocation2]
        %v2922 = vld [vmem:[%s2921] ss:$2 sm:$0xff]
        %s2923 = scalar_lea.vmem %s551, 97 [#allocation2]
        %v2924 = vld [vmem:[%s2923] ss:$2 sm:$0xff]
        %s2925 = scalar_lea.vmem %s551, 113 [#allocation2]
        %v2926 = vld [vmem:[%s2925] ss:$2 sm:$0xff]
        %s2927 = scalar_lea.vmem %s551, 129 [#allocation2]
        %v2928 = vld [vmem:[%s2927] ss:$2 sm:$0xff]
        %s2929 = scalar_lea.vmem %s551, 145 [#allocation2]
        %v2930 = vld [vmem:[%s2929] ss:$2 sm:$0xff]
        %s2931 = scalar_lea.vmem %s551, 161 [#allocation2]
        %v2932 = vld [vmem:[%s2931] ss:$2 sm:$0xff]
        %s2933 = scalar_lea.vmem %s551, 177 [#allocation2]
        %v2934 = vld [vmem:[%s2933] ss:$2 sm:$0xff]
        %s2935 = scalar_lea.vmem %s551, 193 [#allocation2]
        %v2936 = vld [vmem:[%s2935] ss:$2 sm:$0xff]
        %s2937 = scalar_lea.vmem %s551, 209 [#allocation2]
        %v2938 = vld [vmem:[%s2937] ss:$2 sm:$0xff]
        %s2939 = scalar_lea.vmem %s551, 225 [#allocation2]
        %v2940 = vld [vmem:[%s2939] ss:$2 sm:$0xff]
        %s2941 = scalar_lea.vmem %s551, 241 [#allocation2]
        %v2942 = vld [vmem:[%s2941] ss:$2 sm:$0xff]
        %v2943 = vsel %vm1901, %v2912, 0.0
        %2944 = vadd.xlane.f32.xlu0 %v2943
        %v2945 = vpop.xlane.xlu0 %2944
        %v2946 = vsel %vm1901, %v2914, 0.0
        %2947 = vadd.xlane.f32.xlu0 %v2946
        %v2948 = vpop.xlane.xlu0 %2947
        %v2949 = vsel %vm1901, %v2916, 0.0
        %2950 = vadd.xlane.f32.xlu0 %v2949
        %v2951 = vpop.xlane.xlu0 %2950
        %v2952 = vsel %vm1901, %v2918, 0.0
        %2953 = vadd.xlane.f32.xlu0 %v2952
        %v2954 = vpop.xlane.xlu0 %2953
        %v2955 = vsel %vm1901, %v2920, 0.0
        %2956 = vadd.xlane.f32.xlu0 %v2955
        %v2957 = vpop.xlane.xlu0 %2956
        %v2958 = vsel %vm1901, %v2922, 0.0
        %2959 = vadd.xlane.f32.xlu0 %v2958
        %v2960 = vpop.xlane.xlu0 %2959
        %v2961 = vsel %vm1901, %v2924, 0.0
        %2962 = vadd.xlane.f32.xlu0 %v2961
        %v2963 = vpop.xlane.xlu0 %2962
        %v2964 = vsel %vm1901, %v2926, 0.0
        %2965 = vadd.xlane.f32.xlu0 %v2964
        %v2966 = vpop.xlane.xlu0 %2965
        %v2967 = vsel %vm1901, %v2928, 0.0
        %2968 = vadd.xlane.f32.xlu0 %v2967
        %v2969 = vpop.xlane.xlu0 %2968
        %v2970 = vsel %vm1901, %v2930, 0.0
        %2971 = vadd.xlane.f32.xlu0 %v2970
        %v2972 = vpop.xlane.xlu0 %2971
        %v2973 = vsel %vm1901, %v2932, 0.0
        %2974 = vadd.xlane.f32.xlu0 %v2973
        %v2975 = vpop.xlane.xlu0 %2974
        %v2976 = vsel %vm1901, %v2934, 0.0
        %2977 = vadd.xlane.f32.xlu0 %v2976
        %v2978 = vpop.xlane.xlu0 %2977
        %v2979 = vsel %vm1901, %v2936, 0.0
        %2980 = vadd.xlane.f32.xlu0 %v2979
        %v2981 = vpop.xlane.xlu0 %2980
        %v2982 = vsel %vm1901, %v2938, 0.0
        %2983 = vadd.xlane.f32.xlu0 %v2982
        %v2984 = vpop.xlane.xlu0 %2983
        %v2985 = vsel %vm1901, %v2940, 0.0
        %2986 = vadd.xlane.f32.xlu0 %v2985
        %v2987 = vpop.xlane.xlu0 %2986
        %v2988 = vsel %vm1901, %v2942, 0.0
        %2989 = vadd.xlane.f32.xlu0 %v2988
        %v2990 = vpop.xlane.xlu0 %2989
        %v2991 = vmul.f32 %v2945, %v1998
        %v2992 = vmul.f32 %v2948, %v1998
        %v2993 = vmul.f32 %v2951, %v1998
        %v2994 = vmul.f32 %v2954, %v1998
        %v2995 = vmul.f32 %v2957, %v1998
        %v2996 = vmul.f32 %v2960, %v1998
        %v2997 = vmul.f32 %v2963, %v1998
        %v2998 = vmul.f32 %v2966, %v1998
        %v2999 = vmul.f32 %v2969, %v1998
        %v3000 = vmul.f32 %v2972, %v1998
        %v3001 = vmul.f32 %v2975, %v1998
        %v3002 = vmul.f32 %v2978, %v1998
        %v3003 = vmul.f32 %v2981, %v1998
        %v3004 = vmul.f32 %v2984, %v1998
        %v3005 = vmul.f32 %v2987, %v1998
        %v3006 = vmul.f32 %v2990, %v1998
        %v3007 = vsub.f32 %v2912, %v2991
        %v3008 = vsub.f32 %v2914, %v2992
        %v3009 = vsub.f32 %v2916, %v2993
        %v3010 = vsub.f32 %v2918, %v2994
        %v3011 = vsub.f32 %v2920, %v2995
        %v3012 = vsub.f32 %v2922, %v2996
        %v3013 = vsub.f32 %v2924, %v2997
        %v3014 = vsub.f32 %v2926, %v2998
        %v3015 = vsub.f32 %v2928, %v2999
        %v3016 = vsub.f32 %v2930, %v3000
        %v3017 = vsub.f32 %v2932, %v3001
        %v3018 = vsub.f32 %v2934, %v3002
        %v3019 = vsub.f32 %v2936, %v3003
        %v3020 = vsub.f32 %v2938, %v3004
        %v3021 = vsub.f32 %v2940, %v3005
        %v3022 = vsub.f32 %v2942, %v3006
        %v3023 = vmul.f32 %v3007, %v3007
        %v3024 = vmul.f32 %v3008, %v3008
        %v3025 = vmul.f32 %v3009, %v3009
        %v3026 = vmul.f32 %v3010, %v3010
        %v3027 = vmul.f32 %v3011, %v3011
        %v3028 = vmul.f32 %v3012, %v3012
        %v3029 = vmul.f32 %v3013, %v3013
        %v3030 = vmul.f32 %v3014, %v3014
        %v3031 = vmul.f32 %v3015, %v3015
        %v3032 = vmul.f32 %v3016, %v3016
        %v3033 = vmul.f32 %v3017, %v3017
        %v3034 = vmul.f32 %v3018, %v3018
        %v3035 = vmul.f32 %v3019, %v3019
        %v3036 = vmul.f32 %v3020, %v3020
        %v3037 = vmul.f32 %v3021, %v3021
        %v3038 = vmul.f32 %v3022, %v3022
        %v3039 = vsel %vm1901, %v3023, 0.0
        %3040 = vadd.xlane.f32.xlu0 %v3039
        %v3041 = vpop.xlane.xlu0 %3040
        %v3042 = vsel %vm1901, %v3024, 0.0
        %3043 = vadd.xlane.f32.xlu0 %v3042
        %v3044 = vpop.xlane.xlu0 %3043
        %v3045 = vsel %vm1901, %v3025, 0.0
        %3046 = vadd.xlane.f32.xlu0 %v3045
        %v3047 = vpop.xlane.xlu0 %3046
        %v3048 = vsel %vm1901, %v3026, 0.0
        %3049 = vadd.xlane.f32.xlu0 %v3048
        %v3050 = vpop.xlane.xlu0 %3049
        %v3051 = vsel %vm1901, %v3027, 0.0
        %3052 = vadd.xlane.f32.xlu0 %v3051
        %v3053 = vpop.xlane.xlu0 %3052
        %v3054 = vsel %vm1901, %v3028, 0.0
        %3055 = vadd.xlane.f32.xlu0 %v3054
        %v3056 = vpop.xlane.xlu0 %3055
        %v3057 = vsel %vm1901, %v3029, 0.0
        %3058 = vadd.xlane.f32.xlu0 %v3057
        %v3059 = vpop.xlane.xlu0 %3058
        %v3060 = vsel %vm1901, %v3030, 0.0
        %3061 = vadd.xlane.f32.xlu0 %v3060
        %v3062 = vpop.xlane.xlu0 %3061
        %v3063 = vsel %vm1901, %v3031, 0.0
        %3064 = vadd.xlane.f32.xlu0 %v3063
        %v3065 = vpop.xlane.xlu0 %3064
        %v3066 = vsel %vm1901, %v3032, 0.0
        %3067 = vadd.xlane.f32.xlu0 %v3066
        %v3068 = vpop.xlane.xlu0 %3067
        %v3069 = vsel %vm1901, %v3033, 0.0
        %3070 = vadd.xlane.f32.xlu0 %v3069
        %v3071 = vpop.xlane.xlu0 %3070
        %v3072 = vsel %vm1901, %v3034, 0.0
        %3073 = vadd.xlane.f32.xlu0 %v3072
        %v3074 = vpop.xlane.xlu0 %3073
        %v3075 = vsel %vm1901, %v3035, 0.0
        %3076 = vadd.xlane.f32.xlu0 %v3075
        %v3077 = vpop.xlane.xlu0 %3076
        %v3078 = vsel %vm1901, %v3036, 0.0
        %3079 = vadd.xlane.f32.xlu0 %v3078
        %v3080 = vpop.xlane.xlu0 %3079
        %v3081 = vsel %vm1901, %v3037, 0.0
        %3082 = vadd.xlane.f32.xlu0 %v3081
        %v3083 = vpop.xlane.xlu0 %3082
        %v3084 = vsel %vm1901, %v3038, 0.0
        %3085 = vadd.xlane.f32.xlu0 %v3084
        %v3086 = vpop.xlane.xlu0 %3085
        %v3087 = vmul.f32 %v3041, %v1998
        %v3088 = vmul.f32 %v3044, %v1998
        %v3089 = vmul.f32 %v3047, %v1998
        %v3090 = vmul.f32 %v3050, %v1998
        %v3091 = vmul.f32 %v3053, %v1998
        %v3092 = vmul.f32 %v3056, %v1998
        %v3093 = vmul.f32 %v3059, %v1998
        %v3094 = vmul.f32 %v3062, %v1998
        %v3095 = vmul.f32 %v3065, %v1998
        %v3096 = vmul.f32 %v3068, %v1998
        %v3097 = vmul.f32 %v3071, %v1998
        %v3098 = vmul.f32 %v3074, %v1998
        %v3099 = vmul.f32 %v3077, %v1998
        %v3100 = vmul.f32 %v3080, %v1998
        %v3101 = vmul.f32 %v3083, %v1998
        %v3102 = vmul.f32 %v3086, %v1998
        %v3103 = vadd.f32 %v3087, 1e-06
        %v3104 = vadd.f32 %v3088, 1e-06
        %v3105 = vadd.f32 %v3089, 1e-06
        %v3106 = vadd.f32 %v3090, 1e-06
        %v3107 = vadd.f32 %v3091, 1e-06
        %v3108 = vadd.f32 %v3092, 1e-06
        %v3109 = vadd.f32 %v3093, 1e-06
        %v3110 = vadd.f32 %v3094, 1e-06
        %v3111 = vadd.f32 %v3095, 1e-06
        %v3112 = vadd.f32 %v3096, 1e-06
        %v3113 = vadd.f32 %v3097, 1e-06
        %v3114 = vadd.f32 %v3098, 1e-06
        %v3115 = vadd.f32 %v3099, 1e-06
        %v3116 = vadd.f32 %v3100, 1e-06
        %v3117 = vadd.f32 %v3101, 1e-06
        %v3118 = vadd.f32 %v3102, 1e-06
        %v3119 = vrsqrt.pop %v3103
        %v3120 = vrsqrt.pop %v3104
        %v3121 = vrsqrt.pop %v3105
        %v3122 = vrsqrt.pop %v3106
        %v3123 = vrsqrt.pop %v3107
        %v3124 = vrsqrt.pop %v3108
        %v3125 = vrsqrt.pop %v3109
        %v3126 = vrsqrt.pop %v3110
        %v3127 = vrsqrt.pop %v3111
        %v3128 = vrsqrt.pop %v3112
        %v3129 = vrsqrt.pop %v3113
        %v3130 = vrsqrt.pop %v3114
        %v3131 = vrsqrt.pop %v3115
        %v3132 = vrsqrt.pop %v3116
        %v3133 = vrsqrt.pop %v3117
        %v3134 = vrsqrt.pop %v3118
        %v3135 = vmul.f32 %v3007, %v3119
        %v3136 = vmul.f32 %v3008, %v3120
        %v3137 = vmul.f32 %v3009, %v3121
        %v3138 = vmul.f32 %v3010, %v3122
        %v3139 = vmul.f32 %v3011, %v3123
        %v3140 = vmul.f32 %v3012, %v3124
        %v3141 = vmul.f32 %v3013, %v3125
        %v3142 = vmul.f32 %v3014, %v3126
        %v3143 = vmul.f32 %v3015, %v3127
        %v3144 = vmul.f32 %v3016, %v3128
        %v3145 = vmul.f32 %v3017, %v3129
        %v3146 = vmul.f32 %v3018, %v3130
        %v3147 = vmul.f32 %v3019, %v3131
        %v3148 = vmul.f32 %v3020, %v3132
        %v3149 = vmul.f32 %v3021, %v3133
        %v3150 = vmul.f32 %v3022, %v3134
        %v3151 = vpack.c.bf16 %v3135, %v3135
        %v3152 = vpack.c.bf16 %v3137, %v3137
        %v3153 = vpack.c.bf16 %v3139, %v3139
        %v3154 = vpack.c.bf16 %v3141, %v3141
        %v3155 = vpack.c.bf16 %v3143, %v3143
        %v3156 = vpack.c.bf16 %v3145, %v3145
        %v3157 = vpack.c.bf16 %v3147, %v3147
        %v3158 = vpack.c.bf16 %v3149, %v3149
        %s3159 = scalar_lea.vmem %s5, 16
        %v3160 = vld [vmem:[%s3159] sm:$0xf]
        %v3161 = vld [vmem:[%s3159 + $0x4] sm:$0xf]
        %v3162 = vld [vmem:[%s3159 + $0x8] sm:$0xf]
        %v3163 = vld [vmem:[%s3159 + $0xc] sm:$0xf]
        %v3172 = vunpack.c.l.b16 %v3151
        %v3173 = vunpack.c.l.b16 %v3152
        %v3174 = vunpack.c.l.b16 %v3153
        %v3175 = vunpack.c.l.b16 %v3154
        %v3176 = vunpack.c.l.b16 %v3155
        %v3177 = vunpack.c.l.b16 %v3156
        %v3178 = vunpack.c.l.b16 %v3157
        %v3179 = vunpack.c.l.b16 %v3158
        %v3180 = vpack.c.b16 %v3173, %v3172
        %v3181 = vpack.c.b16 %v3175, %v3174
        %v3182 = vpack.c.b16 %v3177, %v3176
        %v3183 = vpack.c.b16 %v3179, %v3178
        %v3188 = vunpack.c.l.b16 %v3160
        %v3189 = vunpack.c.l.b16 %v3161
        %v3190 = vunpack.c.l.b16 %v3162
        %v3191 = vunpack.c.l.b16 %v3163
        %v3192 = vpack.c.b16 %v3189, %v3188
        %v3193 = vpack.c.b16 %v3191, %v3190
        %v3197 = vsel %vm1901, %v3180, 0
        %v3200 = vsel %vm1901, %v3181, 0
        %v3203 = vsel %vm1901, %v3182, 0
        %v3206 = vsel %vm1901, %v3183, 0
        %3208 = vmatprep.subr.bf16.mxu0 0
        %3209 = vmatpush1.bf16.msra.mxu0 0
        %3210 = vmatprep.subr.bf16.mxu0 0
        %3211 = vmatpush1.bf16.msra.mxu0 0
        %3212 = vmatprep.subr.bf16.mxu0 0
        %3213 = vmatpush1.bf16.msra.mxu0 0
        %3214 = vmatprep.subr.bf16.mxu0 0
        %3215 = vmatpush1.bf16.msra.mxu0 0
        %3216 = vmatprep.subr.bf16.mxu0 0
        %3217 = vmatpush1.bf16.msra.mxu0 0
        %3218 = vmatprep.subr.bf16.mxu0 0
        %3219 = vmatpush1.bf16.msra.mxu0 0
        %3220 = vmatprep.subr.bf16.mxu0 0
        %3221 = vmatpush1.bf16.msra.mxu0 %v3193
        %3222 = vmatprep.subr.bf16.mxu0 0
        %3223 = vmatpush1.bf16.msra.mxu0 %v3192
        %3224 = vmatprep.subr.bf16.mxu0 0
        %3225 = vmatpush2.bf16.msra.mxu0 0
        %3226 = vmatprep.subr.bf16.mxu0 0
        %3227 = vmatpush2.bf16.msra.mxu0 0
        %3228 = vmatprep.subr.bf16.mxu0 0
        %3229 = vmatpush2.bf16.msra.mxu0 0
        %3230 = vmatprep.subr.bf16.mxu0 0
        %3231 = vmatpush2.bf16.msra.mxu0 0
        %3232 = vmatprep.subr.bf16.mxu0 0
        %3233 = vmatpush2.bf16.msra.mxu0 0
        %3234 = vmatprep.subr.bf16.mxu0 0
        %3235 = vmatpush2.bf16.msra.mxu0 0
        %3236 = vmatprep.subr.bf16.mxu0 0
        %3237 = vmatpush2.bf16.msra.mxu0 0
        %3238 = vmatprep.subr.bf16.mxu0 0
        %3239 = vmatpush2.bf16.msra.mxu0 0
        %3240 = vmatprep.mubr.bf16.mxu0 0
        %3241 = vmatmul.mubr.bf16.gmra.mxu0 %v3197
        %v3242 = vpop.f32.mrf.mxu0
        %v3243 = vadd.f32 0.0, %v3242
        %v3244 = vpop.f32.mrf.mxu0
        %v3245 = vpop.f32.mrf.mxu0
        %v3246 = vadd.f32 0.0, %v3245
        %v3247 = vpop.f32.mrf.mxu0
        %3248 = vmatprep.mubr.bf16.mxu0 0
        %3249 = vmatmul.mubr.bf16.gmra.mxu0 %v3200
        %v3250 = vpop.f32.mrf.mxu0
        %v3251 = vadd.f32 0.0, %v3250
        %v3252 = vpop.f32.mrf.mxu0
        %v3253 = vpop.f32.mrf.mxu0
        %v3254 = vadd.f32 0.0, %v3253
        %v3255 = vpop.f32.mrf.mxu0
        %3256 = vmatprep.mubr.bf16.mxu0 0
        %3257 = vmatmul.mubr.bf16.gmra.mxu0 %v3203
        %v3258 = vpop.f32.mrf.mxu0
        %v3259 = vadd.f32 0.0, %v3258
        %v3260 = vpop.f32.mrf.mxu0
        %v3261 = vpop.f32.mrf.mxu0
        %v3262 = vadd.f32 0.0, %v3261
        %v3263 = vpop.f32.mrf.mxu0
        %3264 = vmatprep.mubr.bf16.mxu0 0
        %3265 = vmatmul.mubr.bf16.gmra.mxu0 %v3206
        %v3266 = vpop.f32.mrf.mxu0
        %v3267 = vadd.f32 0.0, %v3266
        %v3268 = vpop.f32.mrf.mxu0
        %v3269 = vpop.f32.mrf.mxu0
        %v3270 = vadd.f32 0.0, %v3269
        %v3271 = vpop.f32.mrf.mxu0
        %3272 = vdwg.mxu0
        %v3273 = vadd.f32 %v2881, %v3243
        %v3274 = vadd.f32 %v2884, %v3246
        %v3275 = vadd.f32 %v2889, %v3251
        %v3276 = vadd.f32 %v2892, %v3254
        %v3277 = vadd.f32 %v2897, %v3259
        %v3278 = vadd.f32 %v2900, %v3262
        %v3279 = vadd.f32 %v2905, %v3267
        %v3280 = vadd.f32 %v2908, %v3270
        %v3281 = vpack.c.bf16 %v3136, %v3136
        %v3282 = vpack.c.bf16 %v3138, %v3138
        %v3283 = vpack.c.bf16 %v3140, %v3140
        %v3284 = vpack.c.bf16 %v3142, %v3142
        %v3285 = vpack.c.bf16 %v3144, %v3144
        %v3286 = vpack.c.bf16 %v3146, %v3146
        %v3287 = vpack.c.bf16 %v3148, %v3148
        %v3288 = vpack.c.bf16 %v3150, %v3150
        %s3289 = scalar_lea.vmem %s5, 48
        %v3290 = vld [vmem:[%s3289] sm:$0xf]
        %v3291 = vld [vmem:[%s3289 + $0x4] sm:$0xf]
        %v3292 = vld [vmem:[%s3289 + $0x8] sm:$0xf]
        %v3293 = vld [vmem:[%s3289 + $0xc] sm:$0xf]
        %v3302 = vunpack.c.l.b16 %v3281
        %v3303 = vunpack.c.l.b16 %v3282
        %v3304 = vunpack.c.l.b16 %v3283
        %v3305 = vunpack.c.l.b16 %v3284
        %v3306 = vunpack.c.l.b16 %v3285
        %v3307 = vunpack.c.l.b16 %v3286
        %v3308 = vunpack.c.l.b16 %v3287
        %v3309 = vunpack.c.l.b16 %v3288
        %v3310 = vpack.c.b16 %v3303, %v3302
        %v3311 = vpack.c.b16 %v3305, %v3304
        %v3312 = vpack.c.b16 %v3307, %v3306
        %v3313 = vpack.c.b16 %v3309, %v3308
        %v3318 = vunpack.c.l.b16 %v3290
        %v3319 = vunpack.c.l.b16 %v3291
        %v3320 = vunpack.c.l.b16 %v3292
        %v3321 = vunpack.c.l.b16 %v3293
        %v3322 = vpack.c.b16 %v3319, %v3318
        %v3323 = vpack.c.b16 %v3321, %v3320
        %v3327 = vsel %vm1901, %v3310, 0
        %v3330 = vsel %vm1901, %v3311, 0
        %v3333 = vsel %vm1901, %v3312, 0
        %v3336 = vsel %vm1901, %v3313, 0
        %3338 = vmatprep.subr.bf16.mxu0 0
        %3339 = vmatpush1.bf16.msra.mxu0 0
        %3340 = vmatprep.subr.bf16.mxu0 0
        %3341 = vmatpush1.bf16.msra.mxu0 0
        %3342 = vmatprep.subr.bf16.mxu0 0
        %3343 = vmatpush1.bf16.msra.mxu0 0
        %3344 = vmatprep.subr.bf16.mxu0 0
        %3345 = vmatpush1.bf16.msra.mxu0 0
        %3346 = vmatprep.subr.bf16.mxu0 0
        %3347 = vmatpush1.bf16.msra.mxu0 0
        %3348 = vmatprep.subr.bf16.mxu0 0
        %3349 = vmatpush1.bf16.msra.mxu0 0
        %3350 = vmatprep.subr.bf16.mxu0 0
        %3351 = vmatpush1.bf16.msra.mxu0 %v3323
        %3352 = vmatprep.subr.bf16.mxu0 0
        %3353 = vmatpush1.bf16.msra.mxu0 %v3322
        %3354 = vmatprep.subr.bf16.mxu0 0
        %3355 = vmatpush2.bf16.msra.mxu0 0
        %3356 = vmatprep.subr.bf16.mxu0 0
        %3357 = vmatpush2.bf16.msra.mxu0 0
        %3358 = vmatprep.subr.bf16.mxu0 0
        %3359 = vmatpush2.bf16.msra.mxu0 0
        %3360 = vmatprep.subr.bf16.mxu0 0
        %3361 = vmatpush2.bf16.msra.mxu0 0
        %3362 = vmatprep.subr.bf16.mxu0 0
        %3363 = vmatpush2.bf16.msra.mxu0 0
        %3364 = vmatprep.subr.bf16.mxu0 0
        %3365 = vmatpush2.bf16.msra.mxu0 0
        %3366 = vmatprep.subr.bf16.mxu0 0
        %3367 = vmatpush2.bf16.msra.mxu0 0
        %3368 = vmatprep.subr.bf16.mxu0 0
        %3369 = vmatpush2.bf16.msra.mxu0 0
        %3370 = vmatprep.mubr.bf16.mxu0 0
        %3371 = vmatmul.mubr.bf16.gmra.mxu0 %v3327
        %v3372 = vpop.f32.mrf.mxu0
        %v3373 = vadd.f32 0.0, %v3372
        %v3374 = vpop.f32.mrf.mxu0
        %v3375 = vpop.f32.mrf.mxu0
        %v3376 = vadd.f32 0.0, %v3375
        %v3377 = vpop.f32.mrf.mxu0
        %3378 = vmatprep.mubr.bf16.mxu0 0
        %3379 = vmatmul.mubr.bf16.gmra.mxu0 %v3330
        %v3380 = vpop.f32.mrf.mxu0
        %v3381 = vadd.f32 0.0, %v3380
        %v3382 = vpop.f32.mrf.mxu0
        %v3383 = vpop.f32.mrf.mxu0
        %v3384 = vadd.f32 0.0, %v3383
        %v3385 = vpop.f32.mrf.mxu0
        %3386 = vmatprep.mubr.bf16.mxu0 0
        %3387 = vmatmul.mubr.bf16.gmra.mxu0 %v3333
        %v3388 = vpop.f32.mrf.mxu0
        %v3389 = vadd.f32 0.0, %v3388
        %v3390 = vpop.f32.mrf.mxu0
        %v3391 = vpop.f32.mrf.mxu0
        %v3392 = vadd.f32 0.0, %v3391
        %v3393 = vpop.f32.mrf.mxu0
        %3394 = vmatprep.mubr.bf16.mxu0 0
        %3395 = vmatmul.mubr.bf16.gmra.mxu0 %v3336
        %v3396 = vpop.f32.mrf.mxu0
        %v3397 = vadd.f32 0.0, %v3396
        %v3398 = vpop.f32.mrf.mxu0
        %v3399 = vpop.f32.mrf.mxu0
        %v3400 = vadd.f32 0.0, %v3399
        %v3401 = vpop.f32.mrf.mxu0
        %3402 = vdwg.mxu0
        %v3403 = vadd.f32 %v3273, %v3373
        %v3404 = vadd.f32 %v3274, %v3376
        %v3405 = vadd.f32 %v3275, %v3381
        %v3406 = vadd.f32 %v3276, %v3384
        %v3407 = vadd.f32 %v3277, %v3389
        %v3408 = vadd.f32 %v3278, %v3392
        %v3409 = vadd.f32 %v3279, %v3397
        %v3410 = vadd.f32 %v3280, %v3400
        %v3411 = vld [vmem:[%s6] sm:$0x1]
        %v3413 = vlaneseq
        %v3414 = vshrl.u32 %v3413, 7
        %v3415 = vsub.s32 0, %v3414
        %v3416 = vrot.slane %v3411, %v3415
        %v3418 = vadd.f32 %v3403, %v3416
        %v3419 = vadd.f32 %v3404, %v3416
        %v3420 = vadd.f32 %v3405, %v3416
        %v3421 = vadd.f32 %v3406, %v3416
        %v3422 = vadd.f32 %v3407, %v3416
        %v3423 = vadd.f32 %v3408, %v3416
        %v3424 = vadd.f32 %v3409, %v3416
        %v3425 = vadd.f32 %v3410, %v3416
        %vm3426 = vcmask 523264
        %3427 = vst.msk [vmem:[%s592] sm:$0xff] %vm3426, %v3418
        %3428 = vst.msk [vmem:[%s592 + $0x8] sm:$0xff] %vm3426, %v3419
        %3429 = vst.msk [vmem:[%s592 + $0x10] sm:$0xff] %vm3426, %v3420
        %3430 = vst.msk [vmem:[%s592 + $0x18] sm:$0xff] %vm3426, %v3421
        %3431 = vst.msk [vmem:[%s592 + $0x20] sm:$0xff] %vm3426, %v3422
        %3432 = vst.msk [vmem:[%s592 + $0x28] sm:$0xff] %vm3426, %v3423
        %3433 = vst.msk [vmem:[%s592 + $0x30] sm:$0xff] %vm3426, %v3424
        %3434 = vst.msk [vmem:[%s592 + $0x38] sm:$0xff] %vm3426, %v3425
        %v3435 = vld [vmem:[%s592] ss:$2 sm:$0xf]
        %s3436 = scalar_lea.vmem %s592, 8
        %v3437 = vld [vmem:[%s3436] ss:$2 sm:$0xf]
        %s3438 = scalar_lea.vmem %s592, 16
        %v3439 = vld [vmem:[%s3438] ss:$2 sm:$0xf]
        %s3440 = scalar_lea.vmem %s592, 24
        %v3441 = vld [vmem:[%s3440] ss:$2 sm:$0xf]
        %s3442 = scalar_lea.vmem %s592, 32
        %v3443 = vld [vmem:[%s3442] ss:$2 sm:$0xf]
        %s3444 = scalar_lea.vmem %s592, 40
        %v3445 = vld [vmem:[%s3444] ss:$2 sm:$0xf]
        %s3446 = scalar_lea.vmem %s592, 48
        %v3447 = vld [vmem:[%s3446] ss:$2 sm:$0xf]
        %s3448 = scalar_lea.vmem %s592, 56
        %v3449 = vld [vmem:[%s3448] ss:$2 sm:$0xf]
        %vm3450 = vcmask 519168
        %v3451 = vsel %vm3450, %v3435, 0.0
        %3452 = vadd.xlane.f32.xlu0 %v3451
        %v3453 = vpop.xlane.xlu0 %3452
        %v3454 = vsel %vm3450, %v3437, 0.0
        %3455 = vadd.xlane.f32.xlu0 %v3454
        %v3456 = vpop.xlane.xlu0 %3455
        %v3457 = vsel %vm3450, %v3439, 0.0
        %3458 = vadd.xlane.f32.xlu0 %v3457
        %v3459 = vpop.xlane.xlu0 %3458
        %v3460 = vsel %vm3450, %v3441, 0.0
        %3461 = vadd.xlane.f32.xlu0 %v3460
        %v3462 = vpop.xlane.xlu0 %3461
        %v3463 = vsel %vm3450, %v3443, 0.0
        %3464 = vadd.xlane.f32.xlu0 %v3463
        %v3465 = vpop.xlane.xlu0 %3464
        %v3466 = vsel %vm3450, %v3445, 0.0
        %3467 = vadd.xlane.f32.xlu0 %v3466
        %v3468 = vpop.xlane.xlu0 %3467
        %v3469 = vsel %vm3450, %v3447, 0.0
        %3470 = vadd.xlane.f32.xlu0 %v3469
        %v3471 = vpop.xlane.xlu0 %3470
        %v3472 = vsel %vm3450, %v3449, 0.0
        %3473 = vadd.xlane.f32.xlu0 %v3472
        %v3474 = vpop.xlane.xlu0 %3473
        %v3475 = vrcp.pop 64.0
        %v3476 = vmul.f32 %v3453, %v3475
        %v3477 = vmul.f32 %v3456, %v3475
        %v3478 = vmul.f32 %v3459, %v3475
        %v3479 = vmul.f32 %v3462, %v3475
        %v3480 = vmul.f32 %v3465, %v3475
        %v3481 = vmul.f32 %v3468, %v3475
        %v3482 = vmul.f32 %v3471, %v3475
        %v3483 = vmul.f32 %v3474, %v3475
        %v3484 = vsub.f32 %v3435, %v3476
        %v3485 = vsub.f32 %v3437, %v3477
        %v3486 = vsub.f32 %v3439, %v3478
        %v3487 = vsub.f32 %v3441, %v3479
        %v3488 = vsub.f32 %v3443, %v3480
        %v3489 = vsub.f32 %v3445, %v3481
        %v3490 = vsub.f32 %v3447, %v3482
        %v3491 = vsub.f32 %v3449, %v3483
        %v3492 = vmul.f32 %v3484, %v3484
        %v3493 = vmul.f32 %v3485, %v3485
        %v3494 = vmul.f32 %v3486, %v3486
        %v3495 = vmul.f32 %v3487, %v3487
        %v3496 = vmul.f32 %v3488, %v3488
        %v3497 = vmul.f32 %v3489, %v3489
        %v3498 = vmul.f32 %v3490, %v3490
        %v3499 = vmul.f32 %v3491, %v3491
        %v3500 = vsel %vm3450, %v3492, 0.0
        %3501 = vadd.xlane.f32.xlu0 %v3500
        %v3502 = vpop.xlane.xlu0 %3501
        %v3503 = vsel %vm3450, %v3493, 0.0
        %3504 = vadd.xlane.f32.xlu0 %v3503
        %v3505 = vpop.xlane.xlu0 %3504
        %v3506 = vsel %vm3450, %v3494, 0.0
        %3507 = vadd.xlane.f32.xlu0 %v3506
        %v3508 = vpop.xlane.xlu0 %3507
        %v3509 = vsel %vm3450, %v3495, 0.0
        %3510 = vadd.xlane.f32.xlu0 %v3509
        %v3511 = vpop.xlane.xlu0 %3510
        %v3512 = vsel %vm3450, %v3496, 0.0
        %3513 = vadd.xlane.f32.xlu0 %v3512
        %v3514 = vpop.xlane.xlu0 %3513
        %v3515 = vsel %vm3450, %v3497, 0.0
        %3516 = vadd.xlane.f32.xlu0 %v3515
        %v3517 = vpop.xlane.xlu0 %3516
        %v3518 = vsel %vm3450, %v3498, 0.0
        %3519 = vadd.xlane.f32.xlu0 %v3518
        %v3520 = vpop.xlane.xlu0 %3519
        %v3521 = vsel %vm3450, %v3499, 0.0
        %3522 = vadd.xlane.f32.xlu0 %v3521
        %v3523 = vpop.xlane.xlu0 %3522
        %v3524 = vmul.f32 %v3502, %v3475
        %v3525 = vmul.f32 %v3505, %v3475
        %v3526 = vmul.f32 %v3508, %v3475
        %v3527 = vmul.f32 %v3511, %v3475
        %v3528 = vmul.f32 %v3514, %v3475
        %v3529 = vmul.f32 %v3517, %v3475
        %v3530 = vmul.f32 %v3520, %v3475
        %v3531 = vmul.f32 %v3523, %v3475
        %v3532 = vadd.f32 %v3524, 1e-06
        %v3533 = vadd.f32 %v3525, 1e-06
        %v3534 = vadd.f32 %v3526, 1e-06
        %v3535 = vadd.f32 %v3527, 1e-06
        %v3536 = vadd.f32 %v3528, 1e-06
        %v3537 = vadd.f32 %v3529, 1e-06
        %v3538 = vadd.f32 %v3530, 1e-06
        %v3539 = vadd.f32 %v3531, 1e-06
        %v3540 = vrsqrt.pop %v3532
        %v3541 = vrsqrt.pop %v3533
        %v3542 = vrsqrt.pop %v3534
        %v3543 = vrsqrt.pop %v3535
        %v3544 = vrsqrt.pop %v3536
        %v3545 = vrsqrt.pop %v3537
        %v3546 = vrsqrt.pop %v3538
        %v3547 = vrsqrt.pop %v3539
        %v3548 = vmul.f32 %v3484, %v3540
        %v3549 = vmul.f32 %v3485, %v3541
        %v3550 = vmul.f32 %v3486, %v3542
        %v3551 = vmul.f32 %v3487, %v3543
        %v3552 = vmul.f32 %v3488, %v3544
        %v3553 = vmul.f32 %v3489, %v3545
        %v3554 = vmul.f32 %v3490, %v3546
        %v3555 = vmul.f32 %v3491, %v3547
        %v3556 = vpack.c.bf16 %v3548, %v3548
        %v3557 = vpack.c.bf16 %v3550, %v3550
        %v3558 = vpack.c.bf16 %v3552, %v3552
        %v3559 = vpack.c.bf16 %v3554, %v3554
        %v3560 = vld [vmem:[%s7] sm:$0xf]
        %v3561 = vld [vmem:[%s7 + $0x4] sm:$0xf]
        %v3562 = vld [vmem:[%s7 + $0x8] sm:$0xf]
        %v3563 = vld [vmem:[%s7 + $0xc] sm:$0xf]
        %v3564 = vld [vmem:[%s7 + $0x10] sm:$0xf]
        %v3565 = vld [vmem:[%s7 + $0x14] sm:$0xf]
        %v3566 = vld [vmem:[%s7 + $0x18] sm:$0xf]
        %v3567 = vld [vmem:[%s7 + $0x1c] sm:$0xf]
        %v3568 = vpack.c.bf16 %v3549, %v3549
        %v3569 = vpack.c.bf16 %v3551, %v3551
        %v3570 = vpack.c.bf16 %v3553, %v3553
        %v3571 = vpack.c.bf16 %v3555, %v3555
        %s3572 = scalar_lea.vmem %s7, 64
        %v3573 = vld [vmem:[%s3572] sm:$0xf]
        %v3574 = vld [vmem:[%s3572 + $0x4] sm:$0xf]
        %v3575 = vld [vmem:[%s3572 + $0x8] sm:$0xf]
        %v3576 = vld [vmem:[%s3572 + $0xc] sm:$0xf]
        %v3577 = vld [vmem:[%s3572 + $0x10] sm:$0xf]
        %v3578 = vld [vmem:[%s3572 + $0x14] sm:$0xf]
        %v3579 = vld [vmem:[%s3572 + $0x18] sm:$0xf]
        %v3580 = vld [vmem:[%s3572 + $0x1c] sm:$0xf]
        %v3585 = vcombine.low %v3568, %v3569
        %v3586 = vcombine.low %v3570, %v3571
        %v3588 = vunpack.c.l.s4 1983009808
        %v3589 = vunpack.c.0.s8 %v3588
        %v3590 = vlaneseq
        %v3591 = vshrl.u32 %v3590, 7
        %v3592 = vsub.s32 %v3589, %v3591
        %v3593 = vrot.slane %v3585, %v3592
        %v3595 = vunpack.c.l.s4 1983009808
        %v3596 = vunpack.c.0.s8 %v3595
        %v3597 = vlaneseq
        %v3598 = vshrl.u32 %v3597, 7
        %v3599 = vsub.s32 %v3596, %v3598
        %v3600 = vrot.slane %v3586, %v3599
        %v3601 = vcombine.low %v3593, %v3600
        %v3610 = vunpack.c.l.b16 %v3573
        %v3611 = vunpack.c.l.b16 %v3574
        %v3612 = vunpack.c.l.b16 %v3575
        %v3613 = vunpack.c.l.b16 %v3576
        %v3614 = vunpack.c.l.b16 %v3577
        %v3615 = vunpack.c.l.b16 %v3578
        %v3616 = vunpack.c.l.b16 %v3579
        %v3617 = vunpack.c.l.b16 %v3580
        %v3618 = vpack.c.b16 %v3611, %v3610
        %v3619 = vpack.c.b16 %v3613, %v3612
        %v3620 = vpack.c.b16 %v3615, %v3614
        %v3621 = vpack.c.b16 %v3617, %v3616
        %v3627 = vsel %vm3426, %v3601, 0
        %3629 = vmatprep.subr.bf16.mxu0 0
        %3630 = vmatpush1.bf16.msra.mxu0 0
        %3631 = vmatprep.subr.bf16.mxu0 0
        %3632 = vmatpush1.bf16.msra.mxu0 0
        %3633 = vmatprep.subr.bf16.mxu0 0
        %3634 = vmatpush1.bf16.msra.mxu0 0
        %3635 = vmatprep.subr.bf16.mxu0 0
        %3636 = vmatpush1.bf16.msra.mxu0 0
        %3637 = vmatprep.subr.bf16.mxu0 0
        %3638 = vmatpush1.bf16.msra.mxu0 %v3621
        %3639 = vmatprep.subr.bf16.mxu0 0
        %3640 = vmatpush1.bf16.msra.mxu0 %v3620
        %3641 = vmatprep.subr.bf16.mxu0 0
        %3642 = vmatpush1.bf16.msra.mxu0 %v3619
        %3643 = vmatprep.subr.bf16.mxu0 0
        %3644 = vmatpush1.bf16.msra.mxu0 %v3618
        %3645 = vmatprep.subr.bf16.mxu0 0
        %3646 = vmatpush2.bf16.msra.mxu0 0
        %3647 = vmatprep.subr.bf16.mxu0 0
        %3648 = vmatpush2.bf16.msra.mxu0 0
        %3649 = vmatprep.subr.bf16.mxu0 0
        %3650 = vmatpush2.bf16.msra.mxu0 0
        %3651 = vmatprep.subr.bf16.mxu0 0
        %3652 = vmatpush2.bf16.msra.mxu0 0
        %3653 = vmatprep.subr.bf16.mxu0 0
        %3654 = vmatpush2.bf16.msra.mxu0 0
        %3655 = vmatprep.subr.bf16.mxu0 0
        %3656 = vmatpush2.bf16.msra.mxu0 0
        %3657 = vmatprep.subr.bf16.mxu0 0
        %3658 = vmatpush2.bf16.msra.mxu0 0
        %3659 = vmatprep.subr.bf16.mxu0 0
        %3660 = vmatpush2.bf16.msra.mxu0 0
        %3661 = vmatprep.mubr.bf16.mxu0 0
        %3662 = vmatmul.mubr.bf16.gmra.mxu0 %v3627
        %v3663 = vpop.f32.mrf.mxu0
        %v3664 = vadd.f32 0.0, %v3663
        %v3665 = vpop.f32.mrf.mxu0
        %v3666 = vpop.f32.mrf.mxu0
        %v3667 = vadd.f32 0.0, %v3666
        %v3668 = vpop.f32.mrf.mxu0
        %3669 = vdwg.mxu0
        %v3674 = vcombine.low %v3556, %v3557
        %v3675 = vcombine.low %v3558, %v3559
        %v3677 = vunpack.c.l.s4 1983009808
        %v3678 = vunpack.c.0.s8 %v3677
        %v3679 = vlaneseq
        %v3680 = vshrl.u32 %v3679, 7
        %v3681 = vsub.s32 %v3678, %v3680
        %v3682 = vrot.slane %v3674, %v3681
        %v3684 = vunpack.c.l.s4 1983009808
        %v3685 = vunpack.c.0.s8 %v3684
        %v3686 = vlaneseq
        %v3687 = vshrl.u32 %v3686, 7
        %v3688 = vsub.s32 %v3685, %v3687
        %v3689 = vrot.slane %v3675, %v3688
        %v3690 = vcombine.low %v3682, %v3689
        %v3699 = vunpack.c.l.b16 %v3560
        %v3700 = vunpack.c.l.b16 %v3561
        %v3701 = vunpack.c.l.b16 %v3562
        %v3702 = vunpack.c.l.b16 %v3563
        %v3703 = vunpack.c.l.b16 %v3564
        %v3704 = vunpack.c.l.b16 %v3565
        %v3705 = vunpack.c.l.b16 %v3566
        %v3706 = vunpack.c.l.b16 %v3567
        %v3707 = vpack.c.b16 %v3700, %v3699
        %v3708 = vpack.c.b16 %v3702, %v3701
        %v3709 = vpack.c.b16 %v3704, %v3703
        %v3710 = vpack.c.b16 %v3706, %v3705
        %v3716 = vsel %vm3426, %v3690, 0
        %3718 = vmatprep.subr.bf16.mxu0 0
        %3719 = vmatpush1.bf16.msra.mxu0 0
        %3720 = vmatprep.subr.bf16.mxu0 0
        %3721 = vmatpush1.bf16.msra.mxu0 0
        %3722 = vmatprep.subr.bf16.mxu0 0
        %3723 = vmatpush1.bf16.msra.mxu0 0
        %3724 = vmatprep.subr.bf16.mxu0 0
        %3725 = vmatpush1.bf16.msra.mxu0 0
        %3726 = vmatprep.subr.bf16.mxu0 0
        %3727 = vmatpush1.bf16.msra.mxu0 %v3710
        %3728 = vmatprep.subr.bf16.mxu0 0
        %3729 = vmatpush1.bf16.msra.mxu0 %v3709
        %3730 = vmatprep.subr.bf16.mxu0 0
        %3731 = vmatpush1.bf16.msra.mxu0 %v3708
        %3732 = vmatprep.subr.bf16.mxu0 0
        %3733 = vmatpush1.bf16.msra.mxu0 %v3707
        %3734 = vmatprep.subr.bf16.mxu0 0
        %3735 = vmatpush2.bf16.msra.mxu0 0
        %3736 = vmatprep.subr.bf16.mxu0 0
        %3737 = vmatpush2.bf16.msra.mxu0 0
        %3738 = vmatprep.subr.bf16.mxu0 0
        %3739 = vmatpush2.bf16.msra.mxu0 0
        %3740 = vmatprep.subr.bf16.mxu0 0
        %3741 = vmatpush2.bf16.msra.mxu0 0
        %3742 = vmatprep.subr.bf16.mxu0 0
        %3743 = vmatpush2.bf16.msra.mxu0 0
        %3744 = vmatprep.subr.bf16.mxu0 0
        %3745 = vmatpush2.bf16.msra.mxu0 0
        %3746 = vmatprep.subr.bf16.mxu0 0
        %3747 = vmatpush2.bf16.msra.mxu0 0
        %3748 = vmatprep.subr.bf16.mxu0 0
        %3749 = vmatpush2.bf16.msra.mxu0 0
        %3750 = vmatprep.mubr.bf16.mxu0 0
        %3751 = vmatmul.mubr.bf16.gmra.mxu0 %v3716
        %v3752 = vpop.f32.mrf.mxu0
        %v3753 = vadd.f32 %v3664, %v3752
        %v3754 = vpop.f32.mrf.mxu0
        %v3755 = vpop.f32.mrf.mxu0
        %v3756 = vadd.f32 %v3667, %v3755
        %v3757 = vpop.f32.mrf.mxu0
        %3758 = vdwg.mxu0
        %v3761 = vcombine.high %v3753, %v3753
        %v3762 = vcombine.high %v3756, %v3756
        %s3765 = scalar_lea.vmem %s592, 1
        %v3766 = vld [vmem:[%s3765] ss:$2 sm:$0xf]
        %s3767 = scalar_lea.vmem %s592, 9
        %v3768 = vld [vmem:[%s3767] ss:$2 sm:$0xf]
        %s3769 = scalar_lea.vmem %s592, 17
        %v3770 = vld [vmem:[%s3769] ss:$2 sm:$0xf]
        %s3771 = scalar_lea.vmem %s592, 25
        %v3772 = vld [vmem:[%s3771] ss:$2 sm:$0xf]
        %s3773 = scalar_lea.vmem %s592, 33
        %v3774 = vld [vmem:[%s3773] ss:$2 sm:$0xf]
        %s3775 = scalar_lea.vmem %s592, 41
        %v3776 = vld [vmem:[%s3775] ss:$2 sm:$0xf]
        %s3777 = scalar_lea.vmem %s592, 49
        %v3778 = vld [vmem:[%s3777] ss:$2 sm:$0xf]
        %s3779 = scalar_lea.vmem %s592, 57
        %v3780 = vld [vmem:[%s3779] ss:$2 sm:$0xf]
        %v3781 = vsel %vm3450, %v3766, 0.0
        %3782 = vadd.xlane.f32.xlu0 %v3781
        %v3783 = vpop.xlane.xlu0 %3782
        %v3784 = vsel %vm3450, %v3768, 0.0
        %3785 = vadd.xlane.f32.xlu0 %v3784
        %v3786 = vpop.xlane.xlu0 %3785
        %v3787 = vsel %vm3450, %v3770, 0.0
        %3788 = vadd.xlane.f32.xlu0 %v3787
        %v3789 = vpop.xlane.xlu0 %3788
        %v3790 = vsel %vm3450, %v3772, 0.0
        %3791 = vadd.xlane.f32.xlu0 %v3790
        %v3792 = vpop.xlane.xlu0 %3791
        %v3793 = vsel %vm3450, %v3774, 0.0
        %3794 = vadd.xlane.f32.xlu0 %v3793
        %v3795 = vpop.xlane.xlu0 %3794
        %v3796 = vsel %vm3450, %v3776, 0.0
        %3797 = vadd.xlane.f32.xlu0 %v3796
        %v3798 = vpop.xlane.xlu0 %3797
        %v3799 = vsel %vm3450, %v3778, 0.0
        %3800 = vadd.xlane.f32.xlu0 %v3799
        %v3801 = vpop.xlane.xlu0 %3800
        %v3802 = vsel %vm3450, %v3780, 0.0
        %3803 = vadd.xlane.f32.xlu0 %v3802
        %v3804 = vpop.xlane.xlu0 %3803
        %v3805 = vmul.f32 %v3783, %v3475
        %v3806 = vmul.f32 %v3786, %v3475
        %v3807 = vmul.f32 %v3789, %v3475
        %v3808 = vmul.f32 %v3792, %v3475
        %v3809 = vmul.f32 %v3795, %v3475
        %v3810 = vmul.f32 %v3798, %v3475
        %v3811 = vmul.f32 %v3801, %v3475
        %v3812 = vmul.f32 %v3804, %v3475
        %v3813 = vsub.f32 %v3766, %v3805
        %v3814 = vsub.f32 %v3768, %v3806
        %v3815 = vsub.f32 %v3770, %v3807
        %v3816 = vsub.f32 %v3772, %v3808
        %v3817 = vsub.f32 %v3774, %v3809
        %v3818 = vsub.f32 %v3776, %v3810
        %v3819 = vsub.f32 %v3778, %v3811
        %v3820 = vsub.f32 %v3780, %v3812
        %v3821 = vmul.f32 %v3813, %v3813
        %v3822 = vmul.f32 %v3814, %v3814
        %v3823 = vmul.f32 %v3815, %v3815
        %v3824 = vmul.f32 %v3816, %v3816
        %v3825 = vmul.f32 %v3817, %v3817
        %v3826 = vmul.f32 %v3818, %v3818
        %v3827 = vmul.f32 %v3819, %v3819
        %v3828 = vmul.f32 %v3820, %v3820
        %v3829 = vsel %vm3450, %v3821, 0.0
        %3830 = vadd.xlane.f32.xlu0 %v3829
        %v3831 = vpop.xlane.xlu0 %3830
        %v3832 = vsel %vm3450, %v3822, 0.0
        %3833 = vadd.xlane.f32.xlu0 %v3832
        %v3834 = vpop.xlane.xlu0 %3833
        %v3835 = vsel %vm3450, %v3823, 0.0
        %3836 = vadd.xlane.f32.xlu0 %v3835
        %v3837 = vpop.xlane.xlu0 %3836
        %v3838 = vsel %vm3450, %v3824, 0.0
        %3839 = vadd.xlane.f32.xlu0 %v3838
        %v3840 = vpop.xlane.xlu0 %3839
        %v3841 = vsel %vm3450, %v3825, 0.0
        %3842 = vadd.xlane.f32.xlu0 %v3841
        %v3843 = vpop.xlane.xlu0 %3842
        %v3844 = vsel %vm3450, %v3826, 0.0
        %3845 = vadd.xlane.f32.xlu0 %v3844
        %v3846 = vpop.xlane.xlu0 %3845
        %v3847 = vsel %vm3450, %v3827, 0.0
        %3848 = vadd.xlane.f32.xlu0 %v3847
        %v3849 = vpop.xlane.xlu0 %3848
        %v3850 = vsel %vm3450, %v3828, 0.0
        %3851 = vadd.xlane.f32.xlu0 %v3850
        %v3852 = vpop.xlane.xlu0 %3851
        %v3853 = vmul.f32 %v3831, %v3475
        %v3854 = vmul.f32 %v3834, %v3475
        %v3855 = vmul.f32 %v3837, %v3475
        %v3856 = vmul.f32 %v3840, %v3475
        %v3857 = vmul.f32 %v3843, %v3475
        %v3858 = vmul.f32 %v3846, %v3475
        %v3859 = vmul.f32 %v3849, %v3475
        %v3860 = vmul.f32 %v3852, %v3475
        %v3861 = vadd.f32 %v3853, 1e-06
        %v3862 = vadd.f32 %v3854, 1e-06
        %v3863 = vadd.f32 %v3855, 1e-06
        %v3864 = vadd.f32 %v3856, 1e-06
        %v3865 = vadd.f32 %v3857, 1e-06
        %v3866 = vadd.f32 %v3858, 1e-06
        %v3867 = vadd.f32 %v3859, 1e-06
        %v3868 = vadd.f32 %v3860, 1e-06
        %v3869 = vrsqrt.pop %v3861
        %v3870 = vrsqrt.pop %v3862
        %v3871 = vrsqrt.pop %v3863
        %v3872 = vrsqrt.pop %v3864
        %v3873 = vrsqrt.pop %v3865
        %v3874 = vrsqrt.pop %v3866
        %v3875 = vrsqrt.pop %v3867
        %v3876 = vrsqrt.pop %v3868
        %v3877 = vmul.f32 %v3813, %v3869
        %v3878 = vmul.f32 %v3814, %v3870
        %v3879 = vmul.f32 %v3815, %v3871
        %v3880 = vmul.f32 %v3816, %v3872
        %v3881 = vmul.f32 %v3817, %v3873
        %v3882 = vmul.f32 %v3818, %v3874
        %v3883 = vmul.f32 %v3819, %v3875
        %v3884 = vmul.f32 %v3820, %v3876
        %v3885 = vpack.c.bf16 %v3877, %v3877
        %v3886 = vpack.c.bf16 %v3879, %v3879
        %v3887 = vpack.c.bf16 %v3881, %v3881
        %v3888 = vpack.c.bf16 %v3883, %v3883
        %s3889 = scalar_lea.vmem %s7, 32
        %v3890 = vld [vmem:[%s3889] sm:$0xf]
        %v3891 = vld [vmem:[%s3889 + $0x4] sm:$0xf]
        %v3892 = vld [vmem:[%s3889 + $0x8] sm:$0xf]
        %v3893 = vld [vmem:[%s3889 + $0xc] sm:$0xf]
        %v3894 = vld [vmem:[%s3889 + $0x10] sm:$0xf]
        %v3895 = vld [vmem:[%s3889 + $0x14] sm:$0xf]
        %v3896 = vld [vmem:[%s3889 + $0x18] sm:$0xf]
        %v3897 = vld [vmem:[%s3889 + $0x1c] sm:$0xf]
        %v3902 = vcombine.low %v3885, %v3886
        %v3903 = vcombine.low %v3887, %v3888
        %v3905 = vunpack.c.l.s4 1983009808
        %v3906 = vunpack.c.0.s8 %v3905
        %v3907 = vlaneseq
        %v3908 = vshrl.u32 %v3907, 7
        %v3909 = vsub.s32 %v3906, %v3908
        %v3910 = vrot.slane %v3902, %v3909
        %v3912 = vunpack.c.l.s4 1983009808
        %v3913 = vunpack.c.0.s8 %v3912
        %v3914 = vlaneseq
        %v3915 = vshrl.u32 %v3914, 7
        %v3916 = vsub.s32 %v3913, %v3915
        %v3917 = vrot.slane %v3903, %v3916
        %v3918 = vcombine.low %v3910, %v3917
        %v3927 = vunpack.c.l.b16 %v3890
        %v3928 = vunpack.c.l.b16 %v3891
        %v3929 = vunpack.c.l.b16 %v3892
        %v3930 = vunpack.c.l.b16 %v3893
        %v3931 = vunpack.c.l.b16 %v3894
        %v3932 = vunpack.c.l.b16 %v3895
        %v3933 = vunpack.c.l.b16 %v3896
        %v3934 = vunpack.c.l.b16 %v3897
        %v3935 = vpack.c.b16 %v3928, %v3927
        %v3936 = vpack.c.b16 %v3930, %v3929
        %v3937 = vpack.c.b16 %v3932, %v3931
        %v3938 = vpack.c.b16 %v3934, %v3933
        %v3944 = vsel %vm3426, %v3918, 0
        %3946 = vmatprep.subr.bf16.mxu0 0
        %3947 = vmatpush1.bf16.msra.mxu0 0
        %3948 = vmatprep.subr.bf16.mxu0 0
        %3949 = vmatpush1.bf16.msra.mxu0 0
        %3950 = vmatprep.subr.bf16.mxu0 0
        %3951 = vmatpush1.bf16.msra.mxu0 0
        %3952 = vmatprep.subr.bf16.mxu0 0
        %3953 = vmatpush1.bf16.msra.mxu0 0
        %3954 = vmatprep.subr.bf16.mxu0 0
        %3955 = vmatpush1.bf16.msra.mxu0 %v3938
        %3956 = vmatprep.subr.bf16.mxu0 0
        %3957 = vmatpush1.bf16.msra.mxu0 %v3937
        %3958 = vmatprep.subr.bf16.mxu0 0
        %3959 = vmatpush1.bf16.msra.mxu0 %v3936
        %3960 = vmatprep.subr.bf16.mxu0 0
        %3961 = vmatpush1.bf16.msra.mxu0 %v3935
        %3962 = vmatprep.subr.bf16.mxu0 0
        %3963 = vmatpush2.bf16.msra.mxu0 0
        %3964 = vmatprep.subr.bf16.mxu0 0
        %3965 = vmatpush2.bf16.msra.mxu0 0
        %3966 = vmatprep.subr.bf16.mxu0 0
        %3967 = vmatpush2.bf16.msra.mxu0 0
        %3968 = vmatprep.subr.bf16.mxu0 0
        %3969 = vmatpush2.bf16.msra.mxu0 0
        %3970 = vmatprep.subr.bf16.mxu0 0
        %3971 = vmatpush2.bf16.msra.mxu0 0
        %3972 = vmatprep.subr.bf16.mxu0 0
        %3973 = vmatpush2.bf16.msra.mxu0 0
        %3974 = vmatprep.subr.bf16.mxu0 0
        %3975 = vmatpush2.bf16.msra.mxu0 0
        %3976 = vmatprep.subr.bf16.mxu0 0
        %3977 = vmatpush2.bf16.msra.mxu0 0
        %3978 = vmatprep.mubr.bf16.mxu0 0
        %3979 = vmatmul.mubr.bf16.gmra.mxu0 %v3944
        %v3980 = vpop.f32.mrf.mxu0
        %v3981 = vadd.f32 0.0, %v3980
        %v3982 = vpop.f32.mrf.mxu0
        %v3983 = vpop.f32.mrf.mxu0
        %v3984 = vadd.f32 0.0, %v3983
        %v3985 = vpop.f32.mrf.mxu0
        %3986 = vdwg.mxu0
        %v3989 = vcombine.high %v3981, %v3981
        %v3990 = vcombine.high %v3984, %v3984
        %v3993 = vadd.f32 %v3753, %v3981
        %v3994 = vadd.f32 %v3761, %v3989
        %v3995 = vadd.f32 %v3756, %v3984
        %v3996 = vadd.f32 %v3762, %v3990
        %v3997 = vpack.c.bf16 %v3878, %v3878
        %v3998 = vpack.c.bf16 %v3880, %v3880
        %v3999 = vpack.c.bf16 %v3882, %v3882
        %v4000 = vpack.c.bf16 %v3884, %v3884
        %s4001 = scalar_lea.vmem %s7, 96
        %v4002 = vld [vmem:[%s4001] sm:$0xf]
        %v4003 = vld [vmem:[%s4001 + $0x4] sm:$0xf]
        %v4004 = vld [vmem:[%s4001 + $0x8] sm:$0xf]
        %v4005 = vld [vmem:[%s4001 + $0xc] sm:$0xf]
        %v4006 = vld [vmem:[%s4001 + $0x10] sm:$0xf]
        %v4007 = vld [vmem:[%s4001 + $0x14] sm:$0xf]
        %v4008 = vld [vmem:[%s4001 + $0x18] sm:$0xf]
        %v4009 = vld [vmem:[%s4001 + $0x1c] sm:$0xf]
        %v4014 = vcombine.low %v3997, %v3998
        %v4015 = vcombine.low %v3999, %v4000
        %v4017 = vunpack.c.l.s4 1983009808
        %v4018 = vunpack.c.0.s8 %v4017
        %v4019 = vlaneseq
        %v4020 = vshrl.u32 %v4019, 7
        %v4021 = vsub.s32 %v4018, %v4020
        %v4022 = vrot.slane %v4014, %v4021
        %v4024 = vunpack.c.l.s4 1983009808
        %v4025 = vunpack.c.0.s8 %v4024
        %v4026 = vlaneseq
        %v4027 = vshrl.u32 %v4026, 7
        %v4028 = vsub.s32 %v4025, %v4027
        %v4029 = vrot.slane %v4015, %v4028
        %v4030 = vcombine.low %v4022, %v4029
        %v4039 = vunpack.c.l.b16 %v4002
        %v4040 = vunpack.c.l.b16 %v4003
        %v4041 = vunpack.c.l.b16 %v4004
        %v4042 = vunpack.c.l.b16 %v4005
        %v4043 = vunpack.c.l.b16 %v4006
        %v4044 = vunpack.c.l.b16 %v4007
        %v4045 = vunpack.c.l.b16 %v4008
        %v4046 = vunpack.c.l.b16 %v4009
        %v4047 = vpack.c.b16 %v4040, %v4039
        %v4048 = vpack.c.b16 %v4042, %v4041
        %v4049 = vpack.c.b16 %v4044, %v4043
        %v4050 = vpack.c.b16 %v4046, %v4045
        %v4056 = vsel %vm3426, %v4030, 0
        %4058 = vmatprep.subr.bf16.mxu0 0
        %4059 = vmatpush1.bf16.msra.mxu0 0
        %4060 = vmatprep.subr.bf16.mxu0 0
        %4061 = vmatpush1.bf16.msra.mxu0 0
        %4062 = vmatprep.subr.bf16.mxu0 0
        %4063 = vmatpush1.bf16.msra.mxu0 0
        %4064 = vmatprep.subr.bf16.mxu0 0
        %4065 = vmatpush1.bf16.msra.mxu0 0
        %4066 = vmatprep.subr.bf16.mxu0 0
        %4067 = vmatpush1.bf16.msra.mxu0 %v4050
        %4068 = vmatprep.subr.bf16.mxu0 0
        %4069 = vmatpush1.bf16.msra.mxu0 %v4049
        %4070 = vmatprep.subr.bf16.mxu0 0
        %4071 = vmatpush1.bf16.msra.mxu0 %v4048
        %4072 = vmatprep.subr.bf16.mxu0 0
        %4073 = vmatpush1.bf16.msra.mxu0 %v4047
        %4074 = vmatprep.subr.bf16.mxu0 0
        %4075 = vmatpush2.bf16.msra.mxu0 0
        %4076 = vmatprep.subr.bf16.mxu0 0
        %4077 = vmatpush2.bf16.msra.mxu0 0
        %4078 = vmatprep.subr.bf16.mxu0 0
        %4079 = vmatpush2.bf16.msra.mxu0 0
        %4080 = vmatprep.subr.bf16.mxu0 0
        %4081 = vmatpush2.bf16.msra.mxu0 0
        %4082 = vmatprep.subr.bf16.mxu0 0
        %4083 = vmatpush2.bf16.msra.mxu0 0
        %4084 = vmatprep.subr.bf16.mxu0 0
        %4085 = vmatpush2.bf16.msra.mxu0 0
        %4086 = vmatprep.subr.bf16.mxu0 0
        %4087 = vmatpush2.bf16.msra.mxu0 0
        %4088 = vmatprep.subr.bf16.mxu0 0
        %4089 = vmatpush2.bf16.msra.mxu0 0
        %4090 = vmatprep.mubr.bf16.mxu0 0
        %4091 = vmatmul.mubr.bf16.gmra.mxu0 %v4056
        %v4092 = vpop.f32.mrf.mxu0
        %v4093 = vadd.f32 0.0, %v4092
        %v4094 = vpop.f32.mrf.mxu0
        %v4095 = vpop.f32.mrf.mxu0
        %v4096 = vadd.f32 0.0, %v4095
        %v4097 = vpop.f32.mrf.mxu0
        %4098 = vdwg.mxu0
        %v4101 = vcombine.high %v4093, %v4093
        %v4102 = vcombine.high %v4096, %v4096
        %v4105 = vadd.f32 %v3993, %v4093
        %v4106 = vadd.f32 %v3994, %v4101
        %v4107 = vadd.f32 %v3995, %v4096
        %v4108 = vadd.f32 %v3996, %v4102
        %v4109 = vld [vmem:[%s8] sm:$0x1]
        %v4111 = vlaneseq
        %v4112 = vshrl.u32 %v4111, 7
        %v4113 = vsub.s32 0, %v4112
        %v4114 = vrot.slane %v4109, %v4113
        %v4116 = vadd.f32 %v4105, %v4114
        %v4117 = vadd.f32 %v4106, %v4114
        %v4118 = vadd.f32 %v4107, %v4114
        %v4119 = vadd.f32 %v4108, %v4114
        %4120 = vst [vmem:[%s565] sm:$0xf] %v4116
        %4121 = vst [vmem:[%s565 + $0x4] sm:$0xf] %v4117
        %4122 = vst [vmem:[%s565 + $0x8] sm:$0xf] %v4118
        %4123 = vst [vmem:[%s565 + $0xc] sm:$0xf] %v4119
        %v4124 = vld [vmem:[%s565] ss:$2 sm:$0x3]
        %s4125 = scalar_lea.vmem %s565, 4 [#allocation4]
        %v4126 = vld [vmem:[%s4125] ss:$2 sm:$0x3]
        %s4127 = scalar_lea.vmem %s565, 8 [#allocation4]
        %v4128 = vld [vmem:[%s4127] ss:$2 sm:$0x3]
        %s4129 = scalar_lea.vmem %s565, 12 [#allocation4]
        %v4130 = vld [vmem:[%s4129] ss:$2 sm:$0x3]
        %vm4131 = vcmask 1041408
        %v4132 = vsel %vm4131, %v4124, 0.0
        %4133 = vadd.xlane.f32.xlu0 %v4132
        %v4134 = vpop.xlane.xlu0 %4133
        %v4135 = vsel %vm4131, %v4126, 0.0
        %4136 = vadd.xlane.f32.xlu0 %v4135
        %v4137 = vpop.xlane.xlu0 %4136
        %v4138 = vsel %vm4131, %v4128, 0.0
        %4139 = vadd.xlane.f32.xlu0 %v4138
        %v4140 = vpop.xlane.xlu0 %4139
        %v4141 = vsel %vm4131, %v4130, 0.0
        %4142 = vadd.xlane.f32.xlu0 %v4141
        %v4143 = vpop.xlane.xlu0 %4142
        %v4144 = vrcp.pop 128.0
        %v4145 = vmul.f32 %v4134, %v4144
        %v4146 = vmul.f32 %v4137, %v4144
        %v4147 = vmul.f32 %v4140, %v4144
        %v4148 = vmul.f32 %v4143, %v4144
        %v4149 = vsub.f32 %v4124, %v4145
        %v4150 = vsub.f32 %v4126, %v4146
        %v4151 = vsub.f32 %v4128, %v4147
        %v4152 = vsub.f32 %v4130, %v4148
        %v4153 = vmul.f32 %v4149, %v4149
        %v4154 = vmul.f32 %v4150, %v4150
        %v4155 = vmul.f32 %v4151, %v4151
        %v4156 = vmul.f32 %v4152, %v4152
        %v4157 = vsel %vm4131, %v4153, 0.0
        %4158 = vadd.xlane.f32.xlu0 %v4157
        %v4159 = vpop.xlane.xlu0 %4158
        %v4160 = vsel %vm4131, %v4154, 0.0
        %4161 = vadd.xlane.f32.xlu0 %v4160
        %v4162 = vpop.xlane.xlu0 %4161
        %v4163 = vsel %vm4131, %v4155, 0.0
        %4164 = vadd.xlane.f32.xlu0 %v4163
        %v4165 = vpop.xlane.xlu0 %4164
        %v4166 = vsel %vm4131, %v4156, 0.0
        %4167 = vadd.xlane.f32.xlu0 %v4166
        %v4168 = vpop.xlane.xlu0 %4167
        %v4169 = vmul.f32 %v4159, %v4144
        %v4170 = vmul.f32 %v4162, %v4144
        %v4171 = vmul.f32 %v4165, %v4144
        %v4172 = vmul.f32 %v4168, %v4144
        %v4173 = vadd.f32 %v4169, 1e-06
        %v4174 = vadd.f32 %v4170, 1e-06
        %v4175 = vadd.f32 %v4171, 1e-06
        %v4176 = vadd.f32 %v4172, 1e-06
        %v4177 = vrsqrt.pop %v4173
        %v4178 = vrsqrt.pop %v4174
        %v4179 = vrsqrt.pop %v4175
        %v4180 = vrsqrt.pop %v4176
        %v4181 = vmul.f32 %v4149, %v4177
        %v4182 = vmul.f32 %v4150, %v4178
        %v4183 = vmul.f32 %v4151, %v4179
        %v4184 = vmul.f32 %v4152, %v4180
        %v4185 = vpack.c.bf16 %v4181, %v4181
        %v4186 = vpack.c.bf16 %v4183, %v4183
        %v4187 = vld [vmem:[%s9] sm:$0xff]
        %v4188 = vld [vmem:[%s9 + $0x8] sm:$0xff]
        %v4189 = vld [vmem:[%s9 + $0x10] sm:$0xff]
        %v4190 = vld [vmem:[%s9 + $0x18] sm:$0xff]
        %v4191 = vld [vmem:[%s9 + $0x20] sm:$0xff]
        %v4192 = vld [vmem:[%s9 + $0x28] sm:$0xff]
        %v4193 = vld [vmem:[%s9 + $0x30] sm:$0xff]
        %v4194 = vld [vmem:[%s9 + $0x38] sm:$0xff]
        %v4195 = vld [vmem:[%s9 + $0x40] sm:$0xff]
        %v4196 = vld [vmem:[%s9 + $0x48] sm:$0xff]
        %v4197 = vld [vmem:[%s9 + $0x50] sm:$0xff]
        %v4198 = vld [vmem:[%s9 + $0x58] sm:$0xff]
        %v4199 = vld [vmem:[%s9 + $0x60] sm:$0xff]
        %v4200 = vld [vmem:[%s9 + $0x68] sm:$0xff]
        %v4201 = vld [vmem:[%s9 + $0x70] sm:$0xff]
        %v4202 = vld [vmem:[%s9 + $0x78] sm:$0xff]
        %v4203 = vpack.c.bf16 %v4182, %v4182
        %v4204 = vpack.c.bf16 %v4184, %v4184
        %s4205 = scalar_lea.vmem %s9, 256
        %v4206 = vld [vmem:[%s4205] sm:$0xff]
        %v4207 = vld [vmem:[%s4205 + $0x8] sm:$0xff]
        %v4208 = vld [vmem:[%s4205 + $0x10] sm:$0xff]
        %v4209 = vld [vmem:[%s4205 + $0x18] sm:$0xff]
        %v4210 = vld [vmem:[%s4205 + $0x20] sm:$0xff]
        %v4211 = vld [vmem:[%s4205 + $0x28] sm:$0xff]
        %v4212 = vld [vmem:[%s4205 + $0x30] sm:$0xff]
        %v4213 = vld [vmem:[%s4205 + $0x38] sm:$0xff]
        %v4214 = vld [vmem:[%s4205 + $0x40] sm:$0xff]
        %v4215 = vld [vmem:[%s4205 + $0x48] sm:$0xff]
        %v4216 = vld [vmem:[%s4205 + $0x50] sm:$0xff]
        %v4217 = vld [vmem:[%s4205 + $0x58] sm:$0xff]
        %v4218 = vld [vmem:[%s4205 + $0x60] sm:$0xff]
        %v4219 = vld [vmem:[%s4205 + $0x68] sm:$0xff]
        %v4220 = vld [vmem:[%s4205 + $0x70] sm:$0xff]
        %v4221 = vld [vmem:[%s4205 + $0x78] sm:$0xff]
        %v4224 = vcombine.low %v4203, %v4204
        %v4226 = vunpack.c.l.s4 1966171168
        %v4227 = vunpack.c.0.s8 %v4226
        %v4228 = vlaneseq
        %v4229 = vshrl.u32 %v4228, 7
        %v4230 = vsub.s32 %v4227, %v4229
        %v4231 = vrot.slane %v4224, %v4230
        %v4233 = vunpack.c.l.s4 1966171168
        %v4234 = vunpack.c.0.s8 %v4233
        %v4235 = vlaneseq
        %v4236 = vshrl.u32 %v4235, 7
        %v4237 = vsub.s32 %v4234, %v4236
        %v4238 = vrot.slane %v4231, %v4237
        %v4256 = vunpack.c.l.b16 %v4206
        %v4257 = vunpack.c.h.b16 %v4206
        %v4258 = vunpack.c.l.b16 %v4207
        %v4259 = vunpack.c.h.b16 %v4207
        %v4260 = vunpack.c.l.b16 %v4208
        %v4261 = vunpack.c.h.b16 %v4208
        %v4262 = vunpack.c.l.b16 %v4209
        %v4263 = vunpack.c.h.b16 %v4209
        %v4264 = vunpack.c.l.b16 %v4210
        %v4265 = vunpack.c.h.b16 %v4210
        %v4266 = vunpack.c.l.b16 %v4211
        %v4267 = vunpack.c.h.b16 %v4211
        %v4268 = vunpack.c.l.b16 %v4212
        %v4269 = vunpack.c.h.b16 %v4212
        %v4270 = vunpack.c.l.b16 %v4213
        %v4271 = vunpack.c.h.b16 %v4213
        %v4272 = vunpack.c.l.b16 %v4214
        %v4273 = vunpack.c.h.b16 %v4214
        %v4274 = vunpack.c.l.b16 %v4215
        %v4275 = vunpack.c.h.b16 %v4215
        %v4276 = vunpack.c.l.b16 %v4216
        %v4277 = vunpack.c.h.b16 %v4216
        %v4278 = vunpack.c.l.b16 %v4217
        %v4279 = vunpack.c.h.b16 %v4217
        %v4280 = vunpack.c.l.b16 %v4218
        %v4281 = vunpack.c.h.b16 %v4218
        %v4282 = vunpack.c.l.b16 %v4219
        %v4283 = vunpack.c.h.b16 %v4219
        %v4284 = vunpack.c.l.b16 %v4220
        %v4285 = vunpack.c.h.b16 %v4220
        %v4286 = vunpack.c.l.b16 %v4221
        %v4287 = vunpack.c.h.b16 %v4221
        %v4288 = vpack.c.b16 %v4258, %v4256
        %v4289 = vpack.c.b16 %v4259, %v4257
        %v4290 = vpack.c.b16 %v4262, %v4260
        %v4291 = vpack.c.b16 %v4263, %v4261
        %v4292 = vpack.c.b16 %v4266, %v4264
        %v4293 = vpack.c.b16 %v4267, %v4265
        %v4294 = vpack.c.b16 %v4270, %v4268
        %v4295 = vpack.c.b16 %v4271, %v4269
        %v4296 = vpack.c.b16 %v4274, %v4272
        %v4297 = vpack.c.b16 %v4275, %v4273
        %v4298 = vpack.c.b16 %v4278, %v4276
        %v4299 = vpack.c.b16 %v4279, %v4277
        %v4300 = vpack.c.b16 %v4282, %v4280
        %v4301 = vpack.c.b16 %v4283, %v4281
        %v4302 = vpack.c.b16 %v4286, %v4284
        %v4303 = vpack.c.b16 %v4287, %v4285
        %4320 = vmatprep.subr.bf16.mxu0 %v4303
        %4321 = vmatpush1.bf16.msra.mxu0 %v4302
        %4322 = vmatprep.subr.bf16.mxu0 %v4301
        %4323 = vmatpush1.bf16.msra.mxu0 %v4300
        %4324 = vmatprep.subr.bf16.mxu0 %v4299
        %4325 = vmatpush1.bf16.msra.mxu0 %v4298
        %4326 = vmatprep.subr.bf16.mxu0 %v4297
        %4327 = vmatpush1.bf16.msra.mxu0 %v4296
        %4328 = vmatprep.subr.bf16.mxu0 %v4295
        %4329 = vmatpush1.bf16.msra.mxu0 %v4294
        %4330 = vmatprep.subr.bf16.mxu0 %v4293
        %4331 = vmatpush1.bf16.msra.mxu0 %v4292
        %4332 = vmatprep.subr.bf16.mxu0 %v4291
        %4333 = vmatpush1.bf16.msra.mxu0 %v4290
        %4334 = vmatprep.subr.bf16.mxu0 %v4289
        %4335 = vmatpush1.bf16.msra.mxu0 %v4288
        %4336 = vmatprep.subr.bf16.mxu0 0
        %4337 = vmatpush2.bf16.msra.mxu0 0
        %4338 = vmatprep.subr.bf16.mxu0 0
        %4339 = vmatpush2.bf16.msra.mxu0 0
        %4340 = vmatprep.subr.bf16.mxu0 0
        %4341 = vmatpush2.bf16.msra.mxu0 0
        %4342 = vmatprep.subr.bf16.mxu0 0
        %4343 = vmatpush2.bf16.msra.mxu0 0
        %4344 = vmatprep.subr.bf16.mxu0 0
        %4345 = vmatpush2.bf16.msra.mxu0 0
        %4346 = vmatprep.subr.bf16.mxu0 0
        %4347 = vmatpush2.bf16.msra.mxu0 0
        %4348 = vmatprep.subr.bf16.mxu0 0
        %4349 = vmatpush2.bf16.msra.mxu0 0
        %4350 = vmatprep.subr.bf16.mxu0 0
        %4351 = vmatpush2.bf16.msra.mxu0 0
        %4352 = vmatprep.mubr.bf16.mxu0 0
        %4353 = vmatmul.mubr.bf16.gmra.mxu0 %v4238
        %v4354 = vpop.f32.mrf.mxu0
        %v4355 = vadd.f32 0.0, %v4354
        %v4356 = vpop.f32.mrf.mxu0
        %v4357 = vadd.f32 0.0, %v4356
        %v4358 = vpop.f32.mrf.mxu0
        %v4359 = vpop.f32.mrf.mxu0
        %4360 = vdwg.mxu0
        %v4363 = vcombine.low %v4185, %v4186
        %v4365 = vunpack.c.l.s4 1966171168
        %v4366 = vunpack.c.0.s8 %v4365
        %v4367 = vlaneseq
        %v4368 = vshrl.u32 %v4367, 7
        %v4369 = vsub.s32 %v4366, %v4368
        %v4370 = vrot.slane %v4363, %v4369
        %v4372 = vunpack.c.l.s4 1966171168
        %v4373 = vunpack.c.0.s8 %v4372
        %v4374 = vlaneseq
        %v4375 = vshrl.u32 %v4374, 7
        %v4376 = vsub.s32 %v4373, %v4375
        %v4377 = vrot.slane %v4370, %v4376
        %v4395 = vunpack.c.l.b16 %v4187
        %v4396 = vunpack.c.h.b16 %v4187
        %v4397 = vunpack.c.l.b16 %v4188
        %v4398 = vunpack.c.h.b16 %v4188
        %v4399 = vunpack.c.l.b16 %v4189
        %v4400 = vunpack.c.h.b16 %v4189
        %v4401 = vunpack.c.l.b16 %v4190
        %v4402 = vunpack.c.h.b16 %v4190
        %v4403 = vunpack.c.l.b16 %v4191
        %v4404 = vunpack.c.h.b16 %v4191
        %v4405 = vunpack.c.l.b16 %v4192
        %v4406 = vunpack.c.h.b16 %v4192
        %v4407 = vunpack.c.l.b16 %v4193
        %v4408 = vunpack.c.h.b16 %v4193
        %v4409 = vunpack.c.l.b16 %v4194
        %v4410 = vunpack.c.h.b16 %v4194
        %v4411 = vunpack.c.l.b16 %v4195
        %v4412 = vunpack.c.h.b16 %v4195
        %v4413 = vunpack.c.l.b16 %v4196
        %v4414 = vunpack.c.h.b16 %v4196
        %v4415 = vunpack.c.l.b16 %v4197
        %v4416 = vunpack.c.h.b16 %v4197
        %v4417 = vunpack.c.l.b16 %v4198
        %v4418 = vunpack.c.h.b16 %v4198
        %v4419 = vunpack.c.l.b16 %v4199
        %v4420 = vunpack.c.h.b16 %v4199
        %v4421 = vunpack.c.l.b16 %v4200
        %v4422 = vunpack.c.h.b16 %v4200
        %v4423 = vunpack.c.l.b16 %v4201
        %v4424 = vunpack.c.h.b16 %v4201
        %v4425 = vunpack.c.l.b16 %v4202
        %v4426 = vunpack.c.h.b16 %v4202
        %v4427 = vpack.c.b16 %v4397, %v4395
        %v4428 = vpack.c.b16 %v4398, %v4396
        %v4429 = vpack.c.b16 %v4401, %v4399
        %v4430 = vpack.c.b16 %v4402, %v4400
        %v4431 = vpack.c.b16 %v4405, %v4403
        %v4432 = vpack.c.b16 %v4406, %v4404
        %v4433 = vpack.c.b16 %v4409, %v4407
        %v4434 = vpack.c.b16 %v4410, %v4408
        %v4435 = vpack.c.b16 %v4413, %v4411
        %v4436 = vpack.c.b16 %v4414, %v4412
        %v4437 = vpack.c.b16 %v4417, %v4415
        %v4438 = vpack.c.b16 %v4418, %v4416
        %v4439 = vpack.c.b16 %v4421, %v4419
        %v4440 = vpack.c.b16 %v4422, %v4420
        %v4441 = vpack.c.b16 %v4425, %v4423
        %v4442 = vpack.c.b16 %v4426, %v4424
        %4459 = vmatprep.subr.bf16.mxu0 %v4442
        %4460 = vmatpush1.bf16.msra.mxu0 %v4441
        %4461 = vmatprep.subr.bf16.mxu0 %v4440
        %4462 = vmatpush1.bf16.msra.mxu0 %v4439
        %4463 = vmatprep.subr.bf16.mxu0 %v4438
        %4464 = vmatpush1.bf16.msra.mxu0 %v4437
        %4465 = vmatprep.subr.bf16.mxu0 %v4436
        %4466 = vmatpush1.bf16.msra.mxu0 %v4435
        %4467 = vmatprep.subr.bf16.mxu0 %v4434
        %4468 = vmatpush1.bf16.msra.mxu0 %v4433
        %4469 = vmatprep.subr.bf16.mxu0 %v4432
        %4470 = vmatpush1.bf16.msra.mxu0 %v4431
        %4471 = vmatprep.subr.bf16.mxu0 %v4430
        %4472 = vmatpush1.bf16.msra.mxu0 %v4429
        %4473 = vmatprep.subr.bf16.mxu0 %v4428
        %4474 = vmatpush1.bf16.msra.mxu0 %v4427
        %4475 = vmatprep.subr.bf16.mxu0 0
        %4476 = vmatpush2.bf16.msra.mxu0 0
        %4477 = vmatprep.subr.bf16.mxu0 0
        %4478 = vmatpush2.bf16.msra.mxu0 0
        %4479 = vmatprep.subr.bf16.mxu0 0
        %4480 = vmatpush2.bf16.msra.mxu0 0
        %4481 = vmatprep.subr.bf16.mxu0 0
        %4482 = vmatpush2.bf16.msra.mxu0 0
        %4483 = vmatprep.subr.bf16.mxu0 0
        %4484 = vmatpush2.bf16.msra.mxu0 0
        %4485 = vmatprep.subr.bf16.mxu0 0
        %4486 = vmatpush2.bf16.msra.mxu0 0
        %4487 = vmatprep.subr.bf16.mxu0 0
        %4488 = vmatpush2.bf16.msra.mxu0 0
        %4489 = vmatprep.subr.bf16.mxu0 0
        %4490 = vmatpush2.bf16.msra.mxu0 0
        %4491 = vmatprep.mubr.bf16.mxu0 0
        %4492 = vmatmul.mubr.bf16.gmra.mxu0 %v4377
        %v4493 = vpop.f32.mrf.mxu0
        %v4494 = vadd.f32 %v4355, %v4493
        %v4495 = vpop.f32.mrf.mxu0
        %v4496 = vadd.f32 %v4357, %v4495
        %v4497 = vpop.f32.mrf.mxu0
        %v4498 = vpop.f32.mrf.mxu0
        %4499 = vdwg.mxu0
        %v4502 = vcombine.low %v4494, %v4496
        %v4504 = vunpack.c.l.s4 1983009808
        %v4505 = vunpack.c.0.s8 %v4504
        %v4506 = vlaneseq
        %v4507 = vshrl.u32 %v4506, 7
        %v4508 = vsub.s32 %v4505, %v4507
        %v4509 = vrot.slane %v4502, %v4508
        %v4510 = vcombine.high %v4509, %v4509
        %s4513 = scalar_lea.vmem %s565, 1 [#allocation4]
        %v4514 = vld [vmem:[%s4513] ss:$2 sm:$0x3]
        %s4515 = scalar_lea.vmem %s565, 5 [#allocation4]
        %v4516 = vld [vmem:[%s4515] ss:$2 sm:$0x3]
        %s4517 = scalar_lea.vmem %s565, 9 [#allocation4]
        %v4518 = vld [vmem:[%s4517] ss:$2 sm:$0x3]
        %s4519 = scalar_lea.vmem %s565, 13 [#allocation4]
        %v4520 = vld [vmem:[%s4519] ss:$2 sm:$0x3]
        %v4521 = vsel %vm4131, %v4514, 0.0
        %4522 = vadd.xlane.f32.xlu0 %v4521
        %v4523 = vpop.xlane.xlu0 %4522
        %v4524 = vsel %vm4131, %v4516, 0.0
        %4525 = vadd.xlane.f32.xlu0 %v4524
        %v4526 = vpop.xlane.xlu0 %4525
        %v4527 = vsel %vm4131, %v4518, 0.0
        %4528 = vadd.xlane.f32.xlu0 %v4527
        %v4529 = vpop.xlane.xlu0 %4528
        %v4530 = vsel %vm4131, %v4520, 0.0
        %4531 = vadd.xlane.f32.xlu0 %v4530
        %v4532 = vpop.xlane.xlu0 %4531
        %v4533 = vmul.f32 %v4523, %v4144
        %v4534 = vmul.f32 %v4526, %v4144
        %v4535 = vmul.f32 %v4529, %v4144
        %v4536 = vmul.f32 %v4532, %v4144
        %v4537 = vsub.f32 %v4514, %v4533
        %v4538 = vsub.f32 %v4516, %v4534
        %v4539 = vsub.f32 %v4518, %v4535
        %v4540 = vsub.f32 %v4520, %v4536
        %v4541 = vmul.f32 %v4537, %v4537
        %v4542 = vmul.f32 %v4538, %v4538
        %v4543 = vmul.f32 %v4539, %v4539
        %v4544 = vmul.f32 %v4540, %v4540
        %v4545 = vsel %vm4131, %v4541, 0.0
        %4546 = vadd.xlane.f32.xlu0 %v4545
        %v4547 = vpop.xlane.xlu0 %4546
        %v4548 = vsel %vm4131, %v4542, 0.0
        %4549 = vadd.xlane.f32.xlu0 %v4548
        %v4550 = vpop.xlane.xlu0 %4549
        %v4551 = vsel %vm4131, %v4543, 0.0
        %4552 = vadd.xlane.f32.xlu0 %v4551
        %v4553 = vpop.xlane.xlu0 %4552
        %v4554 = vsel %vm4131, %v4544, 0.0
        %4555 = vadd.xlane.f32.xlu0 %v4554
        %v4556 = vpop.xlane.xlu0 %4555
        %v4557 = vmul.f32 %v4547, %v4144
        %v4558 = vmul.f32 %v4550, %v4144
        %v4559 = vmul.f32 %v4553, %v4144
        %v4560 = vmul.f32 %v4556, %v4144
        %v4561 = vadd.f32 %v4557, 1e-06
        %v4562 = vadd.f32 %v4558, 1e-06
        %v4563 = vadd.f32 %v4559, 1e-06
        %v4564 = vadd.f32 %v4560, 1e-06
        %v4565 = vrsqrt.pop %v4561
        %v4566 = vrsqrt.pop %v4562
        %v4567 = vrsqrt.pop %v4563
        %v4568 = vrsqrt.pop %v4564
        %v4569 = vmul.f32 %v4537, %v4565
        %v4570 = vmul.f32 %v4538, %v4566
        %v4571 = vmul.f32 %v4539, %v4567
        %v4572 = vmul.f32 %v4540, %v4568
        %v4573 = vpack.c.bf16 %v4569, %v4569
        %v4574 = vpack.c.bf16 %v4571, %v4571
        %s4575 = scalar_lea.vmem %s9, 128
        %v4576 = vld [vmem:[%s4575] sm:$0xff]
        %v4577 = vld [vmem:[%s4575 + $0x8] sm:$0xff]
        %v4578 = vld [vmem:[%s4575 + $0x10] sm:$0xff]
        %v4579 = vld [vmem:[%s4575 + $0x18] sm:$0xff]
        %v4580 = vld [vmem:[%s4575 + $0x20] sm:$0xff]
        %v4581 = vld [vmem:[%s4575 + $0x28] sm:$0xff]
        %v4582 = vld [vmem:[%s4575 + $0x30] sm:$0xff]
        %v4583 = vld [vmem:[%s4575 + $0x38] sm:$0xff]
        %v4584 = vld [vmem:[%s4575 + $0x40] sm:$0xff]
        %v4585 = vld [vmem:[%s4575 + $0x48] sm:$0xff]
        %v4586 = vld [vmem:[%s4575 + $0x50] sm:$0xff]
        %v4587 = vld [vmem:[%s4575 + $0x58] sm:$0xff]
        %v4588 = vld [vmem:[%s4575 + $0x60] sm:$0xff]
        %v4589 = vld [vmem:[%s4575 + $0x68] sm:$0xff]
        %v4590 = vld [vmem:[%s4575 + $0x70] sm:$0xff]
        %v4591 = vld [vmem:[%s4575 + $0x78] sm:$0xff]
        %v4594 = vcombine.low %v4573, %v4574
        %v4596 = vunpack.c.l.s4 1966171168
        %v4597 = vunpack.c.0.s8 %v4596
        %v4598 = vlaneseq
        %v4599 = vshrl.u32 %v4598, 7
        %v4600 = vsub.s32 %v4597, %v4599
        %v4601 = vrot.slane %v4594, %v4600
        %v4603 = vunpack.c.l.s4 1966171168
        %v4604 = vunpack.c.0.s8 %v4603
        %v4605 = vlaneseq
        %v4606 = vshrl.u32 %v4605, 7
        %v4607 = vsub.s32 %v4604, %v4606
        %v4608 = vrot.slane %v4601, %v4607
        %v4626 = vunpack.c.l.b16 %v4576
        %v4627 = vunpack.c.h.b16 %v4576
        %v4628 = vunpack.c.l.b16 %v4577
        %v4629 = vunpack.c.h.b16 %v4577
        %v4630 = vunpack.c.l.b16 %v4578
        %v4631 = vunpack.c.h.b16 %v4578
        %v4632 = vunpack.c.l.b16 %v4579
        %v4633 = vunpack.c.h.b16 %v4579
        %v4634 = vunpack.c.l.b16 %v4580
        %v4635 = vunpack.c.h.b16 %v4580
        %v4636 = vunpack.c.l.b16 %v4581
        %v4637 = vunpack.c.h.b16 %v4581
        %v4638 = vunpack.c.l.b16 %v4582
        %v4639 = vunpack.c.h.b16 %v4582
        %v4640 = vunpack.c.l.b16 %v4583
        %v4641 = vunpack.c.h.b16 %v4583
        %v4642 = vunpack.c.l.b16 %v4584
        %v4643 = vunpack.c.h.b16 %v4584
        %v4644 = vunpack.c.l.b16 %v4585
        %v4645 = vunpack.c.h.b16 %v4585
        %v4646 = vunpack.c.l.b16 %v4586
        %v4647 = vunpack.c.h.b16 %v4586
        %v4648 = vunpack.c.l.b16 %v4587
        %v4649 = vunpack.c.h.b16 %v4587
        %v4650 = vunpack.c.l.b16 %v4588
        %v4651 = vunpack.c.h.b16 %v4588
        %v4652 = vunpack.c.l.b16 %v4589
        %v4653 = vunpack.c.h.b16 %v4589
        %v4654 = vunpack.c.l.b16 %v4590
        %v4655 = vunpack.c.h.b16 %v4590
        %v4656 = vunpack.c.l.b16 %v4591
        %v4657 = vunpack.c.h.b16 %v4591
        %v4658 = vpack.c.b16 %v4628, %v4626
        %v4659 = vpack.c.b16 %v4629, %v4627
        %v4660 = vpack.c.b16 %v4632, %v4630
        %v4661 = vpack.c.b16 %v4633, %v4631
        %v4662 = vpack.c.b16 %v4636, %v4634
        %v4663 = vpack.c.b16 %v4637, %v4635
        %v4664 = vpack.c.b16 %v4640, %v4638
        %v4665 = vpack.c.b16 %v4641, %v4639
        %v4666 = vpack.c.b16 %v4644, %v4642
        %v4667 = vpack.c.b16 %v4645, %v4643
        %v4668 = vpack.c.b16 %v4648, %v4646
        %v4669 = vpack.c.b16 %v4649, %v4647
        %v4670 = vpack.c.b16 %v4652, %v4650
        %v4671 = vpack.c.b16 %v4653, %v4651
        %v4672 = vpack.c.b16 %v4656, %v4654
        %v4673 = vpack.c.b16 %v4657, %v4655
        %4690 = vmatprep.subr.bf16.mxu0 %v4673
        %4691 = vmatpush1.bf16.msra.mxu0 %v4672
        %4692 = vmatprep.subr.bf16.mxu0 %v4671
        %4693 = vmatpush1.bf16.msra.mxu0 %v4670
        %4694 = vmatprep.subr.bf16.mxu0 %v4669
        %4695 = vmatpush1.bf16.msra.mxu0 %v4668
        %4696 = vmatprep.subr.bf16.mxu0 %v4667
        %4697 = vmatpush1.bf16.msra.mxu0 %v4666
        %4698 = vmatprep.subr.bf16.mxu0 %v4665
        %4699 = vmatpush1.bf16.msra.mxu0 %v4664
        %4700 = vmatprep.subr.bf16.mxu0 %v4663
        %4701 = vmatpush1.bf16.msra.mxu0 %v4662
        %4702 = vmatprep.subr.bf16.mxu0 %v4661
        %4703 = vmatpush1.bf16.msra.mxu0 %v4660
        %4704 = vmatprep.subr.bf16.mxu0 %v4659
        %4705 = vmatpush1.bf16.msra.mxu0 %v4658
        %4706 = vmatprep.subr.bf16.mxu0 0
        %4707 = vmatpush2.bf16.msra.mxu0 0
        %4708 = vmatprep.subr.bf16.mxu0 0
        %4709 = vmatpush2.bf16.msra.mxu0 0
        %4710 = vmatprep.subr.bf16.mxu0 0
        %4711 = vmatpush2.bf16.msra.mxu0 0
        %4712 = vmatprep.subr.bf16.mxu0 0
        %4713 = vmatpush2.bf16.msra.mxu0 0
        %4714 = vmatprep.subr.bf16.mxu0 0
        %4715 = vmatpush2.bf16.msra.mxu0 0
        %4716 = vmatprep.subr.bf16.mxu0 0
        %4717 = vmatpush2.bf16.msra.mxu0 0
        %4718 = vmatprep.subr.bf16.mxu0 0
        %4719 = vmatpush2.bf16.msra.mxu0 0
        %4720 = vmatprep.subr.bf16.mxu0 0
        %4721 = vmatpush2.bf16.msra.mxu0 0
        %4722 = vmatprep.mubr.bf16.mxu0 0
        %4723 = vmatmul.mubr.bf16.gmra.mxu0 %v4608
        %v4724 = vpop.f32.mrf.mxu0
        %v4725 = vadd.f32 0.0, %v4724
        %v4726 = vpop.f32.mrf.mxu0
        %v4727 = vadd.f32 0.0, %v4726
        %v4728 = vpop.f32.mrf.mxu0
        %v4729 = vpop.f32.mrf.mxu0
        %4730 = vdwg.mxu0
        %v4733 = vcombine.low %v4725, %v4727
        %v4735 = vunpack.c.l.s4 1983009808
        %v4736 = vunpack.c.0.s8 %v4735
        %v4737 = vlaneseq
        %v4738 = vshrl.u32 %v4737, 7
        %v4739 = vsub.s32 %v4736, %v4738
        %v4740 = vrot.slane %v4733, %v4739
        %v4741 = vcombine.high %v4740, %v4740
        %v4744 = vadd.f32 %v4509, %v4740
        %v4745 = vadd.f32 %v4510, %v4741
        %v4746 = vpack.c.bf16 %v4570, %v4570
        %v4747 = vpack.c.bf16 %v4572, %v4572
        %s4748 = scalar_lea.vmem %s9, 384
        %v4749 = vld [vmem:[%s4748] sm:$0xff]
        %v4750 = vld [vmem:[%s4748 + $0x8] sm:$0xff]
        %v4751 = vld [vmem:[%s4748 + $0x10] sm:$0xff]
        %v4752 = vld [vmem:[%s4748 + $0x18] sm:$0xff]
        %v4753 = vld [vmem:[%s4748 + $0x20] sm:$0xff]
        %v4754 = vld [vmem:[%s4748 + $0x28] sm:$0xff]
        %v4755 = vld [vmem:[%s4748 + $0x30] sm:$0xff]
        %v4756 = vld [vmem:[%s4748 + $0x38] sm:$0xff]
        %v4757 = vld [vmem:[%s4748 + $0x40] sm:$0xff]
        %v4758 = vld [vmem:[%s4748 + $0x48] sm:$0xff]
        %v4759 = vld [vmem:[%s4748 + $0x50] sm:$0xff]
        %v4760 = vld [vmem:[%s4748 + $0x58] sm:$0xff]
        %v4761 = vld [vmem:[%s4748 + $0x60] sm:$0xff]
        %v4762 = vld [vmem:[%s4748 + $0x68] sm:$0xff]
        %v4763 = vld [vmem:[%s4748 + $0x70] sm:$0xff]
        %v4764 = vld [vmem:[%s4748 + $0x78] sm:$0xff]
        %v4767 = vcombine.low %v4746, %v4747
        %v4769 = vunpack.c.l.s4 1966171168
        %v4770 = vunpack.c.0.s8 %v4769
        %v4771 = vlaneseq
        %v4772 = vshrl.u32 %v4771, 7
        %v4773 = vsub.s32 %v4770, %v4772
        %v4774 = vrot.slane %v4767, %v4773
        %v4776 = vunpack.c.l.s4 1966171168
        %v4777 = vunpack.c.0.s8 %v4776
        %v4778 = vlaneseq
        %v4779 = vshrl.u32 %v4778, 7
        %v4780 = vsub.s32 %v4777, %v4779
        %v4781 = vrot.slane %v4774, %v4780
        %v4799 = vunpack.c.l.b16 %v4749
        %v4800 = vunpack.c.h.b16 %v4749
        %v4801 = vunpack.c.l.b16 %v4750
        %v4802 = vunpack.c.h.b16 %v4750
        %v4803 = vunpack.c.l.b16 %v4751
        %v4804 = vunpack.c.h.b16 %v4751
        %v4805 = vunpack.c.l.b16 %v4752
        %v4806 = vunpack.c.h.b16 %v4752
        %v4807 = vunpack.c.l.b16 %v4753
        %v4808 = vunpack.c.h.b16 %v4753
        %v4809 = vunpack.c.l.b16 %v4754
        %v4810 = vunpack.c.h.b16 %v4754
        %v4811 = vunpack.c.l.b16 %v4755
        %v4812 = vunpack.c.h.b16 %v4755
        %v4813 = vunpack.c.l.b16 %v4756
        %v4814 = vunpack.c.h.b16 %v4756
        %v4815 = vunpack.c.l.b16 %v4757
        %v4816 = vunpack.c.h.b16 %v4757
        %v4817 = vunpack.c.l.b16 %v4758
        %v4818 = vunpack.c.h.b16 %v4758
        %v4819 = vunpack.c.l.b16 %v4759
        %v4820 = vunpack.c.h.b16 %v4759
        %v4821 = vunpack.c.l.b16 %v4760
        %v4822 = vunpack.c.h.b16 %v4760
        %v4823 = vunpack.c.l.b16 %v4761
        %v4824 = vunpack.c.h.b16 %v4761
        %v4825 = vunpack.c.l.b16 %v4762
        %v4826 = vunpack.c.h.b16 %v4762
        %v4827 = vunpack.c.l.b16 %v4763
        %v4828 = vunpack.c.h.b16 %v4763
        %v4829 = vunpack.c.l.b16 %v4764
        %v4830 = vunpack.c.h.b16 %v4764
        %v4831 = vpack.c.b16 %v4801, %v4799
        %v4832 = vpack.c.b16 %v4802, %v4800
        %v4833 = vpack.c.b16 %v4805, %v4803
        %v4834 = vpack.c.b16 %v4806, %v4804
        %v4835 = vpack.c.b16 %v4809, %v4807
        %v4836 = vpack.c.b16 %v4810, %v4808
        %v4837 = vpack.c.b16 %v4813, %v4811
        %v4838 = vpack.c.b16 %v4814, %v4812
        %v4839 = vpack.c.b16 %v4817, %v4815
        %v4840 = vpack.c.b16 %v4818, %v4816
        %v4841 = vpack.c.b16 %v4821, %v4819
        %v4842 = vpack.c.b16 %v4822, %v4820
        %v4843 = vpack.c.b16 %v4825, %v4823
        %v4844 = vpack.c.b16 %v4826, %v4824
        %v4845 = vpack.c.b16 %v4829, %v4827
        %v4846 = vpack.c.b16 %v4830, %v4828
        %4863 = vmatprep.subr.bf16.mxu0 %v4846
        %4864 = vmatpush1.bf16.msra.mxu0 %v4845
        %4865 = vmatprep.subr.bf16.mxu0 %v4844
        %4866 = vmatpush1.bf16.msra.mxu0 %v4843
        %4867 = vmatprep.subr.bf16.mxu0 %v4842
        %4868 = vmatpush1.bf16.msra.mxu0 %v4841
        %4869 = vmatprep.subr.bf16.mxu0 %v4840
        %4870 = vmatpush1.bf16.msra.mxu0 %v4839
        %4871 = vmatprep.subr.bf16.mxu0 %v4838
        %4872 = vmatpush1.bf16.msra.mxu0 %v4837
        %4873 = vmatprep.subr.bf16.mxu0 %v4836
        %4874 = vmatpush1.bf16.msra.mxu0 %v4835
        %4875 = vmatprep.subr.bf16.mxu0 %v4834
        %4876 = vmatpush1.bf16.msra.mxu0 %v4833
        %4877 = vmatprep.subr.bf16.mxu0 %v4832
        %4878 = vmatpush1.bf16.msra.mxu0 %v4831
        %4879 = vmatprep.subr.bf16.mxu0 0
        %4880 = vmatpush2.bf16.msra.mxu0 0
        %4881 = vmatprep.subr.bf16.mxu0 0
        %4882 = vmatpush2.bf16.msra.mxu0 0
        %4883 = vmatprep.subr.bf16.mxu0 0
        %4884 = vmatpush2.bf16.msra.mxu0 0
        %4885 = vmatprep.subr.bf16.mxu0 0
        %4886 = vmatpush2.bf16.msra.mxu0 0
        %4887 = vmatprep.subr.bf16.mxu0 0
        %4888 = vmatpush2.bf16.msra.mxu0 0
        %4889 = vmatprep.subr.bf16.mxu0 0
        %4890 = vmatpush2.bf16.msra.mxu0 0
        %4891 = vmatprep.subr.bf16.mxu0 0
        %4892 = vmatpush2.bf16.msra.mxu0 0
        %4893 = vmatprep.subr.bf16.mxu0 0
        %4894 = vmatpush2.bf16.msra.mxu0 0
        %4895 = vmatprep.mubr.bf16.mxu0 0
        %4896 = vmatmul.mubr.bf16.gmra.mxu0 %v4781
        %v4897 = vpop.f32.mrf.mxu0
        %v4898 = vadd.f32 0.0, %v4897
        %v4899 = vpop.f32.mrf.mxu0
        %v4900 = vadd.f32 0.0, %v4899
        %v4901 = vpop.f32.mrf.mxu0
        %v4902 = vpop.f32.mrf.mxu0
        %4903 = vdwg.mxu0
        %v4906 = vcombine.low %v4898, %v4900
        %v4908 = vunpack.c.l.s4 1983009808
        %v4909 = vunpack.c.0.s8 %v4908
        %v4910 = vlaneseq
        %v4911 = vshrl.u32 %v4910, 7
        %v4912 = vsub.s32 %v4909, %v4911
        %v4913 = vrot.slane %v4906, %v4912
        %v4914 = vcombine.high %v4913, %v4913
        %v4917 = vadd.f32 %v4744, %v4913
        %v4918 = vadd.f32 %v4745, %v4914
        %v4919 = vld [vmem:[%s10] sm:$0x3]
        %v4921 = vlaneseq
        %v4922 = vshrl.u32 %v4921, 7
        %v4923 = vsub.s32 0, %v4922
        %v4924 = vrot.slane %v4919, %v4923
        %v4925 = vlaneseq
        %v4926 = vshrl.u32 %v4925, 7
        %v4927 = vsub.s32 1, %v4926
        %v4928 = vrot.slane %v4919, %v4927
        %v4929 = vcombine.low %v4924, %v4928
        %v4931 = vunpack.c.l.s4 1983009808
        %v4932 = vunpack.c.0.s8 %v4931
        %v4933 = vlaneseq
        %v4934 = vshrl.u32 %v4933, 7
        %v4935 = vsub.s32 %v4932, %v4934
        %v4936 = vrot.slane %v4929, %v4935
        %v4938 = vadd.f32 %v4917, %v4936
        %v4939 = vadd.f32 %v4918, %v4936
        %4940 = vst [vmem:[%s572] sm:$0xf] %v4938
        %4941 = vst [vmem:[%s572 + $0x4] sm:$0xf] %v4939
        %v4942 = vld [vmem:[%s592] ss:$2 sm:$0xf]
        %v4943 = vld [vmem:[%s3436] ss:$2 sm:$0xf]
        %v4944 = vld [vmem:[%s3438] ss:$2 sm:$0xf]
        %v4945 = vld [vmem:[%s3440] ss:$2 sm:$0xf]
        %v4946 = vld [vmem:[%s3442] ss:$2 sm:$0xf]
        %v4947 = vld [vmem:[%s3444] ss:$2 sm:$0xf]
        %v4948 = vld [vmem:[%s3446] ss:$2 sm:$0xf]
        %v4949 = vld [vmem:[%s3448] ss:$2 sm:$0xf]
        %v4950 = vsel %vm3450, %v4942, 0.0
        %4951 = vadd.xlane.f32.xlu0 %v4950
        %v4952 = vpop.xlane.xlu0 %4951
        %v4953 = vsel %vm3450, %v4943, 0.0
        %4954 = vadd.xlane.f32.xlu0 %v4953
        %v4955 = vpop.xlane.xlu0 %4954
        %v4956 = vsel %vm3450, %v4944, 0.0
        %4957 = vadd.xlane.f32.xlu0 %v4956
        %v4958 = vpop.xlane.xlu0 %4957
        %v4959 = vsel %vm3450, %v4945, 0.0
        %4960 = vadd.xlane.f32.xlu0 %v4959
        %v4961 = vpop.xlane.xlu0 %4960
        %v4962 = vsel %vm3450, %v4946, 0.0
        %4963 = vadd.xlane.f32.xlu0 %v4962
        %v4964 = vpop.xlane.xlu0 %4963
        %v4965 = vsel %vm3450, %v4947, 0.0
        %4966 = vadd.xlane.f32.xlu0 %v4965
        %v4967 = vpop.xlane.xlu0 %4966
        %v4968 = vsel %vm3450, %v4948, 0.0
        %4969 = vadd.xlane.f32.xlu0 %v4968
        %v4970 = vpop.xlane.xlu0 %4969
        %v4971 = vsel %vm3450, %v4949, 0.0
        %4972 = vadd.xlane.f32.xlu0 %v4971
        %v4973 = vpop.xlane.xlu0 %4972
        %v4974 = vmul.f32 %v4952, %v3475
        %v4975 = vmul.f32 %v4955, %v3475
        %v4976 = vmul.f32 %v4958, %v3475
        %v4977 = vmul.f32 %v4961, %v3475
        %v4978 = vmul.f32 %v4964, %v3475
        %v4979 = vmul.f32 %v4967, %v3475
        %v4980 = vmul.f32 %v4970, %v3475
        %v4981 = vmul.f32 %v4973, %v3475
        %v4982 = vsub.f32 %v4942, %v4974
        %v4983 = vsub.f32 %v4943, %v4975
        %v4984 = vsub.f32 %v4944, %v4976
        %v4985 = vsub.f32 %v4945, %v4977
        %v4986 = vsub.f32 %v4946, %v4978
        %v4987 = vsub.f32 %v4947, %v4979
        %v4988 = vsub.f32 %v4948, %v4980
        %v4989 = vsub.f32 %v4949, %v4981
        %v4990 = vmul.f32 %v4982, %v4982
        %v4991 = vmul.f32 %v4983, %v4983
        %v4992 = vmul.f32 %v4984, %v4984
        %v4993 = vmul.f32 %v4985, %v4985
        %v4994 = vmul.f32 %v4986, %v4986
        %v4995 = vmul.f32 %v4987, %v4987
        %v4996 = vmul.f32 %v4988, %v4988
        %v4997 = vmul.f32 %v4989, %v4989
        %v4998 = vsel %vm3450, %v4990, 0.0
        %4999 = vadd.xlane.f32.xlu0 %v4998
        %v5000 = vpop.xlane.xlu0 %4999
        %v5001 = vsel %vm3450, %v4991, 0.0
        %5002 = vadd.xlane.f32.xlu0 %v5001
        %v5003 = vpop.xlane.xlu0 %5002
        %v5004 = vsel %vm3450, %v4992, 0.0
        %5005 = vadd.xlane.f32.xlu0 %v5004
        %v5006 = vpop.xlane.xlu0 %5005
        %v5007 = vsel %vm3450, %v4993, 0.0
        %5008 = vadd.xlane.f32.xlu0 %v5007
        %v5009 = vpop.xlane.xlu0 %5008
        %v5010 = vsel %vm3450, %v4994, 0.0
        %5011 = vadd.xlane.f32.xlu0 %v5010
        %v5012 = vpop.xlane.xlu0 %5011
        %v5013 = vsel %vm3450, %v4995, 0.0
        %5014 = vadd.xlane.f32.xlu0 %v5013
        %v5015 = vpop.xlane.xlu0 %5014
        %v5016 = vsel %vm3450, %v4996, 0.0
        %5017 = vadd.xlane.f32.xlu0 %v5016
        %v5018 = vpop.xlane.xlu0 %5017
        %v5019 = vsel %vm3450, %v4997, 0.0
        %5020 = vadd.xlane.f32.xlu0 %v5019
        %v5021 = vpop.xlane.xlu0 %5020
        %v5022 = vmul.f32 %v5000, %v3475
        %v5023 = vmul.f32 %v5003, %v3475
        %v5024 = vmul.f32 %v5006, %v3475
        %v5025 = vmul.f32 %v5009, %v3475
        %v5026 = vmul.f32 %v5012, %v3475
        %v5027 = vmul.f32 %v5015, %v3475
        %v5028 = vmul.f32 %v5018, %v3475
        %v5029 = vmul.f32 %v5021, %v3475
        %v5030 = vadd.f32 %v5022, 1e-06
        %v5031 = vadd.f32 %v5023, 1e-06
        %v5032 = vadd.f32 %v5024, 1e-06
        %v5033 = vadd.f32 %v5025, 1e-06
        %v5034 = vadd.f32 %v5026, 1e-06
        %v5035 = vadd.f32 %v5027, 1e-06
        %v5036 = vadd.f32 %v5028, 1e-06
        %v5037 = vadd.f32 %v5029, 1e-06
        %v5038 = vrsqrt.pop %v5030
        %v5039 = vrsqrt.pop %v5031
        %v5040 = vrsqrt.pop %v5032
        %v5041 = vrsqrt.pop %v5033
        %v5042 = vrsqrt.pop %v5034
        %v5043 = vrsqrt.pop %v5035
        %v5044 = vrsqrt.pop %v5036
        %v5045 = vrsqrt.pop %v5037
        %v5046 = vmul.f32 %v4982, %v5038
        %v5047 = vmul.f32 %v4983, %v5039
        %v5048 = vmul.f32 %v4984, %v5040
        %v5049 = vmul.f32 %v4985, %v5041
        %v5050 = vmul.f32 %v4986, %v5042
        %v5051 = vmul.f32 %v4987, %v5043
        %v5052 = vmul.f32 %v4988, %v5044
        %v5053 = vmul.f32 %v4989, %v5045
        %v5054 = vpack.c.bf16 %v5046, %v5046
        %v5055 = vpack.c.bf16 %v5048, %v5048
        %v5056 = vpack.c.bf16 %v5050, %v5050
        %v5057 = vpack.c.bf16 %v5052, %v5052
        %v5058 = vld [vmem:[%s11] sm:$0xf]
        %v5059 = vld [vmem:[%s11 + $0x4] sm:$0xf]
        %v5060 = vld [vmem:[%s11 + $0x8] sm:$0xf]
        %v5061 = vld [vmem:[%s11 + $0xc] sm:$0xf]
        %v5062 = vld [vmem:[%s11 + $0x10] sm:$0xf]
        %v5063 = vld [vmem:[%s11 + $0x14] sm:$0xf]
        %v5064 = vld [vmem:[%s11 + $0x18] sm:$0xf]
        %v5065 = vld [vmem:[%s11 + $0x1c] sm:$0xf]
        %v5066 = vpack.c.bf16 %v5047, %v5047
        %v5067 = vpack.c.bf16 %v5049, %v5049
        %v5068 = vpack.c.bf16 %v5051, %v5051
        %v5069 = vpack.c.bf16 %v5053, %v5053
        %s5070 = scalar_lea.vmem %s11, 64
        %v5071 = vld [vmem:[%s5070] sm:$0xf]
        %v5072 = vld [vmem:[%s5070 + $0x4] sm:$0xf]
        %v5073 = vld [vmem:[%s5070 + $0x8] sm:$0xf]
        %v5074 = vld [vmem:[%s5070 + $0xc] sm:$0xf]
        %v5075 = vld [vmem:[%s5070 + $0x10] sm:$0xf]
        %v5076 = vld [vmem:[%s5070 + $0x14] sm:$0xf]
        %v5077 = vld [vmem:[%s5070 + $0x18] sm:$0xf]
        %v5078 = vld [vmem:[%s5070 + $0x1c] sm:$0xf]
        %v5083 = vcombine.low %v5066, %v5067
        %v5084 = vcombine.low %v5068, %v5069
        %v5086 = vunpack.c.l.s4 1983009808
        %v5087 = vunpack.c.0.s8 %v5086
        %v5088 = vlaneseq
        %v5089 = vshrl.u32 %v5088, 7
        %v5090 = vsub.s32 %v5087, %v5089
        %v5091 = vrot.slane %v5083, %v5090
        %v5093 = vunpack.c.l.s4 1983009808
        %v5094 = vunpack.c.0.s8 %v5093
        %v5095 = vlaneseq
        %v5096 = vshrl.u32 %v5095, 7
        %v5097 = vsub.s32 %v5094, %v5096
        %v5098 = vrot.slane %v5084, %v5097
        %v5099 = vcombine.low %v5091, %v5098
        %v5108 = vunpack.c.l.b16 %v5071
        %v5109 = vunpack.c.l.b16 %v5072
        %v5110 = vunpack.c.l.b16 %v5073
        %v5111 = vunpack.c.l.b16 %v5074
        %v5112 = vunpack.c.l.b16 %v5075
        %v5113 = vunpack.c.l.b16 %v5076
        %v5114 = vunpack.c.l.b16 %v5077
        %v5115 = vunpack.c.l.b16 %v5078
        %v5116 = vpack.c.b16 %v5109, %v5108
        %v5117 = vpack.c.b16 %v5111, %v5110
        %v5118 = vpack.c.b16 %v5113, %v5112
        %v5119 = vpack.c.b16 %v5115, %v5114
        %v5125 = vsel %vm3426, %v5099, 0
        %5127 = vmatprep.subr.bf16.mxu0 0
        %5128 = vmatpush1.bf16.msra.mxu0 0
        %5129 = vmatprep.subr.bf16.mxu0 0
        %5130 = vmatpush1.bf16.msra.mxu0 0
        %5131 = vmatprep.subr.bf16.mxu0 0
        %5132 = vmatpush1.bf16.msra.mxu0 0
        %5133 = vmatprep.subr.bf16.mxu0 0
        %5134 = vmatpush1.bf16.msra.mxu0 0
        %5135 = vmatprep.subr.bf16.mxu0 0
        %5136 = vmatpush1.bf16.msra.mxu0 %v5119
        %5137 = vmatprep.subr.bf16.mxu0 0
        %5138 = vmatpush1.bf16.msra.mxu0 %v5118
        %5139 = vmatprep.subr.bf16.mxu0 0
        %5140 = vmatpush1.bf16.msra.mxu0 %v5117
        %5141 = vmatprep.subr.bf16.mxu0 0
        %5142 = vmatpush1.bf16.msra.mxu0 %v5116
        %5143 = vmatprep.subr.bf16.mxu0 0
        %5144 = vmatpush2.bf16.msra.mxu0 0
        %5145 = vmatprep.subr.bf16.mxu0 0
        %5146 = vmatpush2.bf16.msra.mxu0 0
        %5147 = vmatprep.subr.bf16.mxu0 0
        %5148 = vmatpush2.bf16.msra.mxu0 0
        %5149 = vmatprep.subr.bf16.mxu0 0
        %5150 = vmatpush2.bf16.msra.mxu0 0
        %5151 = vmatprep.subr.bf16.mxu0 0
        %5152 = vmatpush2.bf16.msra.mxu0 0
        %5153 = vmatprep.subr.bf16.mxu0 0
        %5154 = vmatpush2.bf16.msra.mxu0 0
        %5155 = vmatprep.subr.bf16.mxu0 0
        %5156 = vmatpush2.bf16.msra.mxu0 0
        %5157 = vmatprep.subr.bf16.mxu0 0
        %5158 = vmatpush2.bf16.msra.mxu0 0
        %5159 = vmatprep.mubr.bf16.mxu0 0
        %5160 = vmatmul.mubr.bf16.gmra.mxu0 %v5125
        %v5161 = vpop.f32.mrf.mxu0
        %v5162 = vadd.f32 0.0, %v5161
        %v5163 = vpop.f32.mrf.mxu0
        %v5164 = vpop.f32.mrf.mxu0
        %v5165 = vadd.f32 0.0, %v5164
        %v5166 = vpop.f32.mrf.mxu0
        %5167 = vdwg.mxu0
        %v5172 = vcombine.low %v5054, %v5055
        %v5173 = vcombine.low %v5056, %v5057
        %v5175 = vunpack.c.l.s4 1983009808
        %v5176 = vunpack.c.0.s8 %v5175
        %v5177 = vlaneseq
        %v5178 = vshrl.u32 %v5177, 7
        %v5179 = vsub.s32 %v5176, %v5178
        %v5180 = vrot.slane %v5172, %v5179
        %v5182 = vunpack.c.l.s4 1983009808
        %v5183 = vunpack.c.0.s8 %v5182
        %v5184 = vlaneseq
        %v5185 = vshrl.u32 %v5184, 7
        %v5186 = vsub.s32 %v5183, %v5185
        %v5187 = vrot.slane %v5173, %v5186
        %v5188 = vcombine.low %v5180, %v5187
        %v5197 = vunpack.c.l.b16 %v5058
        %v5198 = vunpack.c.l.b16 %v5059
        %v5199 = vunpack.c.l.b16 %v5060
        %v5200 = vunpack.c.l.b16 %v5061
        %v5201 = vunpack.c.l.b16 %v5062
        %v5202 = vunpack.c.l.b16 %v5063
        %v5203 = vunpack.c.l.b16 %v5064
        %v5204 = vunpack.c.l.b16 %v5065
        %v5205 = vpack.c.b16 %v5198, %v5197
        %v5206 = vpack.c.b16 %v5200, %v5199
        %v5207 = vpack.c.b16 %v5202, %v5201
        %v5208 = vpack.c.b16 %v5204, %v5203
        %v5214 = vsel %vm3426, %v5188, 0
        %5216 = vmatprep.subr.bf16.mxu0 0
        %5217 = vmatpush1.bf16.msra.mxu0 0
        %5218 = vmatprep.subr.bf16.mxu0 0
        %5219 = vmatpush1.bf16.msra.mxu0 0
        %5220 = vmatprep.subr.bf16.mxu0 0
        %5221 = vmatpush1.bf16.msra.mxu0 0
        %5222 = vmatprep.subr.bf16.mxu0 0
        %5223 = vmatpush1.bf16.msra.mxu0 0
        %5224 = vmatprep.subr.bf16.mxu0 0
        %5225 = vmatpush1.bf16.msra.mxu0 %v5208
        %5226 = vmatprep.subr.bf16.mxu0 0
        %5227 = vmatpush1.bf16.msra.mxu0 %v5207
        %5228 = vmatprep.subr.bf16.mxu0 0
        %5229 = vmatpush1.bf16.msra.mxu0 %v5206
        %5230 = vmatprep.subr.bf16.mxu0 0
        %5231 = vmatpush1.bf16.msra.mxu0 %v5205
        %5232 = vmatprep.subr.bf16.mxu0 0
        %5233 = vmatpush2.bf16.msra.mxu0 0
        %5234 = vmatprep.subr.bf16.mxu0 0
        %5235 = vmatpush2.bf16.msra.mxu0 0
        %5236 = vmatprep.subr.bf16.mxu0 0
        %5237 = vmatpush2.bf16.msra.mxu0 0
        %5238 = vmatprep.subr.bf16.mxu0 0
        %5239 = vmatpush2.bf16.msra.mxu0 0
        %5240 = vmatprep.subr.bf16.mxu0 0
        %5241 = vmatpush2.bf16.msra.mxu0 0
        %5242 = vmatprep.subr.bf16.mxu0 0
        %5243 = vmatpush2.bf16.msra.mxu0 0
        %5244 = vmatprep.subr.bf16.mxu0 0
        %5245 = vmatpush2.bf16.msra.mxu0 0
        %5246 = vmatprep.subr.bf16.mxu0 0
        %5247 = vmatpush2.bf16.msra.mxu0 0
        %5248 = vmatprep.mubr.bf16.mxu0 0
        %5249 = vmatmul.mubr.bf16.gmra.mxu0 %v5214
        %v5250 = vpop.f32.mrf.mxu0
        %v5251 = vadd.f32 %v5162, %v5250
        %v5252 = vpop.f32.mrf.mxu0
        %v5253 = vpop.f32.mrf.mxu0
        %v5254 = vadd.f32 %v5165, %v5253
        %v5255 = vpop.f32.mrf.mxu0
        %5256 = vdwg.mxu0
        %v5259 = vcombine.high %v5251, %v5251
        %v5260 = vcombine.high %v5254, %v5254
        %v5263 = vld [vmem:[%s3765] ss:$2 sm:$0xf]
        %v5264 = vld [vmem:[%s3767] ss:$2 sm:$0xf]
        %v5265 = vld [vmem:[%s3769] ss:$2 sm:$0xf]
        %v5266 = vld [vmem:[%s3771] ss:$2 sm:$0xf]
        %v5267 = vld [vmem:[%s3773] ss:$2 sm:$0xf]
        %v5268 = vld [vmem:[%s3775] ss:$2 sm:$0xf]
        %v5269 = vld [vmem:[%s3777] ss:$2 sm:$0xf]
        %v5270 = vld [vmem:[%s3779] ss:$2 sm:$0xf]
        %v5271 = vsel %vm3450, %v5263, 0.0
        %5272 = vadd.xlane.f32.xlu0 %v5271
        %v5273 = vpop.xlane.xlu0 %5272
        %v5274 = vsel %vm3450, %v5264, 0.0
        %5275 = vadd.xlane.f32.xlu0 %v5274
        %v5276 = vpop.xlane.xlu0 %5275
        %v5277 = vsel %vm3450, %v5265, 0.0
        %5278 = vadd.xlane.f32.xlu0 %v5277
        %v5279 = vpop.xlane.xlu0 %5278
        %v5280 = vsel %vm3450, %v5266, 0.0
        %5281 = vadd.xlane.f32.xlu0 %v5280
        %v5282 = vpop.xlane.xlu0 %5281
        %v5283 = vsel %vm3450, %v5267, 0.0
        %5284 = vadd.xlane.f32.xlu0 %v5283
        %v5285 = vpop.xlane.xlu0 %5284
        %v5286 = vsel %vm3450, %v5268, 0.0
        %5287 = vadd.xlane.f32.xlu0 %v5286
        %v5288 = vpop.xlane.xlu0 %5287
        %v5289 = vsel %vm3450, %v5269, 0.0
        %5290 = vadd.xlane.f32.xlu0 %v5289
        %v5291 = vpop.xlane.xlu0 %5290
        %v5292 = vsel %vm3450, %v5270, 0.0
        %5293 = vadd.xlane.f32.xlu0 %v5292
        %v5294 = vpop.xlane.xlu0 %5293
        %v5295 = vmul.f32 %v5273, %v3475
        %v5296 = vmul.f32 %v5276, %v3475
        %v5297 = vmul.f32 %v5279, %v3475
        %v5298 = vmul.f32 %v5282, %v3475
        %v5299 = vmul.f32 %v5285, %v3475
        %v5300 = vmul.f32 %v5288, %v3475
        %v5301 = vmul.f32 %v5291, %v3475
        %v5302 = vmul.f32 %v5294, %v3475
        %v5303 = vsub.f32 %v5263, %v5295
        %v5304 = vsub.f32 %v5264, %v5296
        %v5305 = vsub.f32 %v5265, %v5297
        %v5306 = vsub.f32 %v5266, %v5298
        %v5307 = vsub.f32 %v5267, %v5299
        %v5308 = vsub.f32 %v5268, %v5300
        %v5309 = vsub.f32 %v5269, %v5301
        %v5310 = vsub.f32 %v5270, %v5302
        %v5311 = vmul.f32 %v5303, %v5303
        %v5312 = vmul.f32 %v5304, %v5304
        %v5313 = vmul.f32 %v5305, %v5305
        %v5314 = vmul.f32 %v5306, %v5306
        %v5315 = vmul.f32 %v5307, %v5307
        %v5316 = vmul.f32 %v5308, %v5308
        %v5317 = vmul.f32 %v5309, %v5309
        %v5318 = vmul.f32 %v5310, %v5310
        %v5319 = vsel %vm3450, %v5311, 0.0
        %5320 = vadd.xlane.f32.xlu0 %v5319
        %v5321 = vpop.xlane.xlu0 %5320
        %v5322 = vsel %vm3450, %v5312, 0.0
        %5323 = vadd.xlane.f32.xlu0 %v5322
        %v5324 = vpop.xlane.xlu0 %5323
        %v5325 = vsel %vm3450, %v5313, 0.0
        %5326 = vadd.xlane.f32.xlu0 %v5325
        %v5327 = vpop.xlane.xlu0 %5326
        %v5328 = vsel %vm3450, %v5314, 0.0
        %5329 = vadd.xlane.f32.xlu0 %v5328
        %v5330 = vpop.xlane.xlu0 %5329
        %v5331 = vsel %vm3450, %v5315, 0.0
        %5332 = vadd.xlane.f32.xlu0 %v5331
        %v5333 = vpop.xlane.xlu0 %5332
        %v5334 = vsel %vm3450, %v5316, 0.0
        %5335 = vadd.xlane.f32.xlu0 %v5334
        %v5336 = vpop.xlane.xlu0 %5335
        %v5337 = vsel %vm3450, %v5317, 0.0
        %5338 = vadd.xlane.f32.xlu0 %v5337
        %v5339 = vpop.xlane.xlu0 %5338
        %v5340 = vsel %vm3450, %v5318, 0.0
        %5341 = vadd.xlane.f32.xlu0 %v5340
        %v5342 = vpop.xlane.xlu0 %5341
        %v5343 = vmul.f32 %v5321, %v3475
        %v5344 = vmul.f32 %v5324, %v3475
        %v5345 = vmul.f32 %v5327, %v3475
        %v5346 = vmul.f32 %v5330, %v3475
        %v5347 = vmul.f32 %v5333, %v3475
        %v5348 = vmul.f32 %v5336, %v3475
        %v5349 = vmul.f32 %v5339, %v3475
        %v5350 = vmul.f32 %v5342, %v3475
        %v5351 = vadd.f32 %v5343, 1e-06
        %v5352 = vadd.f32 %v5344, 1e-06
        %v5353 = vadd.f32 %v5345, 1e-06
        %v5354 = vadd.f32 %v5346, 1e-06
        %v5355 = vadd.f32 %v5347, 1e-06
        %v5356 = vadd.f32 %v5348, 1e-06
        %v5357 = vadd.f32 %v5349, 1e-06
        %v5358 = vadd.f32 %v5350, 1e-06
        %v5359 = vrsqrt.pop %v5351
        %v5360 = vrsqrt.pop %v5352
        %v5361 = vrsqrt.pop %v5353
        %v5362 = vrsqrt.pop %v5354
        %v5363 = vrsqrt.pop %v5355
        %v5364 = vrsqrt.pop %v5356
        %v5365 = vrsqrt.pop %v5357
        %v5366 = vrsqrt.pop %v5358
        %v5367 = vmul.f32 %v5303, %v5359
        %v5368 = vmul.f32 %v5304, %v5360
        %v5369 = vmul.f32 %v5305, %v5361
        %v5370 = vmul.f32 %v5306, %v5362
        %v5371 = vmul.f32 %v5307, %v5363
        %v5372 = vmul.f32 %v5308, %v5364
        %v5373 = vmul.f32 %v5309, %v5365
        %v5374 = vmul.f32 %v5310, %v5366
        %v5375 = vpack.c.bf16 %v5367, %v5367
        %v5376 = vpack.c.bf16 %v5369, %v5369
        %v5377 = vpack.c.bf16 %v5371, %v5371
        %v5378 = vpack.c.bf16 %v5373, %v5373
        %s5379 = scalar_lea.vmem %s11, 32
        %v5380 = vld [vmem:[%s5379] sm:$0xf]
        %v5381 = vld [vmem:[%s5379 + $0x4] sm:$0xf]
        %v5382 = vld [vmem:[%s5379 + $0x8] sm:$0xf]
        %v5383 = vld [vmem:[%s5379 + $0xc] sm:$0xf]
        %v5384 = vld [vmem:[%s5379 + $0x10] sm:$0xf]
        %v5385 = vld [vmem:[%s5379 + $0x14] sm:$0xf]
        %v5386 = vld [vmem:[%s5379 + $0x18] sm:$0xf]
        %v5387 = vld [vmem:[%s5379 + $0x1c] sm:$0xf]
        %v5392 = vcombine.low %v5375, %v5376
        %v5393 = vcombine.low %v5377, %v5378
        %v5395 = vunpack.c.l.s4 1983009808
        %v5396 = vunpack.c.0.s8 %v5395
        %v5397 = vlaneseq
        %v5398 = vshrl.u32 %v5397, 7
        %v5399 = vsub.s32 %v5396, %v5398
        %v5400 = vrot.slane %v5392, %v5399
        %v5402 = vunpack.c.l.s4 1983009808
        %v5403 = vunpack.c.0.s8 %v5402
        %v5404 = vlaneseq
        %v5405 = vshrl.u32 %v5404, 7
        %v5406 = vsub.s32 %v5403, %v5405
        %v5407 = vrot.slane %v5393, %v5406
        %v5408 = vcombine.low %v5400, %v5407
        %v5417 = vunpack.c.l.b16 %v5380
        %v5418 = vunpack.c.l.b16 %v5381
        %v5419 = vunpack.c.l.b16 %v5382
        %v5420 = vunpack.c.l.b16 %v5383
        %v5421 = vunpack.c.l.b16 %v5384
        %v5422 = vunpack.c.l.b16 %v5385
        %v5423 = vunpack.c.l.b16 %v5386
        %v5424 = vunpack.c.l.b16 %v5387
        %v5425 = vpack.c.b16 %v5418, %v5417
        %v5426 = vpack.c.b16 %v5420, %v5419
        %v5427 = vpack.c.b16 %v5422, %v5421
        %v5428 = vpack.c.b16 %v5424, %v5423
        %v5434 = vsel %vm3426, %v5408, 0
        %5436 = vmatprep.subr.bf16.mxu0 0
        %5437 = vmatpush1.bf16.msra.mxu0 0
        %5438 = vmatprep.subr.bf16.mxu0 0
        %5439 = vmatpush1.bf16.msra.mxu0 0
        %5440 = vmatprep.subr.bf16.mxu0 0
        %5441 = vmatpush1.bf16.msra.mxu0 0
        %5442 = vmatprep.subr.bf16.mxu0 0
        %5443 = vmatpush1.bf16.msra.mxu0 0
        %5444 = vmatprep.subr.bf16.mxu0 0
        %5445 = vmatpush1.bf16.msra.mxu0 %v5428
        %5446 = vmatprep.subr.bf16.mxu0 0
        %5447 = vmatpush1.bf16.msra.mxu0 %v5427
        %5448 = vmatprep.subr.bf16.mxu0 0
        %5449 = vmatpush1.bf16.msra.mxu0 %v5426
        %5450 = vmatprep.subr.bf16.mxu0 0
        %5451 = vmatpush1.bf16.msra.mxu0 %v5425
        %5452 = vmatprep.subr.bf16.mxu0 0
        %5453 = vmatpush2.bf16.msra.mxu0 0
        %5454 = vmatprep.subr.bf16.mxu0 0
        %5455 = vmatpush2.bf16.msra.mxu0 0
        %5456 = vmatprep.subr.bf16.mxu0 0
        %5457 = vmatpush2.bf16.msra.mxu0 0
        %5458 = vmatprep.subr.bf16.mxu0 0
        %5459 = vmatpush2.bf16.msra.mxu0 0
        %5460 = vmatprep.subr.bf16.mxu0 0
        %5461 = vmatpush2.bf16.msra.mxu0 0
        %5462 = vmatprep.subr.bf16.mxu0 0
        %5463 = vmatpush2.bf16.msra.mxu0 0
        %5464 = vmatprep.subr.bf16.mxu0 0
        %5465 = vmatpush2.bf16.msra.mxu0 0
        %5466 = vmatprep.subr.bf16.mxu0 0
        %5467 = vmatpush2.bf16.msra.mxu0 0
        %5468 = vmatprep.mubr.bf16.mxu0 0
        %5469 = vmatmul.mubr.bf16.gmra.mxu0 %v5434
        %v5470 = vpop.f32.mrf.mxu0
        %v5471 = vadd.f32 0.0, %v5470
        %v5472 = vpop.f32.mrf.mxu0
        %v5473 = vpop.f32.mrf.mxu0
        %v5474 = vadd.f32 0.0, %v5473
        %v5475 = vpop.f32.mrf.mxu0
        %5476 = vdwg.mxu0
        %v5479 = vcombine.high %v5471, %v5471
        %v5480 = vcombine.high %v5474, %v5474
        %v5483 = vadd.f32 %v5251, %v5471
        %v5484 = vadd.f32 %v5259, %v5479
        %v5485 = vadd.f32 %v5254, %v5474
        %v5486 = vadd.f32 %v5260, %v5480
        %v5487 = vpack.c.bf16 %v5368, %v5368
        %v5488 = vpack.c.bf16 %v5370, %v5370
        %v5489 = vpack.c.bf16 %v5372, %v5372
        %v5490 = vpack.c.bf16 %v5374, %v5374
        %s5491 = scalar_lea.vmem %s11, 96
        %v5492 = vld [vmem:[%s5491] sm:$0xf]
        %v5493 = vld [vmem:[%s5491 + $0x4] sm:$0xf]
        %v5494 = vld [vmem:[%s5491 + $0x8] sm:$0xf]
        %v5495 = vld [vmem:[%s5491 + $0xc] sm:$0xf]
        %v5496 = vld [vmem:[%s5491 + $0x10] sm:$0xf]
        %v5497 = vld [vmem:[%s5491 + $0x14] sm:$0xf]
        %v5498 = vld [vmem:[%s5491 + $0x18] sm:$0xf]
        %v5499 = vld [vmem:[%s5491 + $0x1c] sm:$0xf]
        %v5504 = vcombine.low %v5487, %v5488
        %v5505 = vcombine.low %v5489, %v5490
        %v5507 = vunpack.c.l.s4 1983009808
        %v5508 = vunpack.c.0.s8 %v5507
        %v5509 = vlaneseq
        %v5510 = vshrl.u32 %v5509, 7
        %v5511 = vsub.s32 %v5508, %v5510
        %v5512 = vrot.slane %v5504, %v5511
        %v5514 = vunpack.c.l.s4 1983009808
        %v5515 = vunpack.c.0.s8 %v5514
        %v5516 = vlaneseq
        %v5517 = vshrl.u32 %v5516, 7
        %v5518 = vsub.s32 %v5515, %v5517
        %v5519 = vrot.slane %v5505, %v5518
        %v5520 = vcombine.low %v5512, %v5519
        %v5529 = vunpack.c.l.b16 %v5492
        %v5530 = vunpack.c.l.b16 %v5493
        %v5531 = vunpack.c.l.b16 %v5494
        %v5532 = vunpack.c.l.b16 %v5495
        %v5533 = vunpack.c.l.b16 %v5496
        %v5534 = vunpack.c.l.b16 %v5497
        %v5535 = vunpack.c.l.b16 %v5498
        %v5536 = vunpack.c.l.b16 %v5499
        %v5537 = vpack.c.b16 %v5530, %v5529
        %v5538 = vpack.c.b16 %v5532, %v5531
        %v5539 = vpack.c.b16 %v5534, %v5533
        %v5540 = vpack.c.b16 %v5536, %v5535
        %v5546 = vsel %vm3426, %v5520, 0
        %5548 = vmatprep.subr.bf16.mxu0 0
        %5549 = vmatpush1.bf16.msra.mxu0 0
        %5550 = vmatprep.subr.bf16.mxu0 0
        %5551 = vmatpush1.bf16.msra.mxu0 0
        %5552 = vmatprep.subr.bf16.mxu0 0
        %5553 = vmatpush1.bf16.msra.mxu0 0
        %5554 = vmatprep.subr.bf16.mxu0 0
        %5555 = vmatpush1.bf16.msra.mxu0 0
        %5556 = vmatprep.subr.bf16.mxu0 0
        %5557 = vmatpush1.bf16.msra.mxu0 %v5540
        %5558 = vmatprep.subr.bf16.mxu0 0
        %5559 = vmatpush1.bf16.msra.mxu0 %v5539
        %5560 = vmatprep.subr.bf16.mxu0 0
        %5561 = vmatpush1.bf16.msra.mxu0 %v5538
        %5562 = vmatprep.subr.bf16.mxu0 0
        %5563 = vmatpush1.bf16.msra.mxu0 %v5537
        %5564 = vmatprep.subr.bf16.mxu0 0
        %5565 = vmatpush2.bf16.msra.mxu0 0
        %5566 = vmatprep.subr.bf16.mxu0 0
        %5567 = vmatpush2.bf16.msra.mxu0 0
        %5568 = vmatprep.subr.bf16.mxu0 0
        %5569 = vmatpush2.bf16.msra.mxu0 0
        %5570 = vmatprep.subr.bf16.mxu0 0
        %5571 = vmatpush2.bf16.msra.mxu0 0
        %5572 = vmatprep.subr.bf16.mxu0 0
        %5573 = vmatpush2.bf16.msra.mxu0 0
        %5574 = vmatprep.subr.bf16.mxu0 0
        %5575 = vmatpush2.bf16.msra.mxu0 0
        %5576 = vmatprep.subr.bf16.mxu0 0
        %5577 = vmatpush2.bf16.msra.mxu0 0
        %5578 = vmatprep.subr.bf16.mxu0 0
        %5579 = vmatpush2.bf16.msra.mxu0 0
        %5580 = vmatprep.mubr.bf16.mxu0 0
        %5581 = vmatmul.mubr.bf16.gmra.mxu0 %v5546
        %v5582 = vpop.f32.mrf.mxu0
        %v5583 = vadd.f32 0.0, %v5582
        %v5584 = vpop.f32.mrf.mxu0
        %v5585 = vpop.f32.mrf.mxu0
        %v5586 = vadd.f32 0.0, %v5585
        %v5587 = vpop.f32.mrf.mxu0
        %5588 = vdwg.mxu0
        %v5591 = vcombine.high %v5583, %v5583
        %v5592 = vcombine.high %v5586, %v5586
        %v5595 = vadd.f32 %v5483, %v5583
        %v5596 = vadd.f32 %v5484, %v5591
        %v5597 = vadd.f32 %v5485, %v5586
        %v5598 = vadd.f32 %v5486, %v5592
        %v5599 = vld [vmem:[%s12] sm:$0x1]
        %v5601 = vlaneseq
        %v5602 = vshrl.u32 %v5601, 7
        %v5603 = vsub.s32 0, %v5602
        %v5604 = vrot.slane %v5599, %v5603
        %v5606 = vadd.f32 %v5595, %v5604
        %v5607 = vadd.f32 %v5596, %v5604
        %v5608 = vadd.f32 %v5597, %v5604
        %v5609 = vadd.f32 %v5598, %v5604
        %5610 = vst [vmem:[%s579] sm:$0xf] %v5606
        %5611 = vst [vmem:[%s579 + $0x4] sm:$0xf] %v5607
        %5612 = vst [vmem:[%s579 + $0x8] sm:$0xf] %v5608
        %5613 = vst [vmem:[%s579 + $0xc] sm:$0xf] %v5609
        %s5614 = sand.u32 %s324, 1
        %s5615 = scalar_lea.sflag [#allocation3], %s5614
        %s5616 = sand.u32 %s324, 1
        %s5617 = smul.addr %s5616, 256
        %s5618 = scalar_lea.vmem [#allocation2], %s5617
        %s5619 = smul.u32 8, %s38
        %p5620 = scmp.lt.s32.totalorder %s5619, 15
        %s5621 = scalar_select %p5620, %s5619, 15
        %s5622 = smul.addr %s5621, 8
        %s5623 = scalar_lea.vmem %s14, %s5622
        %s5624 = sand.u32 %s38, 1
        %s5625 = scalar_lea.sflag [#allocation5], %s5624
        %s5626 = sand.u32 %s376, 1
        %s5627 = smul.addr %s5626, 16
        %s5628 = scalar_lea.vmem [#allocation4], %s5627
        %s5629 = sand.u32 %s38, 1
        %s5630 = scalar_lea.sflag [#allocation5], %s5629
        %s5631 = sand.u32 %s402, 1
        %s5632 = smul.addr %s5631, 8
        %s5633 = scalar_lea.vmem [#allocation6], %s5632
        %s5634 = sand.u32 %s428, 1
        %s5635 = scalar_lea.sflag [#allocation8], %s5634
        %s5636 = sand.u32 %s428, 1
        %s5637 = smul.addr %s5636, 16
        %s5638 = scalar_lea.vmem [#allocation7], %s5637
        // Predicated region
        $region73: #{resnet_forward.1} parent=71 // pred_check
          %p5639 = pneg %p334
        $region74: #{resnet_forward.1} parent=71 // pred_check_branch
          %5641 = sbr.rel (%p5639) target = $region76
        $region75: #{resnet_forward.1} parent=71 // pred_region
          %s5642 = smul.u32 16, %s38
          %s5644 = ssub.s32 4096, 4096
          %5645 = vsyncadd %s5615, %s5644
          %s5646 = smul.addr %s5642, 2
          %s5647 = smul.addr %s5646, 128
          %s5648 = scalar_lea.hbm %s13, %s5647
          %s5649 = sshll.u32 %s5618, 4
          %s5650 = int_to_ptr.vmem [resolvable:$true] %s5649
          %5655 = dma.vmem_to_hbm [thread:$0]  %s5650, 4096, %s5648, %s5615, 128, 128, 8
        $region76: #{resnet_forward.1} parent=71 // pred_fallthru
          _
        // Predicated region
        $region77: #{resnet_forward.1} parent=71 // pred_check
          %p5656 = pneg %p360
        $region78: #{resnet_forward.1} parent=71 // pred_check_branch
          %5658 = sbr.rel (%p5656) target = $region80
        $region79: #{resnet_forward.1} parent=71 // pred_region
          %s5659 = smul.u32 8, %s38
        $region80: #{resnet_forward.1} parent=71 // pred_fallthru
          _
        // Predicated region
        $region81: #{resnet_forward.1} parent=71 // pred_check
          %p5660 = pneg %p386
        $region82: #{resnet_forward.1} parent=71 // pred_check_branch
          %5662 = sbr.rel (%p5660) target = $region84
        $region83: #{resnet_forward.1} parent=71 // pred_region
          %s5663 = smul.u32 4, %s38
          %s5665 = ssub.s32 256, 256
          %5666 = vsyncadd %s5625, %s5665
          %s5667 = smul.addr %s5663, 64
          %s5668 = scalar_lea.hbm %s15, %s5667
          %s5669 = sshll.u32 %s5628, 4
          %s5670 = int_to_ptr.vmem [resolvable:$true] %s5669
          %5675 = dma.vmem_to_hbm [thread:$0]  %s5670, 256, %s5668, %s5625, 64, 64, 4
        $region84: #{resnet_forward.1} parent=71 // pred_fallthru
          _
        // Predicated region
        $region85: #{resnet_forward.1} parent=71 // pred_check
          %p5676 = pneg %p412
        $region86: #{resnet_forward.1} parent=71 // pred_check_branch
          %5678 = sbr.rel (%p5676) target = $region88
        $region87: #{resnet_forward.1} parent=71 // pred_region
          %s5679 = smul.u32 2, %s38
          %s5681 = ssub.s32 128, 128
          %5682 = vsyncadd %s5630, %s5681
          %s5683 = smul.addr %s5679, 2
          %s5684 = smul.addr %s5683, 32
          %s5685 = scalar_lea.hbm %s16, %s5684
          %s5686 = sshll.u32 %s5633, 4
          %s5687 = int_to_ptr.vmem [resolvable:$true] %s5686
          %5692 = dma.vmem_to_hbm [thread:$0]  %s5687, 128, %s5685, %s5630, 64, 64, 4
        $region88: #{resnet_forward.1} parent=71 // pred_fallthru
          _
        // Predicated region
        $region89: #{resnet_forward.1} parent=71 // pred_check
          %p5693 = pneg %p438
        $region90: #{resnet_forward.1} parent=71 // pred_check_branch
          %5695 = sbr.rel (%p5693) target = $region92
        $region91: #{resnet_forward.1} parent=71 // pred_region
          %s5696 = smul.u32 4, %s38
          %s5698 = ssub.s32 256, 256
          %5699 = vsyncadd %s5635, %s5698
          %s5700 = smul.addr %s5696, 64
          %s5701 = scalar_lea.hbm %s17, %s5700
          %s5702 = sshll.u32 %s5638, 4
          %s5703 = int_to_ptr.vmem [resolvable:$true] %s5702
          %5708 = dma.vmem_to_hbm [thread:$0]  %s5703, 256, %s5701, %s5635, 64, 64, 4
        $region92: #{resnet_forward.1} parent=71 // pred_fallthru
          _
      $region72: #{resnet_forward.1} parent=5 // pred_fallthru
        _
      %p5709 = scmp.le.s32.totalorder 2, %s33
      // Predicated region
      $region93: #{resnet_forward.1} parent=5 // pred_check
        %p5710 = pneg %p5709
      $region94: #{resnet_forward.1} parent=5 // pred_check_branch
        %5712 = sbr.rel (%p5710) target = $region96
      $region95: #{resnet_forward.1} parent=5 // pred_region
        %s5713 = ssub.s32 %s33, 2
        // Predicated region
        $region97: #{resnet_forward.1} parent=95 // pred_check
          %p5714 = pneg %p340
        $region98: #{resnet_forward.1} parent=95 // pred_check_branch
          %5716 = sbr.rel (%p5714) target = $region100
        $region99: #{resnet_forward.1} parent=95 // pred_region
          %s5717 = sand.u32 %s325, 1
          %s5718 = scalar_lea.sflag [#allocation3], %s5717
          %s5719 = sand.u32 %s325, 1
          %s5720 = smul.addr %s5719, 256
          %s5721 = scalar_lea.vmem [#allocation2], %s5720
          %5722 = dma.done %s5718, 4096
        $region100: #{resnet_forward.1} parent=95 // pred_fallthru
          _
        // Predicated region
        $region101: #{resnet_forward.1} parent=95 // pred_check
          %p5723 = pneg %p366
        $region102: #{resnet_forward.1} parent=95 // pred_check_branch
          %5725 = sbr.rel (%p5723) target = $region104
        $region103: #{resnet_forward.1} parent=95 // pred_region
          %s5726 = smul.u32 8, %s39
          %p5727 = scmp.lt.s32.totalorder %s5726, 15
          %s5728 = scalar_select %p5727, %s5726, 15
          %s5729 = smul.addr %s5728, 8
          %s5730 = scalar_lea.vmem %s14, %s5729
        $region104: #{resnet_forward.1} parent=95 // pred_fallthru
          _
        // Predicated region
        $region105: #{resnet_forward.1} parent=95 // pred_check
          %p5731 = pneg %p392
        $region106: #{resnet_forward.1} parent=95 // pred_check_branch
          %5733 = sbr.rel (%p5731) target = $region108
        $region107: #{resnet_forward.1} parent=95 // pred_region
          %s5734 = sand.u32 %s39, 1
          %s5735 = scalar_lea.sflag [#allocation5], %s5734
          %s5736 = sand.u32 %s377, 1
          %s5737 = smul.addr %s5736, 16
          %s5738 = scalar_lea.vmem [#allocation4], %s5737
          %5739 = dma.done %s5735, 256
        $region108: #{resnet_forward.1} parent=95 // pred_fallthru
          _
        // Predicated region
        $region109: #{resnet_forward.1} parent=95 // pred_check
          %p5740 = pneg %p418
        $region110: #{resnet_forward.1} parent=95 // pred_check_branch
          %5742 = sbr.rel (%p5740) target = $region112
        $region111: #{resnet_forward.1} parent=95 // pred_region
          %s5743 = sand.u32 %s39, 1
          %s5744 = scalar_lea.sflag [#allocation5], %s5743
          %s5745 = sand.u32 %s403, 1
          %s5746 = smul.addr %s5745, 8
          %s5747 = scalar_lea.vmem [#allocation6], %s5746
          %5748 = dma.done %s5744, 128
        $region112: #{resnet_forward.1} parent=95 // pred_fallthru
          _
        // Predicated region
        $region113: #{resnet_forward.1} parent=95 // pred_check
          %p5749 = pneg %p444
        $region114: #{resnet_forward.1} parent=95 // pred_check_branch
          %5751 = sbr.rel (%p5749) target = $region116
        $region115: #{resnet_forward.1} parent=95 // pred_region
          %s5752 = sand.u32 %s429, 1
          %s5753 = scalar_lea.sflag [#allocation8], %s5752
          %s5754 = sand.u32 %s429, 1
          %s5755 = smul.addr %s5754, 16
          %s5756 = scalar_lea.vmem [#allocation7], %s5755
          %5757 = dma.done %s5753, 256
        $region116: #{resnet_forward.1} parent=95 // pred_fallthru
          _
      $region96: #{resnet_forward.1} parent=5 // pred_fallthru
        _
    $region6: #{resnet_forward.1} parent=1 // loop_footer
      %s37 = sadd.s32 1, %s33
    $region7: #{resnet_forward.1} parent=1 // loop_footer_branch
      %32 = sbr.rel target = $region3
    $region8: #{resnet_forward.1} parent=1 // loop_exit
      _
    %5758 = vsyncpa [#allocation3], 1
    %s5759 = scalar_lea.sflag [#allocation3], 1
    %5760 = vsyncpa %s5759, 1
    %5761 = vsyncpa [#allocation5], 1
    %s5762 = scalar_lea.sflag [#allocation5], 1
    %5763 = vsyncpa %s5762, 1
    %5764 = vsyncpa [#allocation8], 1
    %s5765 = scalar_lea.sflag [#allocation8], 1
    %5766 = vsyncpa %s5765, 1

</llo_original>
